<compile_context>
chip_gen: v5e
topology: v5e:2x2
jax: 0.10.0
libtpu: 0.0.40
codegen_flags: <defaults>
</compile_context>

<pallas_src>
import functools

import jax
import jax.numpy as jnp
from jax import lax
from jax.experimental import pallas as pl
from jax.experimental.pallas import tpu as pltpu


def _round_up(x, m):
    return (x + m - 1) // m * m


# -----------------------------------------------------------------------------
# Fused kernel: conv1 (im2col) + ReLU + conv2 (1x1) + ReLU + conv3 (tap-packed)
# -----------------------------------------------------------------------------
def _fused_kernel(x_ref, wcol_ref, w1_ref, b1_ref, w2_ref, b2_ref,
                  w3_ref, b3_ref, o_ref, *, th, W, c_out, n_bands):
    rows_h = (th + 2) * W          # band rows incl. 1 halo image-row per side
    rows_o = th * W                # band output rows

    # conv1 (3x3 via im2col columns, K = 9*C_half) + ReLU
    h1 = jnp.dot(x_ref[...], w1_ref[...], preferred_element_type=jnp.float32)
    h1 = jnp.maximum(h1 + b1_ref[...], 0.0)

    # conv2 (1x1) + ReLU
    h2 = jnp.dot(h1.astype(jnp.bfloat16), w2_ref[...],
                 preferred_element_type=jnp.float32)
    h2 = jnp.maximum(h2 + b2_ref[...], 0.0)

    # conv3, tap-packed: one matmul -> per-tap partials in lanes
    # lane (3*dh + dw)*c_out + co  ==  sum_ci h2[pixel, ci] * w3[co, ci, dh, dw]
    p = jnp.dot(h2.astype(jnp.bfloat16), w3_ref[...],
                preferred_element_type=jnp.float32)            # [rows_h, npad]

    # Zero the halo rows that fall outside the image (conv3 spatial zero-pad).
    band = pl.program_id(1)
    q = lax.broadcasted_iota(jnp.int32, (rows_h, 1), 0)
    row_ok = ((q >= W) | (band > 0)) & ((q < (th + 1) * W) | (band < n_bands - 1))
    p = jnp.where(row_ok, p, 0.0)

    # 8 aligned zero pad rows each side so every shifted tap slice is in-bounds
    # (the two out-of-range corner reads are w-masked anyway).
    zpad = jnp.zeros((8, p.shape[1]), jnp.float32)
    p_ext = jnp.concatenate([zpad, p, zpad], axis=0)

    # Combine the 9 taps:
    #   out(h, w, co) = b3[co] + sum_t p[(h+dh-1)*W + (w+dw-1), t*c_out + co]
    # with dw=0 taps masked at w==0 and dw=2 taps masked at w==W-1.
    wcol = wcol_ref[...]                                        # [rows_o, 1]
    acc = jnp.broadcast_to(b3_ref[...], (rows_o, c_out)).astype(jnp.float32)
    for dh in range(3):
        for dw in range(3):
            t = 3 * dh + dw
            start = 8 + dh * W + dw - 1                         # static offset
            tap = p_ext[start:start + rows_o, t * c_out:(t + 1) * c_out]
            if dw == 0:
                tap = jnp.where(wcol > 0, tap, 0.0)
            elif dw == 2:
                tap = jnp.where(wcol < W - 1, tap, 0.0)
            acc = acc + tap
    # TODO(synk): the dw=+/-1 tap slices are sublane-misaligned; two pre-shifted
    # copies of p (pltpu.roll) would shave the small per-tap XLU realign cost.
    o_ref[...] = acc.astype(o_ref.dtype)


# -----------------------------------------------------------------------------
# Band size picker: divisors of H, bounded band rows, enough grid steps.
# -----------------------------------------------------------------------------
def _pick_band_rows(H, W, B):
    divs = sorted([d for d in range(1, H + 1) if H % d == 0], reverse=True)

    def ok_rows(th):
        return th * W <= 1024 or th == 1

    for min_steps in (8, 4):                       # pipelining / v7x megacore
        for th in divs:
            if ok_rows(th) and th * W >= 128 and B * (H // th) >= min_steps:
                return th
    for th in divs:                                # fall back: just bound VMEM
        if ok_rows(th):
            return th
    return 1


# -----------------------------------------------------------------------------
# Wrapper-side glue: im2col for the tiny conv1 input, weight re-layouts.
# -----------------------------------------------------------------------------
def im2col_3x3(x_nhwc):
    """[B,H,W,C] -> [B,H,W,9*C], patch element order (dh, dw, c_in)."""
    B, H, W, C = x_nhwc.shape
    xp = jnp.pad(x_nhwc, ((0, 0), (1, 1), (1, 1), (0, 0)))
    patches = [xp[:, dh:dh + H, dw:dw + W, :] for dh in range(3) for dw in range(3)]
    return jnp.concatenate(patches, axis=-1)


def conv3x3_weight_to_mat(w_oihw):
    # [C_out, C_in, 3, 3] -> [9*C_in, C_out] matching im2col order (dh, dw, c_in)
    c_out = w_oihw.shape[0]
    return jnp.transpose(w_oihw, (2, 3, 1, 0)).reshape(-1, c_out)


def conv1x1_weight_to_mat(w_oihw):
    # [C_out, C_in, 1, 1] -> [C_in, C_out]
    c_out, c_in = w_oihw.shape[0], w_oihw.shape[1]
    return jnp.transpose(w_oihw.reshape(c_out, c_in), (1, 0))


# -----------------------------------------------------------------------------
# coupling_NN forward
# -----------------------------------------------------------------------------
def coupling_nn_forward(x_nchw, params):
    B, C, H, W = x_nchw.shape
    hidden = params["w1"].shape[0]                # 512
    c_out = params["w3"].shape[0]                 # C_half
    npad = max(128, _round_up(9 * c_out, 128))    # packed conv3 lane width
    # TODO(synk): for very wide images (W*3 rows of 512-f32 exceeding ~32 MiB)
    # a width-tiled variant with a column halo would be needed to bound VMEM.

    x = jnp.transpose(x_nchw, (0, 2, 3, 1)).astype(jnp.bfloat16)     # NHWC bf16
    x_cols = im2col_3x3(x)                                           # [B,H,W,9C]
    K1 = 9 * C

    th = _pick_band_rows(H, W, B)
    n_bands = H // th
    rows_h = (th + 2) * W
    rows_o = th * W

    # Overlapping row bands with a 1-image-row halo each side.  Boundary halo
    # rows read zero-padded x_cols (values irrelevant: masked in-kernel).
    x_pad = jnp.pad(x_cols, ((0, 0), (1, 1), (0, 0), (0, 0)))        # [B,H+2,W,9C]
    x_bands = jnp.stack(
        [x_pad[:, i * th:i * th + th + 2] for i in range(n_bands)], axis=1
    ).reshape(B, n_bands, rows_h, K1)

    # Weights / biases.
    w1 = conv3x3_weight_to_mat(params["w1"]).astype(jnp.bfloat16)    # [9C, 512]
    w2 = conv1x1_weight_to_mat(params["w2"]).astype(jnp.bfloat16)    # [512, 512]
    # Tap-packed conv3 weights: [C_in, 9*c_out] with lane (3*dh+dw)*c_out + co.
    w3p = jnp.transpose(params["w3"], (1, 2, 3, 0)).reshape(hidden, 9 * c_out)
    w3p = jnp.pad(w3p, ((0, 0), (0, npad - 9 * c_out))).astype(jnp.bfloat16)

    b1 = params["b1"].reshape(1, hidden).astype(jnp.float32)
    b2 = params["b2"].reshape(1, hidden).astype(jnp.float32)
    b3 = params["b3"].reshape(1, c_out).astype(jnp.float32)

    # Per-output-row w coordinate (avoids an in-kernel iota % W).
    wcol = jnp.tile(jnp.arange(W, dtype=jnp.int32), th).reshape(rows_o, 1)

    # Rough VMEM budget from actual block / temporary sizes (+slack); kept well
    # under v7x's 64 MiB physical VMEM.
    weight_bytes = (K1 * hidden * 2 + hidden * hidden * 2
                    + hidden * npad * 2 + 3 * hidden * 4)
    est = (2 * rows_h * K1 * 2                       # x band, double-buffered
           + 2 * rows_o * c_out * 4                  # out block
           + 2 * rows_o * 4                          # wcol
           + 2 * weight_bytes                        # resident weights (2 bufs)
           + rows_h * hidden * 12                    # h1/h2 f32 + bf16 copies
           + rows_h * npad * 8)                      # p and p_ext
    vmem_limit = int(min(40 * 2**20, max(24 * 2**20, 2 * est + (4 << 20))))
    # TODO(synk): single-buffer the constant weight blocks (pl.Buffered(1))
    # once validated; default double-buffering costs ~1.4 MiB of VMEM here.

    kern = functools.partial(_fused_kernel, th=th, W=W, c_out=c_out,
                             n_bands=n_bands)
    out = pl.pallas_call(
        kern,
        out_shape=jax.ShapeDtypeStruct((B, n_bands, rows_o, c_out), jnp.float32),
        grid=(B, n_bands),
        in_specs=[
            pl.BlockSpec((None, None, rows_h, K1), lambda b, i: (b, i, 0, 0)),
            pl.BlockSpec((rows_o, 1), lambda b, i: (0, 0)),
            pl.BlockSpec((K1, hidden), lambda b, i: (0, 0)),
            pl.BlockSpec((1, hidden), lambda b, i: (0, 0)),
            pl.BlockSpec((hidden, hidden), lambda b, i: (0, 0)),
            pl.BlockSpec((1, hidden), lambda b, i: (0, 0)),
            pl.BlockSpec((hidden, npad), lambda b, i: (0, 0)),
            pl.BlockSpec((1, c_out), lambda b, i: (0, 0)),
        ],
        out_specs=pl.BlockSpec((None, None, rows_o, c_out),
                               lambda b, i: (b, i, 0, 0)),
        compiler_params=pltpu.CompilerParams(
            dimension_semantics=("parallel", "parallel"),
            vmem_limit_bytes=vmem_limit),
    )(x_bands, wcol, w1, b1, w2, b2, w3p, b3)

    out = out.reshape(B, H, W, c_out)
    return jnp.transpose(out, (0, 3, 1, 2)).astype(jnp.float32)


# -----------------------------------------------------------------------------
# Deterministic parameter init (PyTorch Conv2d default: U(-1/sqrt(fan_in), ..))
# -----------------------------------------------------------------------------
def init_params(key, c_half, hidden=512):
    ks = jax.random.split(key, 6)

    def u(k, shape, fan_in):
        bound = 1.0 / jnp.sqrt(fan_in)
        return jax.random.uniform(k, shape, jnp.float32, -bound, bound)

    return {
        "w1": u(ks[0], (hidden, c_half, 3, 3), c_half * 9),
        "b1": u(ks[1], (hidden,), c_half * 9),
        "w2": u(ks[2], (hidden, hidden, 1, 1), hidden),
        "b2": u(ks[3], (hidden,), hidden),
        "w3": u(ks[4], (c_half, hidden, 3, 3), hidden * 9),
        "b3": u(ks[5], (c_half,), hidden * 9),
    }


# -----------------------------------------------------------------------------
# Pure-JAX f32 reference (lax.conv) for the correctness check
# -----------------------------------------------------------------------------
def reference_forward(x_nchw, params):
    dn = ("NCHW", "OIHW", "NCHW")

    def conv(x, w, b, pad):
        y = lax.conv_general_dilated(x, w, (1, 1), pad, dimension_numbers=dn)
        return y + b.reshape(1, -1, 1, 1)

    h = jax.nn.relu(conv(x_nchw, params["w1"], params["b1"], "SAME"))
    h = jax.nn.relu(conv(h, params["w2"], params["b2"], "VALID"))
    return conv(h, params["w3"], params["b3"], "SAME")


if __name__ == "__main__":
    B, C_half, S = 2, 4, 16
    key = jax.random.PRNGKey(0)
    k_x, k_p = jax.random.split(key)

    x = jax.random.normal(k_x, (B, C_half, S, S), jnp.float32)
    params = init_params(k_p, C_half)

    fwd = jax.jit(coupling_nn_forward)
    out = jax.block_until_ready(fwd(x, params))
    assert out.shape == (B, C_half, S, S)

    ref = jax.block_until_ready(reference_forward(x, params))
    # bf16 MXU operands (f32 accumulation) vs f32 reference -> loose tolerance.
    err = float(jnp.max(jnp.abs(out - ref)))
    assert jnp.allclose(out, ref, rtol=5e-2, atol=2e-2), err

    print("KERNEL_OK")
</pallas_src>

<mosaic_0001>
module attributes {stable_mosaic.version = 11 : i64} {
  func.func @_fused_kernel(%arg0: i32, %arg1: i32, %arg2: memref<1x1x160x36xbf16, #tpu.memory_space<vmem>>, %arg3: memref<128x1xi32, #tpu.memory_space<vmem>>, %arg4: memref<36x512xbf16, #tpu.memory_space<vmem>>, %arg5: memref<1x512xf32, #tpu.memory_space<vmem>>, %arg6: memref<512x512xbf16, #tpu.memory_space<vmem>>, %arg7: memref<1x512xf32, #tpu.memory_space<vmem>>, %arg8: memref<512x128xbf16, #tpu.memory_space<vmem>>, %arg9: memref<1x4xf32, #tpu.memory_space<vmem>>, %arg10: memref<1x1x128x4xf32, #tpu.memory_space<vmem>>) attributes {dimension_semantics = [#tpu.dimension_semantics<parallel>, #tpu.dimension_semantics<parallel>], iteration_bounds = array<i64: 2, 2>, scalar_prefetch = 0 : i64, scratch_operands = 0 : i64, tpu.core_type = #tpu.core_type<tc>, window_params = [{transform_indices = @transform_0, window_bounds = array<i64: 1, 1, 160, 36>}, {pipeline_mode = #tpu.pipeline_mode<synchronous>, transform_indices = @transform_1, window_bounds = array<i64: 128, 1>}, {pipeline_mode = #tpu.pipeline_mode<synchronous>, transform_indices = @transform_2, window_bounds = array<i64: 36, 512>}, {pipeline_mode = #tpu.pipeline_mode<synchronous>, transform_indices = @transform_3, window_bounds = array<i64: 1, 512>}, {pipeline_mode = #tpu.pipeline_mode<synchronous>, transform_indices = @transform_4, window_bounds = array<i64: 512, 512>}, {pipeline_mode = #tpu.pipeline_mode<synchronous>, transform_indices = @transform_5, window_bounds = array<i64: 1, 512>}, {pipeline_mode = #tpu.pipeline_mode<synchronous>, transform_indices = @transform_6, window_bounds = array<i64: 512, 128>}, {pipeline_mode = #tpu.pipeline_mode<synchronous>, transform_indices = @transform_7, window_bounds = array<i64: 1, 4>}, {transform_indices = @transform_8, window_bounds = array<i64: 1, 1, 128, 4>}]} {
    %c0 = arith.constant 0 : index
    %c0_0 = arith.constant 0 : index
    %c0_1 = arith.constant 0 : index
    %c0_2 = arith.constant 0 : index
    %0 = vector.load %arg2[%c0, %c0_0, %c0_1, %c0_2] : memref<1x1x160x36xbf16, #tpu.memory_space<vmem>>, vector<1x1x160x36xbf16>
    %1 = vector.shape_cast %0 : vector<1x1x160x36xbf16> to vector<160x36xbf16>
    %c0_3 = arith.constant 0 : index
    %c0_4 = arith.constant 0 : index
    %2 = vector.load %arg4[%c0_3, %c0_4] : memref<36x512xbf16, #tpu.memory_space<vmem>>, vector<36x512xbf16>
    %cst = arith.constant dense<0.000000e+00> : vector<160x512xf32>
    %3 = tpu.matmul %1, %2, %cst {dimension_numbers = #tpu.dot_dimension_numbers<[1], [0], [0], [1], [0, 0, 1, 1], [], []>} : vector<160x36xbf16>, vector<36x512xbf16>, vector<160x512xf32> -> vector<160x512xf32>
    %c0_5 = arith.constant 0 : index
    %c0_6 = arith.constant 0 : index
    %4 = vector.load %arg5[%c0_5, %c0_6] : memref<1x512xf32, #tpu.memory_space<vmem>>, vector<1x512xf32>
    %5 = vector.broadcast %4 : vector<1x512xf32> to vector<160x512xf32>
    %6 = arith.addf %3, %5 : vector<160x512xf32>
    %cst_7 = arith.constant 0.000000e+00 : f32
    %7 = vector.broadcast %cst_7 : f32 to vector<160x512xf32>
    %8 = arith.maximumf %6, %7 : vector<160x512xf32>
    %9 = arith.truncf %8 : vector<160x512xf32> to vector<160x512xbf16>
    %c0_8 = arith.constant 0 : index
    %c0_9 = arith.constant 0 : index
    %10 = vector.load %arg6[%c0_8, %c0_9] : memref<512x512xbf16, #tpu.memory_space<vmem>>, vector<512x512xbf16>
    %cst_10 = arith.constant dense<0.000000e+00> : vector<160x512xf32>
    %11 = tpu.matmul %9, %10, %cst_10 {dimension_numbers = #tpu.dot_dimension_numbers<[1], [0], [0], [1], [0, 0, 1, 1], [], []>} : vector<160x512xbf16>, vector<512x512xbf16>, vector<160x512xf32> -> vector<160x512xf32>
    %c0_11 = arith.constant 0 : index
    %c0_12 = arith.constant 0 : index
    %12 = vector.load %arg7[%c0_11, %c0_12] : memref<1x512xf32, #tpu.memory_space<vmem>>, vector<1x512xf32>
    %13 = vector.broadcast %12 : vector<1x512xf32> to vector<160x512xf32>
    %14 = arith.addf %11, %13 : vector<160x512xf32>
    %cst_13 = arith.constant 0.000000e+00 : f32
    %15 = vector.broadcast %cst_13 : f32 to vector<160x512xf32>
    %16 = arith.maximumf %14, %15 : vector<160x512xf32>
    %17 = arith.truncf %16 : vector<160x512xf32> to vector<160x512xbf16>
    %c0_14 = arith.constant 0 : index
    %c0_15 = arith.constant 0 : index
    %18 = vector.load %arg8[%c0_14, %c0_15] : memref<512x128xbf16, #tpu.memory_space<vmem>>, vector<512x128xbf16>
    %cst_16 = arith.constant dense<0.000000e+00> : vector<160x128xf32>
    %19 = tpu.matmul %17, %18, %cst_16 {dimension_numbers = #tpu.dot_dimension_numbers<[1], [0], [0], [1], [0, 0, 1, 1], [], []>} : vector<160x512xbf16>, vector<512x128xbf16>, vector<160x128xf32> -> vector<160x128xf32>
    %20 = tpu.iota {dimensions = array<i32: 0>} : vector<160x1xi32>
    %c16_i32 = arith.constant 16 : i32
    %21 = vector.broadcast %c16_i32 : i32 to vector<160x1xi32>
    %22 = arith.cmpi sge, %20, %21 : vector<160x1xi32>
    %c0_i32 = arith.constant 0 : i32
    %23 = arith.cmpi sgt, %arg1, %c0_i32 : i32
    %24 = vector.broadcast %23 : i1 to vector<160x1xi1>
    %25 = arith.ori %22, %24 : vector<160x1xi1>
    %c144_i32 = arith.constant 144 : i32
    %26 = vector.broadcast %c144_i32 : i32 to vector<160x1xi32>
    %27 = arith.cmpi slt, %20, %26 : vector<160x1xi32>
    %c1_i32 = arith.constant 1 : i32
    %28 = arith.cmpi slt, %arg1, %c1_i32 : i32
    %29 = vector.broadcast %28 : i1 to vector<160x1xi1>
    %30 = arith.ori %27, %29 : vector<160x1xi1>
    %31 = arith.andi %25, %30 : vector<160x1xi1>
    %cst_17 = arith.constant 0.000000e+00 : f32
    %32 = vector.shape_cast %31 : vector<160x1xi1> to vector<160x1xi1>
    %33 = vector.broadcast %32 : vector<160x1xi1> to vector<160x128xi1>
    %34 = vector.broadcast %cst_17 : f32 to vector<160x128xf32>
    %35 = arith.select %33, %19, %34 : vector<160x128xi1>, vector<160x128xf32>
    %cst_18 = arith.constant 0.000000e+00 : f32
    %36 = vector.broadcast %cst_18 : f32 to vector<8x128xf32>
    %37 = tpu.concatenate %36, %35, %36 in 0 : vector<8x128xf32>, vector<160x128xf32>, vector<8x128xf32> -> vector<176x128xf32>
    %c0_19 = arith.constant 0 : index
    %c0_20 = arith.constant 0 : index
    %38 = vector.load %arg3[%c0_19, %c0_20] : memref<128x1xi32, #tpu.memory_space<vmem>>, vector<128x1xi32>
    %c0_21 = arith.constant 0 : index
    %c0_22 = arith.constant 0 : index
    %39 = vector.load %arg9[%c0_21, %c0_22] : memref<1x4xf32, #tpu.memory_space<vmem>>, vector<1x4xf32>
    %40 = vector.shape_cast %39 : vector<1x4xf32> to vector<1x4xf32>
    %41 = vector.broadcast %40 : vector<1x4xf32> to vector<128x4xf32>
    %42 = vector.extract_strided_slice %37 {offsets = [7, 0], sizes = [128, 4], strides = [1, 1]} : vector<176x128xf32> to vector<128x4xf32>
    %c0_i32_23 = arith.constant 0 : i32
    %43 = vector.broadcast %c0_i32_23 : i32 to vector<128x1xi32>
    %44 = arith.cmpi sgt, %38, %43 : vector<128x1xi32>
    %cst_24 = arith.constant 0.000000e+00 : f32
    %45 = vector.shape_cast %44 : vector<128x1xi1> to vector<128x1xi1>
    %46 = vector.broadcast %45 : vector<128x1xi1> to vector<128x4xi1>
    %47 = vector.broadcast %cst_24 : f32 to vector<128x4xf32>
    %48 = arith.select %46, %42, %47 : vector<128x4xi1>, vector<128x4xf32>
    %49 = arith.addf %41, %48 : vector<128x4xf32>
    %50 = vector.extract_strided_slice %37 {offsets = [8, 4], sizes = [128, 4], strides = [1, 1]} : vector<176x128xf32> to vector<128x4xf32>
    %51 = arith.addf %49, %50 : vector<128x4xf32>
    %52 = vector.extract_strided_slice %37 {offsets = [9, 8], sizes = [128, 4], strides = [1, 1]} : vector<176x128xf32> to vector<128x4xf32>
    %c15_i32 = arith.constant 15 : i32
    %53 = vector.broadcast %c15_i32 : i32 to vector<128x1xi32>
    %54 = arith.cmpi slt, %38, %53 : vector<128x1xi32>
    %cst_25 = arith.constant 0.000000e+00 : f32
    %55 = vector.shape_cast %54 : vector<128x1xi1> to vector<128x1xi1>
    %56 = vector.broadcast %55 : vector<128x1xi1> to vector<128x4xi1>
    %57 = vector.broadcast %cst_25 : f32 to vector<128x4xf32>
    %58 = arith.select %56, %52, %57 : vector<128x4xi1>, vector<128x4xf32>
    %59 = arith.addf %51, %58 : vector<128x4xf32>
    %60 = vector.extract_strided_slice %37 {offsets = [23, 12], sizes = [128, 4], strides = [1, 1]} : vector<176x128xf32> to vector<128x4xf32>
    %c0_i32_26 = arith.constant 0 : i32
    %61 = vector.broadcast %c0_i32_26 : i32 to vector<128x1xi32>
    %62 = arith.cmpi sgt, %38, %61 : vector<128x1xi32>
    %cst_27 = arith.constant 0.000000e+00 : f32
    %63 = vector.shape_cast %62 : vector<128x1xi1> to vector<128x1xi1>
    %64 = vector.broadcast %63 : vector<128x1xi1> to vector<128x4xi1>
    %65 = vector.broadcast %cst_27 : f32 to vector<128x4xf32>
    %66 = arith.select %64, %60, %65 : vector<128x4xi1>, vector<128x4xf32>
    %67 = arith.addf %59, %66 : vector<128x4xf32>
    %68 = vector.extract_strided_slice %37 {offsets = [24, 16], sizes = [128, 4], strides = [1, 1]} : vector<176x128xf32> to vector<128x4xf32>
    %69 = arith.addf %67, %68 : vector<128x4xf32>
    %70 = vector.extract_strided_slice %37 {offsets = [25, 20], sizes = [128, 4], strides = [1, 1]} : vector<176x128xf32> to vector<128x4xf32>
    %c15_i32_28 = arith.constant 15 : i32
    %71 = vector.broadcast %c15_i32_28 : i32 to vector<128x1xi32>
    %72 = arith.cmpi slt, %38, %71 : vector<128x1xi32>
    %cst_29 = arith.constant 0.000000e+00 : f32
    %73 = vector.shape_cast %72 : vector<128x1xi1> to vector<128x1xi1>
    %74 = vector.broadcast %73 : vector<128x1xi1> to vector<128x4xi1>
    %75 = vector.broadcast %cst_29 : f32 to vector<128x4xf32>
    %76 = arith.select %74, %70, %75 : vector<128x4xi1>, vector<128x4xf32>
    %77 = arith.addf %69, %76 : vector<128x4xf32>
    %78 = vector.extract_strided_slice %37 {offsets = [39, 24], sizes = [128, 4], strides = [1, 1]} : vector<176x128xf32> to vector<128x4xf32>
    %c0_i32_30 = arith.constant 0 : i32
    %79 = vector.broadcast %c0_i32_30 : i32 to vector<128x1xi32>
    %80 = arith.cmpi sgt, %38, %79 : vector<128x1xi32>
    %cst_31 = arith.constant 0.000000e+00 : f32
    %81 = vector.shape_cast %80 : vector<128x1xi1> to vector<128x1xi1>
    %82 = vector.broadcast %81 : vector<128x1xi1> to vector<128x4xi1>
    %83 = vector.broadcast %cst_31 : f32 to vector<128x4xf32>
    %84 = arith.select %82, %78, %83 : vector<128x4xi1>, vector<128x4xf32>
    %85 = arith.addf %77, %84 : vector<128x4xf32>
    %86 = vector.extract_strided_slice %37 {offsets = [40, 28], sizes = [128, 4], strides = [1, 1]} : vector<176x128xf32> to vector<128x4xf32>
    %87 = arith.addf %85, %86 : vector<128x4xf32>
    %88 = vector.extract_strided_slice %37 {offsets = [41, 32], sizes = [128, 4], strides = [1, 1]} : vector<176x128xf32> to vector<128x4xf32>
    %c15_i32_32 = arith.constant 15 : i32
    %89 = vector.broadcast %c15_i32_32 : i32 to vector<128x1xi32>
    %90 = arith.cmpi slt, %38, %89 : vector<128x1xi32>
    %cst_33 = arith.constant 0.000000e+00 : f32
    %91 = vector.shape_cast %90 : vector<128x1xi1> to vector<128x1xi1>
    %92 = vector.broadcast %91 : vector<128x1xi1> to vector<128x4xi1>
    %93 = vector.broadcast %cst_33 : f32 to vector<128x4xf32>
    %94 = arith.select %92, %88, %93 : vector<128x4xi1>, vector<128x4xf32>
    %95 = arith.addf %87, %94 : vector<128x4xf32>
    %c0_34 = arith.constant 0 : index
    %c0_35 = arith.constant 0 : index
    %c0_36 = arith.constant 0 : index
    %c0_37 = arith.constant 0 : index
    %96 = vector.load %arg10[%c0_34, %c0_35, %c0_36, %c0_37] : memref<1x1x128x4xf32, #tpu.memory_space<vmem>>, vector<1x1x128x4xf32>
    %97 = vector.shape_cast %96 : vector<1x1x128x4xf32> to vector<128x4xf32>
    %98 = vector.shape_cast %95 : vector<128x4xf32> to vector<1x1x128x4xf32>
    tpu.vector_store %arg10[%c0_34, %c0_35, %c0_36, %c0_37], %98 {strides = array<i32>} : memref<1x1x128x4xf32, #tpu.memory_space<vmem>>, vector<1x1x128x4xf32>,
    return
  }
  func.func @transform_0(%arg0: i32, %arg1: i32) -> (i32, i32, i32, i32) {
    %c0_i32 = arith.constant 0 : i32
    %c0_i32_0 = arith.constant 0 : i32
    %c0_i32_1 = arith.constant 0 : i32
    return %arg0, %arg1, %c0_i32, %c0_i32_0 : i32, i32, i32, i32
  }
  func.func @transform_1(%arg0: i32, %arg1: i32) -> (i32, i32) {
    %c0_i32 = arith.constant 0 : i32
    %c0_i32_0 = arith.constant 0 : i32
    %c0_i32_1 = arith.constant 0 : i32
    return %c0_i32, %c0_i32_0 : i32, i32
  }
  func.func @transform_2(%arg0: i32, %arg1: i32) -> (i32, i32) {
    %c0_i32 = arith.constant 0 : i32
    %c0_i32_0 = arith.constant 0 : i32
    %c0_i32_1 = arith.constant 0 : i32
    return %c0_i32, %c0_i32_0 : i32, i32
  }
  func.func @transform_3(%arg0: i32, %arg1: i32) -> (i32, i32) {
    %c0_i32 = arith.constant 0 : i32
    %c0_i32_0 = arith.constant 0 : i32
    %c0_i32_1 = arith.constant 0 : i32
    return %c0_i32, %c0_i32_0 : i32, i32
  }
  func.func @transform_4(%arg0: i32, %arg1: i32) -> (i32, i32) {
    %c0_i32 = arith.constant 0 : i32
    %c0_i32_0 = arith.constant 0 : i32
    %c0_i32_1 = arith.constant 0 : i32
    return %c0_i32, %c0_i32_0 : i32, i32
  }
  func.func @transform_5(%arg0: i32, %arg1: i32) -> (i32, i32) {
    %c0_i32 = arith.constant 0 : i32
    %c0_i32_0 = arith.constant 0 : i32
    %c0_i32_1 = arith.constant 0 : i32
    return %c0_i32, %c0_i32_0 : i32, i32
  }
  func.func @transform_6(%arg0: i32, %arg1: i32) -> (i32, i32) {
    %c0_i32 = arith.constant 0 : i32
    %c0_i32_0 = arith.constant 0 : i32
    %c0_i32_1 = arith.constant 0 : i32
    return %c0_i32, %c0_i32_0 : i32, i32
  }
  func.func @transform_7(%arg0: i32, %arg1: i32) -> (i32, i32) {
    %c0_i32 = arith.constant 0 : i32
    %c0_i32_0 = arith.constant 0 : i32
    %c0_i32_1 = arith.constant 0 : i32
    return %c0_i32, %c0_i32_0 : i32, i32
  }
  func.func @transform_8(%arg0: i32, %arg1: i32) -> (i32, i32, i32, i32) {
    %c0_i32 = arith.constant 0 : i32
    %c0_i32_0 = arith.constant 0 : i32
    %c0_i32_1 = arith.constant 0 : i32
    return %arg0, %arg1, %c0_i32, %c0_i32_0 : i32, i32, i32, i32
  }
}

</mosaic_0001>

<llo_original>
// kernel: tile.0
$region0: #{tile.0}
  %s0 = inlined_call_operand.vmem [shape: s32[8,16], index: 0, kind: input, shape index: {}]
  %s1 = inlined_call_operand.vmem [shape: s32[128,1], index: 1, kind: output, shape index: {}]
  %v2 = vld [vmem:[%s0] sm:$0xff]
  %vm3 = vcmask 7168
  %4 = vst.msk [vmem:[%s1] ss:$16 sm:$0x3] %vm3, %v2
  %5 = vst.msk [vmem:[%s1] ss:$16 sm:$0xc] %vm3, %v2
  %6 = vst.msk [vmem:[%s1] ss:$16 sm:$0x30] %vm3, %v2
  %7 = vst.msk [vmem:[%s1] ss:$16 sm:$0xc0] %vm3, %v2
  %v8 = vld [vmem:[%s0] sm:$0xff]
  %9 = vrot.lane.b32.xlu0 %v8, 127
  %v10 = vpop.permute.xlu0 %9
  %vm11 = vcmask 7168
  %s12 = scalar_lea.vmem %s1, 1
  %13 = vst.msk [vmem:[%s12] ss:$16 sm:$0x3] %vm11, %v10
  %s14 = scalar_lea.vmem %s1, 1
  %15 = vst.msk [vmem:[%s14] ss:$16 sm:$0xc] %vm11, %v10
  %s16 = scalar_lea.vmem %s1, 1
  %17 = vst.msk [vmem:[%s16] ss:$16 sm:$0x30] %vm11, %v10
  %s18 = scalar_lea.vmem %s1, 1
  %19 = vst.msk [vmem:[%s18] ss:$16 sm:$0xc0] %vm11, %v10
  %v20 = vld [vmem:[%s0] sm:$0xff]
  %21 = vrot.lane.b32.xlu0 %v20, 126
  %v22 = vpop.permute.xlu0 %21
  %vm23 = vcmask 7168
  %s24 = scalar_lea.vmem %s1, 2
  %25 = vst.msk [vmem:[%s24] ss:$16 sm:$0x3] %vm23, %v22
  %s26 = scalar_lea.vmem %s1, 2
  %27 = vst.msk [vmem:[%s26] ss:$16 sm:$0xc] %vm23, %v22
  %s28 = scalar_lea.vmem %s1, 2
  %29 = vst.msk [vmem:[%s28] ss:$16 sm:$0x30] %vm23, %v22
  %s30 = scalar_lea.vmem %s1, 2
  %31 = vst.msk [vmem:[%s30] ss:$16 sm:$0xc0] %vm23, %v22
  %v32 = vld [vmem:[%s0] sm:$0xff]
  %33 = vrot.lane.b32.xlu0 %v32, 125
  %v34 = vpop.permute.xlu0 %33
  %vm35 = vcmask 7168
  %s36 = scalar_lea.vmem %s1, 3
  %37 = vst.msk [vmem:[%s36] ss:$16 sm:$0x3] %vm35, %v34
  %s38 = scalar_lea.vmem %s1, 3
  %39 = vst.msk [vmem:[%s38] ss:$16 sm:$0xc] %vm35, %v34
  %s40 = scalar_lea.vmem %s1, 3
  %41 = vst.msk [vmem:[%s40] ss:$16 sm:$0x30] %vm35, %v34
  %s42 = scalar_lea.vmem %s1, 3
  %43 = vst.msk [vmem:[%s42] ss:$16 sm:$0xc0] %vm35, %v34
  %v44 = vld [vmem:[%s0] sm:$0xff]
  %45 = vrot.lane.b32.xlu0 %v44, 124
  %v46 = vpop.permute.xlu0 %45
  %vm47 = vcmask 7168
  %s48 = scalar_lea.vmem %s1, 4
  %49 = vst.msk [vmem:[%s48] ss:$16 sm:$0x3] %vm47, %v46
  %s50 = scalar_lea.vmem %s1, 4
  %51 = vst.msk [vmem:[%s50] ss:$16 sm:$0xc] %vm47, %v46
  %s52 = scalar_lea.vmem %s1, 4
  %53 = vst.msk [vmem:[%s52] ss:$16 sm:$0x30] %vm47, %v46
  %s54 = scalar_lea.vmem %s1, 4
  %55 = vst.msk [vmem:[%s54] ss:$16 sm:$0xc0] %vm47, %v46
  %v56 = vld [vmem:[%s0] sm:$0xff]
  %57 = vrot.lane.b32.xlu0 %v56, 123
  %v58 = vpop.permute.xlu0 %57
  %vm59 = vcmask 7168
  %s60 = scalar_lea.vmem %s1, 5
  %61 = vst.msk [vmem:[%s60] ss:$16 sm:$0x3] %vm59, %v58
  %s62 = scalar_lea.vmem %s1, 5
  %63 = vst.msk [vmem:[%s62] ss:$16 sm:$0xc] %vm59, %v58
  %s64 = scalar_lea.vmem %s1, 5
  %65 = vst.msk [vmem:[%s64] ss:$16 sm:$0x30] %vm59, %v58
  %s66 = scalar_lea.vmem %s1, 5
  %67 = vst.msk [vmem:[%s66] ss:$16 sm:$0xc0] %vm59, %v58
  %v68 = vld [vmem:[%s0] sm:$0xff]
  %69 = vrot.lane.b32.xlu0 %v68, 122
  %v70 = vpop.permute.xlu0 %69
  %vm71 = vcmask 7168
  %s72 = scalar_lea.vmem %s1, 6
  %73 = vst.msk [vmem:[%s72] ss:$16 sm:$0x3] %vm71, %v70
  %s74 = scalar_lea.vmem %s1, 6
  %75 = vst.msk [vmem:[%s74] ss:$16 sm:$0xc] %vm71, %v70
  %s76 = scalar_lea.vmem %s1, 6
  %77 = vst.msk [vmem:[%s76] ss:$16 sm:$0x30] %vm71, %v70
  %s78 = scalar_lea.vmem %s1, 6
  %79 = vst.msk [vmem:[%s78] ss:$16 sm:$0xc0] %vm71, %v70
  %v80 = vld [vmem:[%s0] sm:$0xff]
  %81 = vrot.lane.b32.xlu0 %v80, 121
  %v82 = vpop.permute.xlu0 %81
  %vm83 = vcmask 7168
  %s84 = scalar_lea.vmem %s1, 7
  %85 = vst.msk [vmem:[%s84] ss:$16 sm:$0x3] %vm83, %v82
  %s86 = scalar_lea.vmem %s1, 7
  %87 = vst.msk [vmem:[%s86] ss:$16 sm:$0xc] %vm83, %v82
  %s88 = scalar_lea.vmem %s1, 7
  %89 = vst.msk [vmem:[%s88] ss:$16 sm:$0x30] %vm83, %v82
  %s90 = scalar_lea.vmem %s1, 7
  %91 = vst.msk [vmem:[%s90] ss:$16 sm:$0xc0] %vm83, %v82
  %v92 = vld [vmem:[%s0] sm:$0xff]
  %93 = vrot.lane.b32.xlu0 %v92, 120
  %v94 = vpop.permute.xlu0 %93
  %vm95 = vcmask 7168
  %s96 = scalar_lea.vmem %s1, 8
  %97 = vst.msk [vmem:[%s96] ss:$16 sm:$0x3] %vm95, %v94
  %s98 = scalar_lea.vmem %s1, 8
  %99 = vst.msk [vmem:[%s98] ss:$16 sm:$0xc] %vm95, %v94
  %s100 = scalar_lea.vmem %s1, 8
  %101 = vst.msk [vmem:[%s100] ss:$16 sm:$0x30] %vm95, %v94
  %s102 = scalar_lea.vmem %s1, 8
  %103 = vst.msk [vmem:[%s102] ss:$16 sm:$0xc0] %vm95, %v94
  %v104 = vld [vmem:[%s0] sm:$0xff]
  %105 = vrot.lane.b32.xlu0 %v104, 119
  %v106 = vpop.permute.xlu0 %105
  %vm107 = vcmask 7168
  %s108 = scalar_lea.vmem %s1, 9
  %109 = vst.msk [vmem:[%s108] ss:$16 sm:$0x3] %vm107, %v106
  %s110 = scalar_lea.vmem %s1, 9
  %111 = vst.msk [vmem:[%s110] ss:$16 sm:$0xc] %vm107, %v106
  %s112 = scalar_lea.vmem %s1, 9
  %113 = vst.msk [vmem:[%s112] ss:$16 sm:$0x30] %vm107, %v106
  %s114 = scalar_lea.vmem %s1, 9
  %115 = vst.msk [vmem:[%s114] ss:$16 sm:$0xc0] %vm107, %v106
  %v116 = vld [vmem:[%s0] sm:$0xff]
  %117 = vrot.lane.b32.xlu0 %v116, 118
  %v118 = vpop.permute.xlu0 %117
  %vm119 = vcmask 7168
  %s120 = scalar_lea.vmem %s1, 10
  %121 = vst.msk [vmem:[%s120] ss:$16 sm:$0x3] %vm119, %v118
  %s122 = scalar_lea.vmem %s1, 10
  %123 = vst.msk [vmem:[%s122] ss:$16 sm:$0xc] %vm119, %v118
  %s124 = scalar_lea.vmem %s1, 10
  %125 = vst.msk [vmem:[%s124] ss:$16 sm:$0x30] %vm119, %v118
  %s126 = scalar_lea.vmem %s1, 10
  %127 = vst.msk [vmem:[%s126] ss:$16 sm:$0xc0] %vm119, %v118
  %v128 = vld [vmem:[%s0] sm:$0xff]
  %129 = vrot.lane.b32.xlu0 %v128, 117
  %v130 = vpop.permute.xlu0 %129
  %vm131 = vcmask 7168
  %s132 = scalar_lea.vmem %s1, 11
  %133 = vst.msk [vmem:[%s132] ss:$16 sm:$0x3] %vm131, %v130
  %s134 = scalar_lea.vmem %s1, 11
  %135 = vst.msk [vmem:[%s134] ss:$16 sm:$0xc] %vm131, %v130
  %s136 = scalar_lea.vmem %s1, 11
  %137 = vst.msk [vmem:[%s136] ss:$16 sm:$0x30] %vm131, %v130
  %s138 = scalar_lea.vmem %s1, 11
  %139 = vst.msk [vmem:[%s138] ss:$16 sm:$0xc0] %vm131, %v130
  %v140 = vld [vmem:[%s0] sm:$0xff]
  %141 = vrot.lane.b32.xlu0 %v140, 116
  %v142 = vpop.permute.xlu0 %141
  %vm143 = vcmask 7168
  %s144 = scalar_lea.vmem %s1, 12
  %145 = vst.msk [vmem:[%s144] ss:$16 sm:$0x3] %vm143, %v142
  %s146 = scalar_lea.vmem %s1, 12
  %147 = vst.msk [vmem:[%s146] ss:$16 sm:$0xc] %vm143, %v142
  %s148 = scalar_lea.vmem %s1, 12
  %149 = vst.msk [vmem:[%s148] ss:$16 sm:$0x30] %vm143, %v142
  %s150 = scalar_lea.vmem %s1, 12
  %151 = vst.msk [vmem:[%s150] ss:$16 sm:$0xc0] %vm143, %v142
  %v152 = vld [vmem:[%s0] sm:$0xff]
  %153 = vrot.lane.b32.xlu0 %v152, 115
  %v154 = vpop.permute.xlu0 %153
  %vm155 = vcmask 7168
  %s156 = scalar_lea.vmem %s1, 13
  %157 = vst.msk [vmem:[%s156] ss:$16 sm:$0x3] %vm155, %v154
  %s158 = scalar_lea.vmem %s1, 13
  %159 = vst.msk [vmem:[%s158] ss:$16 sm:$0xc] %vm155, %v154
  %s160 = scalar_lea.vmem %s1, 13
  %161 = vst.msk [vmem:[%s160] ss:$16 sm:$0x30] %vm155, %v154
  %s162 = scalar_lea.vmem %s1, 13
  %163 = vst.msk [vmem:[%s162] ss:$16 sm:$0xc0] %vm155, %v154
  %v164 = vld [vmem:[%s0] sm:$0xff]
  %165 = vrot.lane.b32.xlu0 %v164, 114
  %v166 = vpop.permute.xlu0 %165
  %vm167 = vcmask 7168
  %s168 = scalar_lea.vmem %s1, 14
  %169 = vst.msk [vmem:[%s168] ss:$16 sm:$0x3] %vm167, %v166
  %s170 = scalar_lea.vmem %s1, 14
  %171 = vst.msk [vmem:[%s170] ss:$16 sm:$0xc] %vm167, %v166
  %s172 = scalar_lea.vmem %s1, 14
  %173 = vst.msk [vmem:[%s172] ss:$16 sm:$0x30] %vm167, %v166
  %s174 = scalar_lea.vmem %s1, 14
  %175 = vst.msk [vmem:[%s174] ss:$16 sm:$0xc0] %vm167, %v166
  %v176 = vld [vmem:[%s0] sm:$0xff]
  %177 = vrot.lane.b32.xlu0 %v176, 113
  %v178 = vpop.permute.xlu0 %177
  %vm179 = vcmask 7168
  %s180 = scalar_lea.vmem %s1, 15
  %181 = vst.msk [vmem:[%s180] ss:$16 sm:$0x3] %vm179, %v178
  %s182 = scalar_lea.vmem %s1, 15
  %183 = vst.msk [vmem:[%s182] ss:$16 sm:$0xc] %vm179, %v178
  %s184 = scalar_lea.vmem %s1, 15
  %185 = vst.msk [vmem:[%s184] ss:$16 sm:$0x30] %vm179, %v178
  %s186 = scalar_lea.vmem %s1, 15
  %187 = vst.msk [vmem:[%s186] ss:$16 sm:$0xc0] %vm179, %v178

// kernel: coupling_nn_forward.1
$region0: #{coupling_nn_forward.1}
  #allocation0 [shape = 'u32[]', space=smem, size = 0x4, offset = 0x4, fixed_abs, tag = 'smem constant byte address 0x4 - core index']
  #allocation1 [shape = 'u32[72,128]{1,0:T(1,128)}', space=vmem, size = 0x9000, scoped, tag = 'internal scratch']
  %s0 = inlined_call_operand.vmem [shape: bf16[2,2,160,36], index: 0, kind: input, shape index: {}]
  %s1 = inlined_call_operand.vmem [shape: s32[128,1], index: 1, kind: input, shape index: {}]
  %s2 = inlined_call_operand.vmem [shape: bf16[36,512], index: 2, kind: input, shape index: {}]
  %s3 = inlined_call_operand.vmem [shape: f32[1,512], index: 3, kind: input, shape index: {}]
  %s4 = inlined_call_operand.vmem [shape: bf16[512,512], index: 4, kind: input, shape index: {}]
  %s5 = inlined_call_operand.vmem [shape: f32[1,512], index: 5, kind: input, shape index: {}]
  %s6 = inlined_call_operand.vmem [shape: bf16[512,128], index: 6, kind: input, shape index: {}]
  %s7 = inlined_call_operand.vmem [shape: f32[1,4], index: 7, kind: input, shape index: {}]
  %s8 = inlined_call_operand.vmem [shape: f32[2,2,128,4], index: 8, kind: output, shape index: {}]
  %s9 = sld [smem:[#allocation0]]
  $region65: #{coupling_nn_forward.1} parent=0
    _
  %s11 = ssub.s32 1, %s9
  %s12 = scalar_select 0, %s11, %s9
  loop: start=0, step=1, limit=6
  $region2: #{coupling_nn_forward.1} parent=0 // loop_pre_header
    _
  $region3: #{coupling_nn_forward.1} parent=0 // loop_header
    %s14 = sphi 0, %s18
    %p15 = scmp.ge.s32.totalorder %s14, 6
    %s21 = sphi 0, %s33
    %s22 = sphi 0, %s29
    %s23 = sphi 0, %s21
    %s24 = sphi 0, %s22
    %s25 = sphi 0, %s23
    %s26 = sphi 0, %s24
    %s38 = sphi 0, %s40
    %s41 = sphi 0, %s38
    %s42 = sphi 0, %s41
    %s58 = sphi 0, %s42
    %s62 = sphi 0, %s62
    %s64 = sphi 0, %s62
    %s65 = sphi 0, %s64
    %s79 = sphi 0, %s65
    %s83 = sphi 0, %s83
    %s85 = sphi 0, %s83
    %s86 = sphi 0, %s85
    %s100 = sphi 0, %s86
    %s104 = sphi 0, %s104
    %s106 = sphi 0, %s104
    %s107 = sphi 0, %s106
    %s121 = sphi 0, %s107
    %s125 = sphi 0, %s125
    %s127 = sphi 0, %s125
    %s128 = sphi 0, %s127
    %s142 = sphi 0, %s128
    %s146 = sphi 0, %s146
    %s148 = sphi 0, %s146
    %s149 = sphi 0, %s148
    %s163 = sphi 0, %s149
    %s167 = sphi 0, %s167
    %s169 = sphi 0, %s167
    %s170 = sphi 0, %s169
    %s184 = sphi 0, %s170
    %s188 = sphi 0, %s188
    %s190 = sphi 0, %s188
    %s191 = sphi 0, %s190
    %s205 = sphi 0, %s191
    %s213 = sphi 0, %s215
    %s216 = sphi 0, %s213
    %s217 = sphi 0, %s216
    %s233 = sphi 0, %s217
  $region4: #{coupling_nn_forward.1} parent=0 // loop_header_branch
    %17 = sbr.rel (%p15) target = $region8
  $region5: #{coupling_nn_forward.1} parent=0 // loop_body
    %s19 = ssub.s32 %s14, 1
    %s20 = ssub.s32 %s14, 2
    %s27 = sadd.s32 1, %s22
    %p28 = scmp.ge.s32.totalorder %s27, 2
    %s29 = scalar_select %p28, 0, %s27
    %s30 = sadd.s32 1, %s21
    %s31 = scalar_select %p28, %s30, %s21
    %p32 = scmp.ge.s32.totalorder %s31, 2
    %s33 = scalar_select %p32, 0, %s31
    %s34 = ssub.s32 %s21, %s33
    %s35 = ssub.s32 %s22, %s29
    %s36 = sor.u32 %s34, %s35
    %p37 = scmp.eq.s32.totalorder %s36, 0
    %s39 = sadd.s32 %s38, 1
    %s40 = scalar_select %p37, %s38, %s39
    %p43 = pneg %p37
    %p44 = scmp.eq.s32.totalorder %s14, 3
    %p45 = por %p43, %p44
    %p46 = scmp.ne.s32.totalorder %s38, %s41
    %p47 = scmp.eq.s32.totalorder %s14, 0
    %p48 = por %p46, %p47
    %p49 = scmp.ne.s32.totalorder %s38, %s41
    %p50 = scmp.eq.s32.totalorder %s19, 3
    %p51 = por %p49, %p50
    %p52 = scmp.ne.s32.totalorder %s41, %s42
    %p53 = scmp.eq.s32.totalorder %s19, 0
    %p54 = por %p52, %p53
    %p55 = scmp.ne.s32.totalorder %s41, %s42
    %p56 = scmp.eq.s32.totalorder %s20, 3
    %p57 = por %p55, %p56
    %p59 = scmp.ne.s32.totalorder %s42, %s58
    %p60 = scmp.eq.s32.totalorder %s20, 0
    %p61 = por %p59, %p60
    %s63 = sadd.s32 %s62, 1
    %p66 = scmp.eq.s32.totalorder %s14, 3
    %p67 = scmp.ne.s32.totalorder %s62, %s64
    %p68 = scmp.eq.s32.totalorder %s14, 0
    %p69 = por %p67, %p68
    %p70 = scmp.ne.s32.totalorder %s62, %s64
    %p71 = scmp.eq.s32.totalorder %s19, 3
    %p72 = por %p70, %p71
    %p73 = scmp.ne.s32.totalorder %s64, %s65
    %p74 = scmp.eq.s32.totalorder %s19, 0
    %p75 = por %p73, %p74
    %p76 = scmp.ne.s32.totalorder %s64, %s65
    %p77 = scmp.eq.s32.totalorder %s20, 3
    %p78 = por %p76, %p77
    %p80 = scmp.ne.s32.totalorder %s65, %s79
    %p81 = scmp.eq.s32.totalorder %s20, 0
    %p82 = por %p80, %p81
    %s84 = sadd.s32 %s83, 1
    %p87 = scmp.eq.s32.totalorder %s14, 3
    %p88 = scmp.ne.s32.totalorder %s83, %s85
    %p89 = scmp.eq.s32.totalorder %s14, 0
    %p90 = por %p88, %p89
    %p91 = scmp.ne.s32.totalorder %s83, %s85
    %p92 = scmp.eq.s32.totalorder %s19, 3
    %p93 = por %p91, %p92
    %p94 = scmp.ne.s32.totalorder %s85, %s86
    %p95 = scmp.eq.s32.totalorder %s19, 0
    %p96 = por %p94, %p95
    %p97 = scmp.ne.s32.totalorder %s85, %s86
    %p98 = scmp.eq.s32.totalorder %s20, 3
    %p99 = por %p97, %p98
    %p101 = scmp.ne.s32.totalorder %s86, %s100
    %p102 = scmp.eq.s32.totalorder %s20, 0
    %p103 = por %p101, %p102
    %s105 = sadd.s32 %s104, 1
    %p108 = scmp.eq.s32.totalorder %s14, 3
    %p109 = scmp.ne.s32.totalorder %s104, %s106
    %p110 = scmp.eq.s32.totalorder %s14, 0
    %p111 = por %p109, %p110
    %p112 = scmp.ne.s32.totalorder %s104, %s106
    %p113 = scmp.eq.s32.totalorder %s19, 3
    %p114 = por %p112, %p113
    %p115 = scmp.ne.s32.totalorder %s106, %s107
    %p116 = scmp.eq.s32.totalorder %s19, 0
    %p117 = por %p115, %p116
    %p118 = scmp.ne.s32.totalorder %s106, %s107
    %p119 = scmp.eq.s32.totalorder %s20, 3
    %p120 = por %p118, %p119
    %p122 = scmp.ne.s32.totalorder %s107, %s121
    %p123 = scmp.eq.s32.totalorder %s20, 0
    %p124 = por %p122, %p123
    %s126 = sadd.s32 %s125, 1
    %p129 = scmp.eq.s32.totalorder %s14, 3
    %p130 = scmp.ne.s32.totalorder %s125, %s127
    %p131 = scmp.eq.s32.totalorder %s14, 0
    %p132 = por %p130, %p131
    %p133 = scmp.ne.s32.totalorder %s125, %s127
    %p134 = scmp.eq.s32.totalorder %s19, 3
    %p135 = por %p133, %p134
    %p136 = scmp.ne.s32.totalorder %s127, %s128
    %p137 = scmp.eq.s32.totalorder %s19, 0
    %p138 = por %p136, %p137
    %p139 = scmp.ne.s32.totalorder %s127, %s128
    %p140 = scmp.eq.s32.totalorder %s20, 3
    %p141 = por %p139, %p140
    %p143 = scmp.ne.s32.totalorder %s128, %s142
    %p144 = scmp.eq.s32.totalorder %s20, 0
    %p145 = por %p143, %p144
    %s147 = sadd.s32 %s146, 1
    %p150 = scmp.eq.s32.totalorder %s14, 3
    %p151 = scmp.ne.s32.totalorder %s146, %s148
    %p152 = scmp.eq.s32.totalorder %s14, 0
    %p153 = por %p151, %p152
    %p154 = scmp.ne.s32.totalorder %s146, %s148
    %p155 = scmp.eq.s32.totalorder %s19, 3
    %p156 = por %p154, %p155
    %p157 = scmp.ne.s32.totalorder %s148, %s149
    %p158 = scmp.eq.s32.totalorder %s19, 0
    %p159 = por %p157, %p158
    %p160 = scmp.ne.s32.totalorder %s148, %s149
    %p161 = scmp.eq.s32.totalorder %s20, 3
    %p162 = por %p160, %p161
    %p164 = scmp.ne.s32.totalorder %s149, %s163
    %p165 = scmp.eq.s32.totalorder %s20, 0
    %p166 = por %p164, %p165
    %s168 = sadd.s32 %s167, 1
    %p171 = scmp.eq.s32.totalorder %s14, 3
    %p172 = scmp.ne.s32.totalorder %s167, %s169
    %p173 = scmp.eq.s32.totalorder %s14, 0
    %p174 = por %p172, %p173
    %p175 = scmp.ne.s32.totalorder %s167, %s169
    %p176 = scmp.eq.s32.totalorder %s19, 3
    %p177 = por %p175, %p176
    %p178 = scmp.ne.s32.totalorder %s169, %s170
    %p179 = scmp.eq.s32.totalorder %s19, 0
    %p180 = por %p178, %p179
    %p181 = scmp.ne.s32.totalorder %s169, %s170
    %p182 = scmp.eq.s32.totalorder %s20, 3
    %p183 = por %p181, %p182
    %p185 = scmp.ne.s32.totalorder %s170, %s184
    %p186 = scmp.eq.s32.totalorder %s20, 0
    %p187 = por %p185, %p186
    %s189 = sadd.s32 %s188, 1
    %p192 = scmp.eq.s32.totalorder %s14, 3
    %p193 = scmp.ne.s32.totalorder %s188, %s190
    %p194 = scmp.eq.s32.totalorder %s14, 0
    %p195 = por %p193, %p194
    %p196 = scmp.ne.s32.totalorder %s188, %s190
    %p197 = scmp.eq.s32.totalorder %s19, 3
    %p198 = por %p196, %p197
    %p199 = scmp.ne.s32.totalorder %s190, %s191
    %p200 = scmp.eq.s32.totalorder %s19, 0
    %p201 = por %p199, %p200
    %p202 = scmp.ne.s32.totalorder %s190, %s191
    %p203 = scmp.eq.s32.totalorder %s20, 3
    %p204 = por %p202, %p203
    %p206 = scmp.ne.s32.totalorder %s191, %s205
    %p207 = scmp.eq.s32.totalorder %s20, 0
    %p208 = por %p206, %p207
    %s209 = ssub.s32 %s21, %s33
    %s210 = ssub.s32 %s22, %s29
    %s211 = sor.u32 %s209, %s210
    %p212 = scmp.eq.s32.totalorder %s211, 0
    %s214 = sadd.s32 %s213, 1
    %s215 = scalar_select %p212, %s213, %s214
    %p218 = pneg %p212
    %p219 = scmp.eq.s32.totalorder %s14, 3
    %p220 = por %p218, %p219
    %p221 = scmp.ne.s32.totalorder %s213, %s216
    %p222 = scmp.eq.s32.totalorder %s14, 0
    %p223 = por %p221, %p222
    %p224 = scmp.ne.s32.totalorder %s213, %s216
    %p225 = scmp.eq.s32.totalorder %s19, 3
    %p226 = por %p224, %p225
    %p227 = scmp.ne.s32.totalorder %s216, %s217
    %p228 = scmp.eq.s32.totalorder %s19, 0
    %p229 = por %p227, %p228
    %p230 = scmp.ne.s32.totalorder %s216, %s217
    %p231 = scmp.eq.s32.totalorder %s20, 3
    %p232 = por %p230, %p231
    %p234 = scmp.ne.s32.totalorder %s217, %s233
    %p235 = scmp.eq.s32.totalorder %s20, 0
    %p236 = por %p234, %p235
    %p237 = scmp.le.s32.totalorder 1, %s14
    %p238 = scmp.lt.s32.totalorder %s14, 5
    %p239 = pnand %p237, %p238
    %p240 = pneg %p239
    // Predicated region
    $region9: #{coupling_nn_forward.1} parent=5 // pred_check
      _
    $region10: #{coupling_nn_forward.1} parent=5 // pred_check_branch
      %242 = sbr.rel (%p239) target = $region12
    $region11: #{coupling_nn_forward.1} parent=5 // pred_region
      %s243 = ssub.s32 %s14, 1
      // Predicated region
      $region13: #{coupling_nn_forward.1} parent=11 // pred_check
        %p244 = pneg %p75
      $region14: #{coupling_nn_forward.1} parent=11 // pred_check_branch
        %246 = sbr.rel (%p244) target = $region16
      $region15: #{coupling_nn_forward.1} parent=11 // pred_region
        _
      $region16: #{coupling_nn_forward.1} parent=11 // pred_fallthru
        _
      // Predicated region
      $region17: #{coupling_nn_forward.1} parent=11 // pred_check
        %p247 = pneg %p96
      $region18: #{coupling_nn_forward.1} parent=11 // pred_check_branch
        %249 = sbr.rel (%p247) target = $region20
      $region19: #{coupling_nn_forward.1} parent=11 // pred_region
        _
      $region20: #{coupling_nn_forward.1} parent=11 // pred_fallthru
        _
      // Predicated region
      $region21: #{coupling_nn_forward.1} parent=11 // pred_check
        %p250 = pneg %p117
      $region22: #{coupling_nn_forward.1} parent=11 // pred_check_branch
        %252 = sbr.rel (%p250) target = $region24
      $region23: #{coupling_nn_forward.1} parent=11 // pred_region
        _
      $region24: #{coupling_nn_forward.1} parent=11 // pred_fallthru
        _
      // Predicated region
      $region25: #{coupling_nn_forward.1} parent=11 // pred_check
        %p253 = pneg %p138
      $region26: #{coupling_nn_forward.1} parent=11 // pred_check_branch
        %255 = sbr.rel (%p253) target = $region28
      $region27: #{coupling_nn_forward.1} parent=11 // pred_region
        _
      $region28: #{coupling_nn_forward.1} parent=11 // pred_fallthru
        _
      // Predicated region
      $region29: #{coupling_nn_forward.1} parent=11 // pred_check
        %p256 = pneg %p159
      $region30: #{coupling_nn_forward.1} parent=11 // pred_check_branch
        %258 = sbr.rel (%p256) target = $region32
      $region31: #{coupling_nn_forward.1} parent=11 // pred_region
        _
      $region32: #{coupling_nn_forward.1} parent=11 // pred_fallthru
        _
      // Predicated region
      $region33: #{coupling_nn_forward.1} parent=11 // pred_check
        %p259 = pneg %p180
      $region34: #{coupling_nn_forward.1} parent=11 // pred_check_branch
        %261 = sbr.rel (%p259) target = $region36
      $region35: #{coupling_nn_forward.1} parent=11 // pred_region
        _
      $region36: #{coupling_nn_forward.1} parent=11 // pred_fallthru
        _
      // Predicated region
      $region37: #{coupling_nn_forward.1} parent=11 // pred_check
        %p262 = pneg %p201
      $region38: #{coupling_nn_forward.1} parent=11 // pred_check_branch
        %264 = sbr.rel (%p262) target = $region40
      $region39: #{coupling_nn_forward.1} parent=11 // pred_region
        _
      $region40: #{coupling_nn_forward.1} parent=11 // pred_fallthru
        _
    $region12: #{coupling_nn_forward.1} parent=5 // pred_fallthru
      _
    %p265 = scmp.lt.s32.totalorder %s14, 4
    // Predicated region
    $region41: #{coupling_nn_forward.1} parent=5 // pred_check
      %p266 = pneg %p265
    $region42: #{coupling_nn_forward.1} parent=5 // pred_check_branch
      %268 = sbr.rel (%p266) target = $region44
    $region43: #{coupling_nn_forward.1} parent=5 // pred_region
      // Predicated region
      $region45: #{coupling_nn_forward.1} parent=43 // pred_check
        %p269 = pneg %p48
      $region46: #{coupling_nn_forward.1} parent=43 // pred_check_branch
        %271 = sbr.rel (%p269) target = $region48
      $region47: #{coupling_nn_forward.1} parent=43 // pred_region
        %p272 = scmp.lt.s32.totalorder %s21, 1
        %s273 = scalar_select %p272, %s21, 1
        %p274 = scmp.lt.s32.totalorder %s22, 1
        %s275 = scalar_select %p274, %s22, 1
        %s276 = smul.addr %s275, 20
        %s277 = smul.addr %s273, 40
        %s278 = sadd.s32 %s276, %s277
        %s279 = smul.addr %s278, 4
        %s280 = scalar_lea.vmem %s0, %s279
      $region48: #{coupling_nn_forward.1} parent=43 // pred_fallthru
        _
    $region44: #{coupling_nn_forward.1} parent=5 // pred_fallthru
      _
    %p281 = scmp.le.s32.totalorder 1, %s14
    %p282 = scmp.lt.s32.totalorder %s14, 5
    %p283 = pnand %p281, %p282
    %p284 = pneg %p283
    // Predicated region
    $region49: #{coupling_nn_forward.1} parent=5 // pred_check
      _
    $region50: #{coupling_nn_forward.1} parent=5 // pred_check_branch
      %286 = sbr.rel (%p283) target = $region52
    $region51: #{coupling_nn_forward.1} parent=5 // pred_region
      %s287 = ssub.s32 %s14, 1
      %p288 = scmp.lt.s32.totalorder %s23, 1
      %s289 = scalar_select %p288, %s23, 1
      %p290 = scmp.lt.s32.totalorder %s24, 1
      %s291 = scalar_select %p290, %s24, 1
      %s292 = smul.addr %s291, 20
      %s293 = smul.addr %s289, 40
      %s294 = sadd.s32 %s292, %s293
      %s295 = smul.addr %s294, 4
      %s296 = scalar_lea.vmem %s0, %s295
      %p297 = pneg %p54
      %p298 = pneg %p51
      %p299 = pneg %p75
      %p300 = pneg %p72
      %p301 = pneg %p96
      %p302 = pneg %p93
      %p303 = pneg %p117
      %p304 = pneg %p114
      %p305 = pneg %p138
      %p306 = pneg %p135
      %p307 = pneg %p159
      %p308 = pneg %p156
      %p309 = pneg %p180
      %p310 = pneg %p177
      %p311 = pneg %p201
      %p312 = pneg %p198
      %p313 = pneg %p229
      %p314 = pneg %p226
      %p315 = scmp.lt.s32.totalorder %s23, 1
      %s316 = scalar_select %p315, %s23, 1
      %p317 = scmp.lt.s32.totalorder %s24, 1
      %s318 = scalar_select %p317, %s24, 1
      %s319 = smul.addr %s318, 16
      %s320 = smul.addr %s316, 32
      %s321 = sadd.s32 %s319, %s320
      %s322 = smul.addr %s321, 8
      %s323 = scalar_lea.vmem %s8, %s322
      %p324 = scmp.lt.s32.totalorder %s23, 1
      %s325 = scalar_select %p324, %s23, 1
      %p326 = scmp.lt.s32.totalorder %s24, 1
      %s327 = scalar_select %p326, %s24, 1
      %s328 = smul.addr %s327, 20
      %s329 = smul.addr %s325, 40
      %s330 = sadd.s32 %s328, %s329
      %s331 = smul.addr %s330, 4
      %s332 = scalar_lea.vmem %s0, %s331
      %p333 = scmp.lt.s32.totalorder %s23, 1
      %s334 = scalar_select %p333, %s23, 1
      %p335 = scmp.lt.s32.totalorder %s24, 1
      %s336 = scalar_select %p335, %s24, 1
      %s337 = smul.addr %s336, 16
      %s338 = smul.addr %s334, 32
      %s339 = sadd.s32 %s337, %s338
      %s340 = smul.addr %s339, 8
      %s341 = scalar_lea.vmem %s8, %s340
      %v343 = vld [vmem:[%s332] sm:$0xf]
      %v344 = vld [vmem:[%s332 + $0x4] sm:$0xf]
      %v345 = vld [vmem:[%s332 + $0x8] sm:$0xf]
      %v346 = vld [vmem:[%s332 + $0xc] sm:$0xf]
      %v347 = vld [vmem:[%s332 + $0x10] sm:$0xf]
      %v348 = vld [vmem:[%s332 + $0x14] sm:$0xf]
      %v349 = vld [vmem:[%s332 + $0x18] sm:$0xf]
      %v350 = vld [vmem:[%s332 + $0x1c] sm:$0xf]
      %v351 = vld [vmem:[%s332 + $0x20] sm:$0xf]
      %v352 = vld [vmem:[%s332 + $0x24] sm:$0xf]
      %v353 = vld [vmem:[%s332 + $0x28] sm:$0xf]
      %v354 = vld [vmem:[%s332 + $0x2c] sm:$0xf]
      %v355 = vld [vmem:[%s332 + $0x30] sm:$0xf]
      %v356 = vld [vmem:[%s332 + $0x34] sm:$0xf]
      %v357 = vld [vmem:[%s332 + $0x38] sm:$0xf]
      %v358 = vld [vmem:[%s332 + $0x3c] sm:$0xf]
      %v359 = vld [vmem:[%s332 + $0x40] sm:$0xf]
      %v360 = vld [vmem:[%s332 + $0x44] sm:$0xf]
      %v361 = vld [vmem:[%s332 + $0x48] sm:$0xf]
      %v362 = vld [vmem:[%s332 + $0x4c] sm:$0xf]
      %v363 = vld [vmem:[%s2] sm:$0xff]
      %v364 = vld [vmem:[%s2 + $0x8] sm:$0xff]
      %v365 = vld [vmem:[%s2 + $0x10] sm:$0xff]
      %v366 = vld [vmem:[%s2 + $0x18] sm:$0xff]
      %v367 = vld [vmem:[%s2 + $0x20] sm:$0xff]
      %v368 = vld [vmem:[%s2 + $0x28] sm:$0xff]
      %v369 = vld [vmem:[%s2 + $0x30] sm:$0xff]
      %v370 = vld [vmem:[%s2 + $0x38] sm:$0xff]
      %v371 = vld [vmem:[%s2 + $0x40] sm:$0x33]
      %v372 = vld [vmem:[%s2 + $0x48] sm:$0x33]
      %v373 = vld [vmem:[%s3] sm:$0xf]
      %v375 = vperm.slane %v373, 0
      %v376 = vperm.slane %v373, 1
      %v377 = vperm.slane %v373, 2
      %v378 = vperm.slane %v373, 3
      %v403 = vunpack.c.l.b16 %v343
      %v404 = vunpack.c.l.b16 %v344
      %v405 = vunpack.c.l.b16 %v345
      %v406 = vunpack.c.l.b16 %v346
      %v407 = vunpack.c.l.b16 %v347
      %v408 = vunpack.c.l.b16 %v348
      %v409 = vunpack.c.l.b16 %v349
      %v410 = vunpack.c.l.b16 %v350
      %v411 = vunpack.c.l.b16 %v351
      %v412 = vunpack.c.l.b16 %v352
      %v413 = vunpack.c.l.b16 %v353
      %v414 = vunpack.c.l.b16 %v354
      %v415 = vunpack.c.l.b16 %v355
      %v416 = vunpack.c.l.b16 %v356
      %v417 = vunpack.c.l.b16 %v357
      %v418 = vunpack.c.l.b16 %v358
      %v419 = vunpack.c.l.b16 %v359
      %v420 = vunpack.c.l.b16 %v360
      %v421 = vunpack.c.l.b16 %v361
      %v422 = vunpack.c.l.b16 %v362
      %v423 = vpack.c.b16 %v404, %v403
      %v424 = vpack.c.b16 %v406, %v405
      %v425 = vpack.c.b16 %v408, %v407
      %v426 = vpack.c.b16 %v410, %v409
      %v427 = vpack.c.b16 %v412, %v411
      %v428 = vpack.c.b16 %v414, %v413
      %v429 = vpack.c.b16 %v416, %v415
      %v430 = vpack.c.b16 %v418, %v417
      %v431 = vpack.c.b16 %v420, %v419
      %v432 = vpack.c.b16 %v422, %v421
      %v443 = vunpack.c.l.b16 %v363
      %v444 = vunpack.c.h.b16 %v363
      %v445 = vunpack.c.l.b16 %v364
      %v446 = vunpack.c.h.b16 %v364
      %v447 = vunpack.c.l.b16 %v365
      %v448 = vunpack.c.h.b16 %v365
      %v449 = vunpack.c.l.b16 %v366
      %v450 = vunpack.c.h.b16 %v366
      %v451 = vunpack.c.l.b16 %v367
      %v452 = vunpack.c.h.b16 %v367
      %v453 = vunpack.c.l.b16 %v368
      %v454 = vunpack.c.h.b16 %v368
      %v455 = vunpack.c.l.b16 %v369
      %v456 = vunpack.c.h.b16 %v369
      %v457 = vunpack.c.l.b16 %v370
      %v458 = vunpack.c.h.b16 %v370
      %v459 = vunpack.c.l.b16 %v371
      %v460 = vunpack.c.h.b16 %v371
      %v461 = vunpack.c.l.b16 %v372
      %v462 = vunpack.c.h.b16 %v372
      %v463 = vpack.c.b16 %v447, %v443
      %v464 = vpack.c.b16 %v448, %v444
      %v465 = vpack.c.b16 %v449, %v445
      %v466 = vpack.c.b16 %v450, %v446
      %v467 = vpack.c.b16 %v455, %v451
      %v468 = vpack.c.b16 %v456, %v452
      %v469 = vpack.c.b16 %v457, %v453
      %v470 = vpack.c.b16 %v458, %v454
      %v471 = vpack.c.b16 %v459, %v459
      %v472 = vpack.c.b16 %v460, %v460
      %v473 = vpack.c.b16 %v461, %v461
      %v474 = vpack.c.b16 %v462, %v462
      %vm483 = vcmask 293888
      %v485 = vsel %vm483, %v423, 0
      %v488 = vsel %vm483, %v424, 0
      %v491 = vsel %vm483, %v425, 0
      %v494 = vsel %vm483, %v426, 0
      %v497 = vsel %vm483, %v427, 0
      %v500 = vsel %vm483, %v428, 0
      %v503 = vsel %vm483, %v429, 0
      %v506 = vsel %vm483, %v430, 0
      %v509 = vsel %vm483, %v431, 0
      %v512 = vsel %vm483, %v432, 0
      %vm514 = vcmask 1041408
      %v516 = vsel %vm514, %v471, 0
      %v519 = vsel %vm514, %v472, 0
      %v522 = vsel %vm514, %v473, 0
      %v525 = vsel %vm514, %v474, 0
      %527 = vmatpush.bf16.msra.mxu0 0
      %528 = vmatpush.bf16.msra.mxu0 0
      %529 = vmatpush.bf16.msra.mxu0 0
      %530 = vmatpush.bf16.msra.mxu0 0
      %531 = vmatpush.bf16.msra.mxu0 0
      %532 = vmatpush.bf16.msra.mxu0 %v516
      %533 = vmatpush.bf16.msra.mxu0 %v467
      %534 = vmatpush.bf16.msra.mxu0 %v463
      %535 = vmatmul.bf16.gmra.mxu0 %v485
      %v536 = vpop.f32.mrf.mxu0
      %v537 = vadd.f32 %v375, %v536
      %v538 = vpop.f32.mrf.mxu0
      %v539 = vadd.f32 %v375, %v538
      %540 = vmatmul.bf16.gmra.mxu0 %v488
      %v541 = vpop.f32.mrf.mxu0
      %v542 = vadd.f32 %v375, %v541
      %v543 = vpop.f32.mrf.mxu0
      %v544 = vadd.f32 %v375, %v543
      %545 = vmatmul.bf16.gmra.mxu0 %v491
      %v546 = vpop.f32.mrf.mxu0
      %v547 = vadd.f32 %v375, %v546
      %v548 = vpop.f32.mrf.mxu0
      %v549 = vadd.f32 %v375, %v548
      %550 = vmatmul.bf16.gmra.mxu0 %v494
      %v551 = vpop.f32.mrf.mxu0
      %v552 = vadd.f32 %v375, %v551
      %v553 = vpop.f32.mrf.mxu0
      %v554 = vadd.f32 %v375, %v553
      %555 = vmatmul.bf16.gmra.mxu0 %v497
      %v556 = vpop.f32.mrf.mxu0
      %v557 = vadd.f32 %v375, %v556
      %v558 = vpop.f32.mrf.mxu0
      %v559 = vadd.f32 %v375, %v558
      %560 = vmatmul.bf16.gmra.mxu0 %v500
      %v561 = vpop.f32.mrf.mxu0
      %v562 = vadd.f32 %v375, %v561
      %v563 = vpop.f32.mrf.mxu0
      %v564 = vadd.f32 %v375, %v563
      %565 = vmatmul.bf16.gmra.mxu0 %v503
      %v566 = vpop.f32.mrf.mxu0
      %v567 = vadd.f32 %v375, %v566
      %v568 = vpop.f32.mrf.mxu0
      %v569 = vadd.f32 %v375, %v568
      %570 = vmatmul.bf16.gmra.mxu0 %v506
      %v571 = vpop.f32.mrf.mxu0
      %v572 = vadd.f32 %v375, %v571
      %v573 = vpop.f32.mrf.mxu0
      %v574 = vadd.f32 %v375, %v573
      %575 = vmatmul.bf16.gmra.mxu0 %v509
      %v576 = vpop.f32.mrf.mxu0
      %v577 = vadd.f32 %v375, %v576
      %v578 = vpop.f32.mrf.mxu0
      %v579 = vadd.f32 %v375, %v578
      %580 = vmatmul.bf16.gmra.mxu0 %v512
      %v581 = vpop.f32.mrf.mxu0
      %v582 = vadd.f32 %v375, %v581
      %v583 = vpop.f32.mrf.mxu0
      %v584 = vadd.f32 %v375, %v583
      %585 = vdwg.mxu0
      %586 = vmatpush.bf16.msra.mxu0 0
      %587 = vmatpush.bf16.msra.mxu0 0
      %588 = vmatpush.bf16.msra.mxu0 0
      %589 = vmatpush.bf16.msra.mxu0 0
      %590 = vmatpush.bf16.msra.mxu0 0
      %591 = vmatpush.bf16.msra.mxu0 %v519
      %592 = vmatpush.bf16.msra.mxu0 %v468
      %593 = vmatpush.bf16.msra.mxu0 %v464
      %594 = vmatmul.bf16.gmra.mxu0 %v485
      %v595 = vpop.f32.mrf.mxu0
      %v596 = vadd.f32 %v376, %v595
      %v597 = vpop.f32.mrf.mxu0
      %v598 = vadd.f32 %v376, %v597
      %599 = vmatmul.bf16.gmra.mxu0 %v488
      %v600 = vpop.f32.mrf.mxu0
      %v601 = vadd.f32 %v376, %v600
      %v602 = vpop.f32.mrf.mxu0
      %v603 = vadd.f32 %v376, %v602
      %604 = vmatmul.bf16.gmra.mxu0 %v491
      %v605 = vpop.f32.mrf.mxu0
      %v606 = vadd.f32 %v376, %v605
      %v607 = vpop.f32.mrf.mxu0
      %v608 = vadd.f32 %v376, %v607
      %609 = vmatmul.bf16.gmra.mxu0 %v494
      %v610 = vpop.f32.mrf.mxu0
      %v611 = vadd.f32 %v376, %v610
      %v612 = vpop.f32.mrf.mxu0
      %v613 = vadd.f32 %v376, %v612
      %614 = vmatmul.bf16.gmra.mxu0 %v497
      %v615 = vpop.f32.mrf.mxu0
      %v616 = vadd.f32 %v376, %v615
      %v617 = vpop.f32.mrf.mxu0
      %v618 = vadd.f32 %v376, %v617
      %619 = vmatmul.bf16.gmra.mxu0 %v500
      %v620 = vpop.f32.mrf.mxu0
      %v621 = vadd.f32 %v376, %v620
      %v622 = vpop.f32.mrf.mxu0
      %v623 = vadd.f32 %v376, %v622
      %624 = vmatmul.bf16.gmra.mxu0 %v503
      %v625 = vpop.f32.mrf.mxu0
      %v626 = vadd.f32 %v376, %v625
      %v627 = vpop.f32.mrf.mxu0
      %v628 = vadd.f32 %v376, %v627
      %629 = vmatmul.bf16.gmra.mxu0 %v506
      %v630 = vpop.f32.mrf.mxu0
      %v631 = vadd.f32 %v376, %v630
      %v632 = vpop.f32.mrf.mxu0
      %v633 = vadd.f32 %v376, %v632
      %634 = vmatmul.bf16.gmra.mxu0 %v509
      %v635 = vpop.f32.mrf.mxu0
      %v636 = vadd.f32 %v376, %v635
      %v637 = vpop.f32.mrf.mxu0
      %v638 = vadd.f32 %v376, %v637
      %639 = vmatmul.bf16.gmra.mxu0 %v512
      %v640 = vpop.f32.mrf.mxu0
      %v641 = vadd.f32 %v376, %v640
      %v642 = vpop.f32.mrf.mxu0
      %v643 = vadd.f32 %v376, %v642
      %644 = vdwg.mxu0
      %645 = vmatpush.bf16.msra.mxu0 0
      %646 = vmatpush.bf16.msra.mxu0 0
      %647 = vmatpush.bf16.msra.mxu0 0
      %648 = vmatpush.bf16.msra.mxu0 0
      %649 = vmatpush.bf16.msra.mxu0 0
      %650 = vmatpush.bf16.msra.mxu0 %v522
      %651 = vmatpush.bf16.msra.mxu0 %v469
      %652 = vmatpush.bf16.msra.mxu0 %v465
      %653 = vmatmul.bf16.gmra.mxu0 %v485
      %v654 = vpop.f32.mrf.mxu0
      %v655 = vadd.f32 %v377, %v654
      %v656 = vpop.f32.mrf.mxu0
      %v657 = vadd.f32 %v377, %v656
      %658 = vmatmul.bf16.gmra.mxu0 %v488
      %v659 = vpop.f32.mrf.mxu0
      %v660 = vadd.f32 %v377, %v659
      %v661 = vpop.f32.mrf.mxu0
      %v662 = vadd.f32 %v377, %v661
      %663 = vmatmul.bf16.gmra.mxu0 %v491
      %v664 = vpop.f32.mrf.mxu0
      %v665 = vadd.f32 %v377, %v664
      %v666 = vpop.f32.mrf.mxu0
      %v667 = vadd.f32 %v377, %v666
      %668 = vmatmul.bf16.gmra.mxu0 %v494
      %v669 = vpop.f32.mrf.mxu0
      %v670 = vadd.f32 %v377, %v669
      %v671 = vpop.f32.mrf.mxu0
      %v672 = vadd.f32 %v377, %v671
      %673 = vmatmul.bf16.gmra.mxu0 %v497
      %v674 = vpop.f32.mrf.mxu0
      %v675 = vadd.f32 %v377, %v674
      %v676 = vpop.f32.mrf.mxu0
      %v677 = vadd.f32 %v377, %v676
      %678 = vmatmul.bf16.gmra.mxu0 %v500
      %v679 = vpop.f32.mrf.mxu0
      %v680 = vadd.f32 %v377, %v679
      %v681 = vpop.f32.mrf.mxu0
      %v682 = vadd.f32 %v377, %v681
      %683 = vmatmul.bf16.gmra.mxu0 %v503
      %v684 = vpop.f32.mrf.mxu0
      %v685 = vadd.f32 %v377, %v684
      %v686 = vpop.f32.mrf.mxu0
      %v687 = vadd.f32 %v377, %v686
      %688 = vmatmul.bf16.gmra.mxu0 %v506
      %v689 = vpop.f32.mrf.mxu0
      %v690 = vadd.f32 %v377, %v689
      %v691 = vpop.f32.mrf.mxu0
      %v692 = vadd.f32 %v377, %v691
      %693 = vmatmul.bf16.gmra.mxu0 %v509
      %v694 = vpop.f32.mrf.mxu0
      %v695 = vadd.f32 %v377, %v694
      %v696 = vpop.f32.mrf.mxu0
      %v697 = vadd.f32 %v377, %v696
      %698 = vmatmul.bf16.gmra.mxu0 %v512
      %v699 = vpop.f32.mrf.mxu0
      %v700 = vadd.f32 %v377, %v699
      %v701 = vpop.f32.mrf.mxu0
      %v702 = vadd.f32 %v377, %v701
      %703 = vdwg.mxu0
      %704 = vmatpush.bf16.msra.mxu0 0
      %705 = vmatpush.bf16.msra.mxu0 0
      %706 = vmatpush.bf16.msra.mxu0 0
      %707 = vmatpush.bf16.msra.mxu0 0
      %708 = vmatpush.bf16.msra.mxu0 0
      %709 = vmatpush.bf16.msra.mxu0 %v525
      %710 = vmatpush.bf16.msra.mxu0 %v470
      %711 = vmatpush.bf16.msra.mxu0 %v466
      %712 = vmatmul.bf16.gmra.mxu0 %v485
      %v713 = vpop.f32.mrf.mxu0
      %v714 = vadd.f32 %v378, %v713
      %v715 = vpop.f32.mrf.mxu0
      %v716 = vadd.f32 %v378, %v715
      %717 = vmatmul.bf16.gmra.mxu0 %v488
      %v718 = vpop.f32.mrf.mxu0
      %v719 = vadd.f32 %v378, %v718
      %v720 = vpop.f32.mrf.mxu0
      %v721 = vadd.f32 %v378, %v720
      %722 = vmatmul.bf16.gmra.mxu0 %v491
      %v723 = vpop.f32.mrf.mxu0
      %v724 = vadd.f32 %v378, %v723
      %v725 = vpop.f32.mrf.mxu0
      %v726 = vadd.f32 %v378, %v725
      %727 = vmatmul.bf16.gmra.mxu0 %v494
      %v728 = vpop.f32.mrf.mxu0
      %v729 = vadd.f32 %v378, %v728
      %v730 = vpop.f32.mrf.mxu0
      %v731 = vadd.f32 %v378, %v730
      %732 = vmatmul.bf16.gmra.mxu0 %v497
      %v733 = vpop.f32.mrf.mxu0
      %v734 = vadd.f32 %v378, %v733
      %v735 = vpop.f32.mrf.mxu0
      %v736 = vadd.f32 %v378, %v735
      %737 = vmatmul.bf16.gmra.mxu0 %v500
      %v738 = vpop.f32.mrf.mxu0
      %v739 = vadd.f32 %v378, %v738
      %v740 = vpop.f32.mrf.mxu0
      %v741 = vadd.f32 %v378, %v740
      %742 = vmatmul.bf16.gmra.mxu0 %v503
      %v743 = vpop.f32.mrf.mxu0
      %v744 = vadd.f32 %v378, %v743
      %v745 = vpop.f32.mrf.mxu0
      %v746 = vadd.f32 %v378, %v745
      %747 = vmatmul.bf16.gmra.mxu0 %v506
      %v748 = vpop.f32.mrf.mxu0
      %v749 = vadd.f32 %v378, %v748
      %v750 = vpop.f32.mrf.mxu0
      %v751 = vadd.f32 %v378, %v750
      %752 = vmatmul.bf16.gmra.mxu0 %v509
      %v753 = vpop.f32.mrf.mxu0
      %v754 = vadd.f32 %v378, %v753
      %v755 = vpop.f32.mrf.mxu0
      %v756 = vadd.f32 %v378, %v755
      %757 = vmatmul.bf16.gmra.mxu0 %v512
      %v758 = vpop.f32.mrf.mxu0
      %v759 = vadd.f32 %v378, %v758
      %v760 = vpop.f32.mrf.mxu0
      %v761 = vadd.f32 %v378, %v760
      %762 = vdwg.mxu0
      %v763 = vmax.f32 %v537, 0.0
      %v764 = vmax.f32 %v596, 0.0
      %v765 = vmax.f32 %v655, 0.0
      %v766 = vmax.f32 %v714, 0.0
      %v767 = vmax.f32 %v539, 0.0
      %v768 = vmax.f32 %v598, 0.0
      %v769 = vmax.f32 %v657, 0.0
      %v770 = vmax.f32 %v716, 0.0
      %v771 = vmax.f32 %v542, 0.0
      %v772 = vmax.f32 %v601, 0.0
      %v773 = vmax.f32 %v660, 0.0
      %v774 = vmax.f32 %v719, 0.0
      %v775 = vmax.f32 %v544, 0.0
      %v776 = vmax.f32 %v603, 0.0
      %v777 = vmax.f32 %v662, 0.0
      %v778 = vmax.f32 %v721, 0.0
      %v779 = vmax.f32 %v547, 0.0
      %v780 = vmax.f32 %v606, 0.0
      %v781 = vmax.f32 %v665, 0.0
      %v782 = vmax.f32 %v724, 0.0
      %v783 = vmax.f32 %v549, 0.0
      %v784 = vmax.f32 %v608, 0.0
      %v785 = vmax.f32 %v667, 0.0
      %v786 = vmax.f32 %v726, 0.0
      %v787 = vmax.f32 %v552, 0.0
      %v788 = vmax.f32 %v611, 0.0
      %v789 = vmax.f32 %v670, 0.0
      %v790 = vmax.f32 %v729, 0.0
      %v791 = vmax.f32 %v554, 0.0
      %v792 = vmax.f32 %v613, 0.0
      %v793 = vmax.f32 %v672, 0.0
      %v794 = vmax.f32 %v731, 0.0
      %v795 = vmax.f32 %v557, 0.0
      %v796 = vmax.f32 %v616, 0.0
      %v797 = vmax.f32 %v675, 0.0
      %v798 = vmax.f32 %v734, 0.0
      %v799 = vmax.f32 %v559, 0.0
      %v800 = vmax.f32 %v618, 0.0
      %v801 = vmax.f32 %v677, 0.0
      %v802 = vmax.f32 %v736, 0.0
      %v803 = vmax.f32 %v562, 0.0
      %v804 = vmax.f32 %v621, 0.0
      %v805 = vmax.f32 %v680, 0.0
      %v806 = vmax.f32 %v739, 0.0
      %v807 = vmax.f32 %v564, 0.0
      %v808 = vmax.f32 %v623, 0.0
      %v809 = vmax.f32 %v682, 0.0
      %v810 = vmax.f32 %v741, 0.0
      %v811 = vmax.f32 %v567, 0.0
      %v812 = vmax.f32 %v626, 0.0
      %v813 = vmax.f32 %v685, 0.0
      %v814 = vmax.f32 %v744, 0.0
      %v815 = vmax.f32 %v569, 0.0
      %v816 = vmax.f32 %v628, 0.0
      %v817 = vmax.f32 %v687, 0.0
      %v818 = vmax.f32 %v746, 0.0
      %v819 = vmax.f32 %v572, 0.0
      %v820 = vmax.f32 %v631, 0.0
      %v821 = vmax.f32 %v690, 0.0
      %v822 = vmax.f32 %v749, 0.0
      %v823 = vmax.f32 %v574, 0.0
      %v824 = vmax.f32 %v633, 0.0
      %v825 = vmax.f32 %v692, 0.0
      %v826 = vmax.f32 %v751, 0.0
      %v827 = vmax.f32 %v577, 0.0
      %v828 = vmax.f32 %v636, 0.0
      %v829 = vmax.f32 %v695, 0.0
      %v830 = vmax.f32 %v754, 0.0
      %v831 = vmax.f32 %v579, 0.0
      %v832 = vmax.f32 %v638, 0.0
      %v833 = vmax.f32 %v697, 0.0
      %v834 = vmax.f32 %v756, 0.0
      %v835 = vmax.f32 %v582, 0.0
      %v836 = vmax.f32 %v641, 0.0
      %v837 = vmax.f32 %v700, 0.0
      %v838 = vmax.f32 %v759, 0.0
      %v839 = vmax.f32 %v584, 0.0
      %v840 = vmax.f32 %v643, 0.0
      %v841 = vmax.f32 %v702, 0.0
      %v842 = vmax.f32 %v761, 0.0
      %v843 = vpack.c.bf16 %v767, %v763
      %v844 = vpack.c.bf16 %v768, %v764
      %v845 = vpack.c.bf16 %v769, %v765
      %v846 = vpack.c.bf16 %v770, %v766
      %v847 = vpack.c.bf16 %v775, %v771
      %v848 = vpack.c.bf16 %v776, %v772
      %v849 = vpack.c.bf16 %v777, %v773
      %v850 = vpack.c.bf16 %v778, %v774
      %v851 = vpack.c.bf16 %v783, %v779
      %v852 = vpack.c.bf16 %v784, %v780
      %v853 = vpack.c.bf16 %v785, %v781
      %v854 = vpack.c.bf16 %v786, %v782
      %v855 = vpack.c.bf16 %v791, %v787
      %v856 = vpack.c.bf16 %v792, %v788
      %v857 = vpack.c.bf16 %v793, %v789
      %v858 = vpack.c.bf16 %v794, %v790
      %v859 = vpack.c.bf16 %v799, %v795
      %v860 = vpack.c.bf16 %v800, %v796
      %v861 = vpack.c.bf16 %v801, %v797
      %v862 = vpack.c.bf16 %v802, %v798
      %v863 = vpack.c.bf16 %v807, %v803
      %v864 = vpack.c.bf16 %v808, %v804
      %v865 = vpack.c.bf16 %v809, %v805
      %v866 = vpack.c.bf16 %v810, %v806
      %v867 = vpack.c.bf16 %v815, %v811
      %v868 = vpack.c.bf16 %v816, %v812
      %v869 = vpack.c.bf16 %v817, %v813
      %v870 = vpack.c.bf16 %v818, %v814
      %v871 = vpack.c.bf16 %v823, %v819
      %v872 = vpack.c.bf16 %v824, %v820
      %v873 = vpack.c.bf16 %v825, %v821
      %v874 = vpack.c.bf16 %v826, %v822
      %v875 = vpack.c.bf16 %v831, %v827
      %v876 = vpack.c.bf16 %v832, %v828
      %v877 = vpack.c.bf16 %v833, %v829
      %v878 = vpack.c.bf16 %v834, %v830
      %v879 = vpack.c.bf16 %v839, %v835
      %v880 = vpack.c.bf16 %v840, %v836
      %v881 = vpack.c.bf16 %v841, %v837
      %v882 = vpack.c.bf16 %v842, %v838
      %v883 = vld [vmem:[%s4] sm:$0xff]
      %v884 = vld [vmem:[%s4 + $0x8] sm:$0xff]
      %v885 = vld [vmem:[%s4 + $0x10] sm:$0xff]
      %v886 = vld [vmem:[%s4 + $0x18] sm:$0xff]
      %v887 = vld [vmem:[%s4 + $0x20] sm:$0xff]
      %v888 = vld [vmem:[%s4 + $0x28] sm:$0xff]
      %v889 = vld [vmem:[%s4 + $0x30] sm:$0xff]
      %v890 = vld [vmem:[%s4 + $0x38] sm:$0xff]
      %v891 = vld [vmem:[%s4 + $0x40] sm:$0xff]
      %v892 = vld [vmem:[%s4 + $0x48] sm:$0xff]
      %v893 = vld [vmem:[%s4 + $0x50] sm:$0xff]
      %v894 = vld [vmem:[%s4 + $0x58] sm:$0xff]
      %v895 = vld [vmem:[%s4 + $0x60] sm:$0xff]
      %v896 = vld [vmem:[%s4 + $0x68] sm:$0xff]
      %v897 = vld [vmem:[%s4 + $0x70] sm:$0xff]
      %v898 = vld [vmem:[%s4 + $0x78] sm:$0xff]
      %v899 = vld [vmem:[%s4 + $0x80] sm:$0xff]
      %v900 = vld [vmem:[%s4 + $0x88] sm:$0xff]
      %v901 = vld [vmem:[%s4 + $0x90] sm:$0xff]
      %v902 = vld [vmem:[%s4 + $0x98] sm:$0xff]
      %v903 = vld [vmem:[%s4 + $0xa0] sm:$0xff]
      %v904 = vld [vmem:[%s4 + $0xa8] sm:$0xff]
      %v905 = vld [vmem:[%s4 + $0xb0] sm:$0xff]
      %v906 = vld [vmem:[%s4 + $0xb8] sm:$0xff]
      %v907 = vld [vmem:[%s4 + $0xc0] sm:$0xff]
      %v908 = vld [vmem:[%s4 + $0xc8] sm:$0xff]
      %v909 = vld [vmem:[%s4 + $0xd0] sm:$0xff]
      %v910 = vld [vmem:[%s4 + $0xd8] sm:$0xff]
      %v911 = vld [vmem:[%s4 + $0xe0] sm:$0xff]
      %v912 = vld [vmem:[%s4 + $0xe8] sm:$0xff]
      %v913 = vld [vmem:[%s4 + $0xf0] sm:$0xff]
      %v914 = vld [vmem:[%s4 + $0xf8] sm:$0xff]
      %v915 = vld [vmem:[%s4 + $0x100] sm:$0xff]
      %v916 = vld [vmem:[%s4 + $0x108] sm:$0xff]
      %v917 = vld [vmem:[%s4 + $0x110] sm:$0xff]
      %v918 = vld [vmem:[%s4 + $0x118] sm:$0xff]
      %v919 = vld [vmem:[%s4 + $0x120] sm:$0xff]
      %v920 = vld [vmem:[%s4 + $0x128] sm:$0xff]
      %v921 = vld [vmem:[%s4 + $0x130] sm:$0xff]
      %v922 = vld [vmem:[%s4 + $0x138] sm:$0xff]
      %v923 = vld [vmem:[%s4 + $0x140] sm:$0xff]
      %v924 = vld [vmem:[%s4 + $0x148] sm:$0xff]
      %v925 = vld [vmem:[%s4 + $0x150] sm:$0xff]
      %v926 = vld [vmem:[%s4 + $0x158] sm:$0xff]
      %v927 = vld [vmem:[%s4 + $0x160] sm:$0xff]
      %v928 = vld [vmem:[%s4 + $0x168] sm:$0xff]
      %v929 = vld [vmem:[%s4 + $0x170] sm:$0xff]
      %v930 = vld [vmem:[%s4 + $0x178] sm:$0xff]
      %v931 = vld [vmem:[%s4 + $0x180] sm:$0xff]
      %v932 = vld [vmem:[%s4 + $0x188] sm:$0xff]
      %v933 = vld [vmem:[%s4 + $0x190] sm:$0xff]
      %v934 = vld [vmem:[%s4 + $0x198] sm:$0xff]
      %v935 = vld [vmem:[%s4 + $0x1a0] sm:$0xff]
      %v936 = vld [vmem:[%s4 + $0x1a8] sm:$0xff]
      %v937 = vld [vmem:[%s4 + $0x1b0] sm:$0xff]
      %v938 = vld [vmem:[%s4 + $0x1b8] sm:$0xff]
      %v939 = vld [vmem:[%s4 + $0x1c0] sm:$0xff]
      %v940 = vld [vmem:[%s4 + $0x1c8] sm:$0xff]
      %v941 = vld [vmem:[%s4 + $0x1d0] sm:$0xff]
      %v942 = vld [vmem:[%s4 + $0x1d8] sm:$0xff]
      %v943 = vld [vmem:[%s4 + $0x1e0] sm:$0xff]
      %v944 = vld [vmem:[%s4 + $0x1e8] sm:$0xff]
      %v945 = vld [vmem:[%s4 + $0x1f0] sm:$0xff]
      %v946 = vld [vmem:[%s4 + $0x1f8] sm:$0xff]
      %v947 = vld [vmem:[%s4 + $0x200] sm:$0xff]
      %v948 = vld [vmem:[%s4 + $0x208] sm:$0xff]
      %v949 = vld [vmem:[%s4 + $0x210] sm:$0xff]
      %v950 = vld [vmem:[%s4 + $0x218] sm:$0xff]
      %v951 = vld [vmem:[%s4 + $0x220] sm:$0xff]
      %v952 = vld [vmem:[%s4 + $0x228] sm:$0xff]
      %v953 = vld [vmem:[%s4 + $0x230] sm:$0xff]
      %v954 = vld [vmem:[%s4 + $0x238] sm:$0xff]
      %v955 = vld [vmem:[%s4 + $0x240] sm:$0xff]
      %v956 = vld [vmem:[%s4 + $0x248] sm:$0xff]
      %v957 = vld [vmem:[%s4 + $0x250] sm:$0xff]
      %v958 = vld [vmem:[%s4 + $0x258] sm:$0xff]
      %v959 = vld [vmem:[%s4 + $0x260] sm:$0xff]
      %v960 = vld [vmem:[%s4 + $0x268] sm:$0xff]
      %v961 = vld [vmem:[%s4 + $0x270] sm:$0xff]
      %v962 = vld [vmem:[%s4 + $0x278] sm:$0xff]
      %v963 = vld [vmem:[%s4 + $0x280] sm:$0xff]
      %v964 = vld [vmem:[%s4 + $0x288] sm:$0xff]
      %v965 = vld [vmem:[%s4 + $0x290] sm:$0xff]
      %v966 = vld [vmem:[%s4 + $0x298] sm:$0xff]
      %v967 = vld [vmem:[%s4 + $0x2a0] sm:$0xff]
      %v968 = vld [vmem:[%s4 + $0x2a8] sm:$0xff]
      %v969 = vld [vmem:[%s4 + $0x2b0] sm:$0xff]
      %v970 = vld [vmem:[%s4 + $0x2b8] sm:$0xff]
      %v971 = vld [vmem:[%s4 + $0x2c0] sm:$0xff]
      %v972 = vld [vmem:[%s4 + $0x2c8] sm:$0xff]
      %v973 = vld [vmem:[%s4 + $0x2d0] sm:$0xff]
      %v974 = vld [vmem:[%s4 + $0x2d8] sm:$0xff]
      %v975 = vld [vmem:[%s4 + $0x2e0] sm:$0xff]
      %v976 = vld [vmem:[%s4 + $0x2e8] sm:$0xff]
      %v977 = vld [vmem:[%s4 + $0x2f0] sm:$0xff]
      %v978 = vld [vmem:[%s4 + $0x2f8] sm:$0xff]
      %v979 = vld [vmem:[%s4 + $0x300] sm:$0xff]
      %v980 = vld [vmem:[%s4 + $0x308] sm:$0xff]
      %v981 = vld [vmem:[%s4 + $0x310] sm:$0xff]
      %v982 = vld [vmem:[%s4 + $0x318] sm:$0xff]
      %v983 = vld [vmem:[%s4 + $0x320] sm:$0xff]
      %v984 = vld [vmem:[%s4 + $0x328] sm:$0xff]
      %v985 = vld [vmem:[%s4 + $0x330] sm:$0xff]
      %v986 = vld [vmem:[%s4 + $0x338] sm:$0xff]
      %v987 = vld [vmem:[%s4 + $0x340] sm:$0xff]
      %v988 = vld [vmem:[%s4 + $0x348] sm:$0xff]
      %v989 = vld [vmem:[%s4 + $0x350] sm:$0xff]
      %v990 = vld [vmem:[%s4 + $0x358] sm:$0xff]
      %v991 = vld [vmem:[%s4 + $0x360] sm:$0xff]
      %v992 = vld [vmem:[%s4 + $0x368] sm:$0xff]
      %v993 = vld [vmem:[%s4 + $0x370] sm:$0xff]
      %v994 = vld [vmem:[%s4 + $0x378] sm:$0xff]
      %v995 = vld [vmem:[%s4 + $0x380] sm:$0xff]
      %v996 = vld [vmem:[%s4 + $0x388] sm:$0xff]
      %v997 = vld [vmem:[%s4 + $0x390] sm:$0xff]
      %v998 = vld [vmem:[%s4 + $0x398] sm:$0xff]
      %v999 = vld [vmem:[%s4 + $0x3a0] sm:$0xff]
      %v1000 = vld [vmem:[%s4 + $0x3a8] sm:$0xff]
      %v1001 = vld [vmem:[%s4 + $0x3b0] sm:$0xff]
      %v1002 = vld [vmem:[%s4 + $0x3b8] sm:$0xff]
      %v1003 = vld [vmem:[%s4 + $0x3c0] sm:$0xff]
      %v1004 = vld [vmem:[%s4 + $0x3c8] sm:$0xff]
      %v1005 = vld [vmem:[%s4 + $0x3d0] sm:$0xff]
      %v1006 = vld [vmem:[%s4 + $0x3d8] sm:$0xff]
      %v1007 = vld [vmem:[%s4 + $0x3e0] sm:$0xff]
      %v1008 = vld [vmem:[%s4 + $0x3e8] sm:$0xff]
      %v1009 = vld [vmem:[%s4 + $0x3f0] sm:$0xff]
      %v1010 = vld [vmem:[%s4 + $0x3f8] sm:$0xff]
      %v1011 = vld [vmem:[%s5] sm:$0xf]
      %v1013 = vperm.slane %v1011, 0
      %v1014 = vperm.slane %v1011, 1
      %v1015 = vperm.slane %v1011, 2
      %v1016 = vperm.slane %v1011, 3
      %v1149 = vunpack.c.l.b16 %v883
      %v1150 = vunpack.c.h.b16 %v883
      %v1151 = vunpack.c.l.b16 %v884
      %v1152 = vunpack.c.h.b16 %v884
      %v1153 = vunpack.c.l.b16 %v885
      %v1154 = vunpack.c.h.b16 %v885
      %v1155 = vunpack.c.l.b16 %v886
      %v1156 = vunpack.c.h.b16 %v886
      %v1157 = vunpack.c.l.b16 %v887
      %v1158 = vunpack.c.h.b16 %v887
      %v1159 = vunpack.c.l.b16 %v888
      %v1160 = vunpack.c.h.b16 %v888
      %v1161 = vunpack.c.l.b16 %v889
      %v1162 = vunpack.c.h.b16 %v889
      %v1163 = vunpack.c.l.b16 %v890
      %v1164 = vunpack.c.h.b16 %v890
      %v1165 = vunpack.c.l.b16 %v891
      %v1166 = vunpack.c.h.b16 %v891
      %v1167 = vunpack.c.l.b16 %v892
      %v1168 = vunpack.c.h.b16 %v892
      %v1169 = vunpack.c.l.b16 %v893
      %v1170 = vunpack.c.h.b16 %v893
      %v1171 = vunpack.c.l.b16 %v894
      %v1172 = vunpack.c.h.b16 %v894
      %v1173 = vunpack.c.l.b16 %v895
      %v1174 = vunpack.c.h.b16 %v895
      %v1175 = vunpack.c.l.b16 %v896
      %v1176 = vunpack.c.h.b16 %v896
      %v1177 = vunpack.c.l.b16 %v897
      %v1178 = vunpack.c.h.b16 %v897
      %v1179 = vunpack.c.l.b16 %v898
      %v1180 = vunpack.c.h.b16 %v898
      %v1181 = vunpack.c.l.b16 %v899
      %v1182 = vunpack.c.h.b16 %v899
      %v1183 = vunpack.c.l.b16 %v900
      %v1184 = vunpack.c.h.b16 %v900
      %v1185 = vunpack.c.l.b16 %v901
      %v1186 = vunpack.c.h.b16 %v901
      %v1187 = vunpack.c.l.b16 %v902
      %v1188 = vunpack.c.h.b16 %v902
      %v1189 = vunpack.c.l.b16 %v903
      %v1190 = vunpack.c.h.b16 %v903
      %v1191 = vunpack.c.l.b16 %v904
      %v1192 = vunpack.c.h.b16 %v904
      %v1193 = vunpack.c.l.b16 %v905
      %v1194 = vunpack.c.h.b16 %v905
      %v1195 = vunpack.c.l.b16 %v906
      %v1196 = vunpack.c.h.b16 %v906
      %v1197 = vunpack.c.l.b16 %v907
      %v1198 = vunpack.c.h.b16 %v907
      %v1199 = vunpack.c.l.b16 %v908
      %v1200 = vunpack.c.h.b16 %v908
      %v1201 = vunpack.c.l.b16 %v909
      %v1202 = vunpack.c.h.b16 %v909
      %v1203 = vunpack.c.l.b16 %v910
      %v1204 = vunpack.c.h.b16 %v910
      %v1205 = vunpack.c.l.b16 %v911
      %v1206 = vunpack.c.h.b16 %v911
      %v1207 = vunpack.c.l.b16 %v912
      %v1208 = vunpack.c.h.b16 %v912
      %v1209 = vunpack.c.l.b16 %v913
      %v1210 = vunpack.c.h.b16 %v913
      %v1211 = vunpack.c.l.b16 %v914
      %v1212 = vunpack.c.h.b16 %v914
      %v1213 = vunpack.c.l.b16 %v915
      %v1214 = vunpack.c.h.b16 %v915
      %v1215 = vunpack.c.l.b16 %v916
      %v1216 = vunpack.c.h.b16 %v916
      %v1217 = vunpack.c.l.b16 %v917
      %v1218 = vunpack.c.h.b16 %v917
      %v1219 = vunpack.c.l.b16 %v918
      %v1220 = vunpack.c.h.b16 %v918
      %v1221 = vunpack.c.l.b16 %v919
      %v1222 = vunpack.c.h.b16 %v919
      %v1223 = vunpack.c.l.b16 %v920
      %v1224 = vunpack.c.h.b16 %v920
      %v1225 = vunpack.c.l.b16 %v921
      %v1226 = vunpack.c.h.b16 %v921
      %v1227 = vunpack.c.l.b16 %v922
      %v1228 = vunpack.c.h.b16 %v922
      %v1229 = vunpack.c.l.b16 %v923
      %v1230 = vunpack.c.h.b16 %v923
      %v1231 = vunpack.c.l.b16 %v924
      %v1232 = vunpack.c.h.b16 %v924
      %v1233 = vunpack.c.l.b16 %v925
      %v1234 = vunpack.c.h.b16 %v925
      %v1235 = vunpack.c.l.b16 %v926
      %v1236 = vunpack.c.h.b16 %v926
      %v1237 = vunpack.c.l.b16 %v927
      %v1238 = vunpack.c.h.b16 %v927
      %v1239 = vunpack.c.l.b16 %v928
      %v1240 = vunpack.c.h.b16 %v928
      %v1241 = vunpack.c.l.b16 %v929
      %v1242 = vunpack.c.h.b16 %v929
      %v1243 = vunpack.c.l.b16 %v930
      %v1244 = vunpack.c.h.b16 %v930
      %v1245 = vunpack.c.l.b16 %v931
      %v1246 = vunpack.c.h.b16 %v931
      %v1247 = vunpack.c.l.b16 %v932
      %v1248 = vunpack.c.h.b16 %v932
      %v1249 = vunpack.c.l.b16 %v933
      %v1250 = vunpack.c.h.b16 %v933
      %v1251 = vunpack.c.l.b16 %v934
      %v1252 = vunpack.c.h.b16 %v934
      %v1253 = vunpack.c.l.b16 %v935
      %v1254 = vunpack.c.h.b16 %v935
      %v1255 = vunpack.c.l.b16 %v936
      %v1256 = vunpack.c.h.b16 %v936
      %v1257 = vunpack.c.l.b16 %v937
      %v1258 = vunpack.c.h.b16 %v937
      %v1259 = vunpack.c.l.b16 %v938
      %v1260 = vunpack.c.h.b16 %v938
      %v1261 = vunpack.c.l.b16 %v939
      %v1262 = vunpack.c.h.b16 %v939
      %v1263 = vunpack.c.l.b16 %v940
      %v1264 = vunpack.c.h.b16 %v940
      %v1265 = vunpack.c.l.b16 %v941
      %v1266 = vunpack.c.h.b16 %v941
      %v1267 = vunpack.c.l.b16 %v942
      %v1268 = vunpack.c.h.b16 %v942
      %v1269 = vunpack.c.l.b16 %v943
      %v1270 = vunpack.c.h.b16 %v943
      %v1271 = vunpack.c.l.b16 %v944
      %v1272 = vunpack.c.h.b16 %v944
      %v1273 = vunpack.c.l.b16 %v945
      %v1274 = vunpack.c.h.b16 %v945
      %v1275 = vunpack.c.l.b16 %v946
      %v1276 = vunpack.c.h.b16 %v946
      %v1277 = vunpack.c.l.b16 %v947
      %v1278 = vunpack.c.h.b16 %v947
      %v1279 = vunpack.c.l.b16 %v948
      %v1280 = vunpack.c.h.b16 %v948
      %v1281 = vunpack.c.l.b16 %v949
      %v1282 = vunpack.c.h.b16 %v949
      %v1283 = vunpack.c.l.b16 %v950
      %v1284 = vunpack.c.h.b16 %v950
      %v1285 = vunpack.c.l.b16 %v951
      %v1286 = vunpack.c.h.b16 %v951
      %v1287 = vunpack.c.l.b16 %v952
      %v1288 = vunpack.c.h.b16 %v952
      %v1289 = vunpack.c.l.b16 %v953
      %v1290 = vunpack.c.h.b16 %v953
      %v1291 = vunpack.c.l.b16 %v954
      %v1292 = vunpack.c.h.b16 %v954
      %v1293 = vunpack.c.l.b16 %v955
      %v1294 = vunpack.c.h.b16 %v955
      %v1295 = vunpack.c.l.b16 %v956
      %v1296 = vunpack.c.h.b16 %v956
      %v1297 = vunpack.c.l.b16 %v957
      %v1298 = vunpack.c.h.b16 %v957
      %v1299 = vunpack.c.l.b16 %v958
      %v1300 = vunpack.c.h.b16 %v958
      %v1301 = vunpack.c.l.b16 %v959
      %v1302 = vunpack.c.h.b16 %v959
      %v1303 = vunpack.c.l.b16 %v960
      %v1304 = vunpack.c.h.b16 %v960
      %v1305 = vunpack.c.l.b16 %v961
      %v1306 = vunpack.c.h.b16 %v961
      %v1307 = vunpack.c.l.b16 %v962
      %v1308 = vunpack.c.h.b16 %v962
      %v1309 = vunpack.c.l.b16 %v963
      %v1310 = vunpack.c.h.b16 %v963
      %v1311 = vunpack.c.l.b16 %v964
      %v1312 = vunpack.c.h.b16 %v964
      %v1313 = vunpack.c.l.b16 %v965
      %v1314 = vunpack.c.h.b16 %v965
      %v1315 = vunpack.c.l.b16 %v966
      %v1316 = vunpack.c.h.b16 %v966
      %v1317 = vunpack.c.l.b16 %v967
      %v1318 = vunpack.c.h.b16 %v967
      %v1319 = vunpack.c.l.b16 %v968
      %v1320 = vunpack.c.h.b16 %v968
      %v1321 = vunpack.c.l.b16 %v969
      %v1322 = vunpack.c.h.b16 %v969
      %v1323 = vunpack.c.l.b16 %v970
      %v1324 = vunpack.c.h.b16 %v970
      %v1325 = vunpack.c.l.b16 %v971
      %v1326 = vunpack.c.h.b16 %v971
      %v1327 = vunpack.c.l.b16 %v972
      %v1328 = vunpack.c.h.b16 %v972
      %v1329 = vunpack.c.l.b16 %v973
      %v1330 = vunpack.c.h.b16 %v973
      %v1331 = vunpack.c.l.b16 %v974
      %v1332 = vunpack.c.h.b16 %v974
      %v1333 = vunpack.c.l.b16 %v975
      %v1334 = vunpack.c.h.b16 %v975
      %v1335 = vunpack.c.l.b16 %v976
      %v1336 = vunpack.c.h.b16 %v976
      %v1337 = vunpack.c.l.b16 %v977
      %v1338 = vunpack.c.h.b16 %v977
      %v1339 = vunpack.c.l.b16 %v978
      %v1340 = vunpack.c.h.b16 %v978
      %v1341 = vunpack.c.l.b16 %v979
      %v1342 = vunpack.c.h.b16 %v979
      %v1343 = vunpack.c.l.b16 %v980
      %v1344 = vunpack.c.h.b16 %v980
      %v1345 = vunpack.c.l.b16 %v981
      %v1346 = vunpack.c.h.b16 %v981
      %v1347 = vunpack.c.l.b16 %v982
      %v1348 = vunpack.c.h.b16 %v982
      %v1349 = vunpack.c.l.b16 %v983
      %v1350 = vunpack.c.h.b16 %v983
      %v1351 = vunpack.c.l.b16 %v984
      %v1352 = vunpack.c.h.b16 %v984
      %v1353 = vunpack.c.l.b16 %v985
      %v1354 = vunpack.c.h.b16 %v985
      %v1355 = vunpack.c.l.b16 %v986
      %v1356 = vunpack.c.h.b16 %v986
      %v1357 = vunpack.c.l.b16 %v987
      %v1358 = vunpack.c.h.b16 %v987
      %v1359 = vunpack.c.l.b16 %v988
      %v1360 = vunpack.c.h.b16 %v988
      %v1361 = vunpack.c.l.b16 %v989
      %v1362 = vunpack.c.h.b16 %v989
      %v1363 = vunpack.c.l.b16 %v990
      %v1364 = vunpack.c.h.b16 %v990
      %v1365 = vunpack.c.l.b16 %v991
      %v1366 = vunpack.c.h.b16 %v991
      %v1367 = vunpack.c.l.b16 %v992
      %v1368 = vunpack.c.h.b16 %v992
      %v1369 = vunpack.c.l.b16 %v993
      %v1370 = vunpack.c.h.b16 %v993
      %v1371 = vunpack.c.l.b16 %v994
      %v1372 = vunpack.c.h.b16 %v994
      %v1373 = vunpack.c.l.b16 %v995
      %v1374 = vunpack.c.h.b16 %v995
      %v1375 = vunpack.c.l.b16 %v996
      %v1376 = vunpack.c.h.b16 %v996
      %v1377 = vunpack.c.l.b16 %v997
      %v1378 = vunpack.c.h.b16 %v997
      %v1379 = vunpack.c.l.b16 %v998
      %v1380 = vunpack.c.h.b16 %v998
      %v1381 = vunpack.c.l.b16 %v999
      %v1382 = vunpack.c.h.b16 %v999
      %v1383 = vunpack.c.l.b16 %v1000
      %v1384 = vunpack.c.h.b16 %v1000
      %v1385 = vunpack.c.l.b16 %v1001
      %v1386 = vunpack.c.h.b16 %v1001
      %v1387 = vunpack.c.l.b16 %v1002
      %v1388 = vunpack.c.h.b16 %v1002
      %v1389 = vunpack.c.l.b16 %v1003
      %v1390 = vunpack.c.h.b16 %v1003
      %v1391 = vunpack.c.l.b16 %v1004
      %v1392 = vunpack.c.h.b16 %v1004
      %v1393 = vunpack.c.l.b16 %v1005
      %v1394 = vunpack.c.h.b16 %v1005
      %v1395 = vunpack.c.l.b16 %v1006
      %v1396 = vunpack.c.h.b16 %v1006
      %v1397 = vunpack.c.l.b16 %v1007
      %v1398 = vunpack.c.h.b16 %v1007
      %v1399 = vunpack.c.l.b16 %v1008
      %v1400 = vunpack.c.h.b16 %v1008
      %v1401 = vunpack.c.l.b16 %v1009
      %v1402 = vunpack.c.h.b16 %v1009
      %v1403 = vunpack.c.l.b16 %v1010
      %v1404 = vunpack.c.h.b16 %v1010
      %v1405 = vpack.c.b16 %v1153, %v1149
      %v1406 = vpack.c.b16 %v1154, %v1150
      %v1407 = vpack.c.b16 %v1155, %v1151
      %v1408 = vpack.c.b16 %v1156, %v1152
      %v1409 = vpack.c.b16 %v1161, %v1157
      %v1410 = vpack.c.b16 %v1162, %v1158
      %v1411 = vpack.c.b16 %v1163, %v1159
      %v1412 = vpack.c.b16 %v1164, %v1160
      %v1413 = vpack.c.b16 %v1169, %v1165
      %v1414 = vpack.c.b16 %v1170, %v1166
      %v1415 = vpack.c.b16 %v1171, %v1167
      %v1416 = vpack.c.b16 %v1172, %v1168
      %v1417 = vpack.c.b16 %v1177, %v1173
      %v1418 = vpack.c.b16 %v1178, %v1174
      %v1419 = vpack.c.b16 %v1179, %v1175
      %v1420 = vpack.c.b16 %v1180, %v1176
      %v1421 = vpack.c.b16 %v1185, %v1181
      %v1422 = vpack.c.b16 %v1186, %v1182
      %v1423 = vpack.c.b16 %v1187, %v1183
      %v1424 = vpack.c.b16 %v1188, %v1184
      %v1425 = vpack.c.b16 %v1193, %v1189
      %v1426 = vpack.c.b16 %v1194, %v1190
      %v1427 = vpack.c.b16 %v1195, %v1191
      %v1428 = vpack.c.b16 %v1196, %v1192
      %v1429 = vpack.c.b16 %v1201, %v1197
      %v1430 = vpack.c.b16 %v1202, %v1198
      %v1431 = vpack.c.b16 %v1203, %v1199
      %v1432 = vpack.c.b16 %v1204, %v1200
      %v1433 = vpack.c.b16 %v1209, %v1205
      %v1434 = vpack.c.b16 %v1210, %v1206
      %v1435 = vpack.c.b16 %v1211, %v1207
      %v1436 = vpack.c.b16 %v1212, %v1208
      %v1437 = vpack.c.b16 %v1217, %v1213
      %v1438 = vpack.c.b16 %v1218, %v1214
      %v1439 = vpack.c.b16 %v1219, %v1215
      %v1440 = vpack.c.b16 %v1220, %v1216
      %v1441 = vpack.c.b16 %v1225, %v1221
      %v1442 = vpack.c.b16 %v1226, %v1222
      %v1443 = vpack.c.b16 %v1227, %v1223
      %v1444 = vpack.c.b16 %v1228, %v1224
      %v1445 = vpack.c.b16 %v1233, %v1229
      %v1446 = vpack.c.b16 %v1234, %v1230
      %v1447 = vpack.c.b16 %v1235, %v1231
      %v1448 = vpack.c.b16 %v1236, %v1232
      %v1449 = vpack.c.b16 %v1241, %v1237
      %v1450 = vpack.c.b16 %v1242, %v1238
      %v1451 = vpack.c.b16 %v1243, %v1239
      %v1452 = vpack.c.b16 %v1244, %v1240
      %v1453 = vpack.c.b16 %v1249, %v1245
      %v1454 = vpack.c.b16 %v1250, %v1246
      %v1455 = vpack.c.b16 %v1251, %v1247
      %v1456 = vpack.c.b16 %v1252, %v1248
      %v1457 = vpack.c.b16 %v1257, %v1253
      %v1458 = vpack.c.b16 %v1258, %v1254
      %v1459 = vpack.c.b16 %v1259, %v1255
      %v1460 = vpack.c.b16 %v1260, %v1256
      %v1461 = vpack.c.b16 %v1265, %v1261
      %v1462 = vpack.c.b16 %v1266, %v1262
      %v1463 = vpack.c.b16 %v1267, %v1263
      %v1464 = vpack.c.b16 %v1268, %v1264
      %v1465 = vpack.c.b16 %v1273, %v1269
      %v1466 = vpack.c.b16 %v1274, %v1270
      %v1467 = vpack.c.b16 %v1275, %v1271
      %v1468 = vpack.c.b16 %v1276, %v1272
      %v1469 = vpack.c.b16 %v1281, %v1277
      %v1470 = vpack.c.b16 %v1282, %v1278
      %v1471 = vpack.c.b16 %v1283, %v1279
      %v1472 = vpack.c.b16 %v1284, %v1280
      %v1473 = vpack.c.b16 %v1289, %v1285
      %v1474 = vpack.c.b16 %v1290, %v1286
      %v1475 = vpack.c.b16 %v1291, %v1287
      %v1476 = vpack.c.b16 %v1292, %v1288
      %v1477 = vpack.c.b16 %v1297, %v1293
      %v1478 = vpack.c.b16 %v1298, %v1294
      %v1479 = vpack.c.b16 %v1299, %v1295
      %v1480 = vpack.c.b16 %v1300, %v1296
      %v1481 = vpack.c.b16 %v1305, %v1301
      %v1482 = vpack.c.b16 %v1306, %v1302
      %v1483 = vpack.c.b16 %v1307, %v1303
      %v1484 = vpack.c.b16 %v1308, %v1304
      %v1485 = vpack.c.b16 %v1313, %v1309
      %v1486 = vpack.c.b16 %v1314, %v1310
      %v1487 = vpack.c.b16 %v1315, %v1311
      %v1488 = vpack.c.b16 %v1316, %v1312
      %v1489 = vpack.c.b16 %v1321, %v1317
      %v1490 = vpack.c.b16 %v1322, %v1318
      %v1491 = vpack.c.b16 %v1323, %v1319
      %v1492 = vpack.c.b16 %v1324, %v1320
      %v1493 = vpack.c.b16 %v1329, %v1325
      %v1494 = vpack.c.b16 %v1330, %v1326
      %v1495 = vpack.c.b16 %v1331, %v1327
      %v1496 = vpack.c.b16 %v1332, %v1328
      %v1497 = vpack.c.b16 %v1337, %v1333
      %v1498 = vpack.c.b16 %v1338, %v1334
      %v1499 = vpack.c.b16 %v1339, %v1335
      %v1500 = vpack.c.b16 %v1340, %v1336
      %v1501 = vpack.c.b16 %v1345, %v1341
      %v1502 = vpack.c.b16 %v1346, %v1342
      %v1503 = vpack.c.b16 %v1347, %v1343
      %v1504 = vpack.c.b16 %v1348, %v1344
      %v1505 = vpack.c.b16 %v1353, %v1349
      %v1506 = vpack.c.b16 %v1354, %v1350
      %v1507 = vpack.c.b16 %v1355, %v1351
      %v1508 = vpack.c.b16 %v1356, %v1352
      %v1509 = vpack.c.b16 %v1361, %v1357
      %v1510 = vpack.c.b16 %v1362, %v1358
      %v1511 = vpack.c.b16 %v1363, %v1359
      %v1512 = vpack.c.b16 %v1364, %v1360
      %v1513 = vpack.c.b16 %v1369, %v1365
      %v1514 = vpack.c.b16 %v1370, %v1366
      %v1515 = vpack.c.b16 %v1371, %v1367
      %v1516 = vpack.c.b16 %v1372, %v1368
      %v1517 = vpack.c.b16 %v1377, %v1373
      %v1518 = vpack.c.b16 %v1378, %v1374
      %v1519 = vpack.c.b16 %v1379, %v1375
      %v1520 = vpack.c.b16 %v1380, %v1376
      %v1521 = vpack.c.b16 %v1385, %v1381
      %v1522 = vpack.c.b16 %v1386, %v1382
      %v1523 = vpack.c.b16 %v1387, %v1383
      %v1524 = vpack.c.b16 %v1388, %v1384
      %v1525 = vpack.c.b16 %v1393, %v1389
      %v1526 = vpack.c.b16 %v1394, %v1390
      %v1527 = vpack.c.b16 %v1395, %v1391
      %v1528 = vpack.c.b16 %v1396, %v1392
      %v1529 = vpack.c.b16 %v1401, %v1397
      %v1530 = vpack.c.b16 %v1402, %v1398
      %v1531 = vpack.c.b16 %v1403, %v1399
      %v1532 = vpack.c.b16 %v1404, %v1400
      %1661 = vmatpush.bf16.msra.mxu0 %v1433
      %1662 = vmatpush.bf16.msra.mxu0 %v1429
      %1663 = vmatpush.bf16.msra.mxu0 %v1425
      %1664 = vmatpush.bf16.msra.mxu0 %v1421
      %1665 = vmatpush.bf16.msra.mxu0 %v1417
      %1666 = vmatpush.bf16.msra.mxu0 %v1413
      %1667 = vmatpush.bf16.msra.mxu0 %v1409
      %1668 = vmatpush.bf16.msra.mxu0 %v1405
      %1669 = vmatmul.bf16.gmra.mxu0 %v843
      %v1670 = vpop.f32.mrf.mxu0
      %v1671 = vadd.f32 %v1013, %v1670
      %v1672 = vpop.f32.mrf.mxu0
      %v1673 = vadd.f32 %v1013, %v1672
      %1674 = vmatmul.bf16.gmra.mxu0 %v847
      %v1675 = vpop.f32.mrf.mxu0
      %v1676 = vadd.f32 %v1013, %v1675
      %v1677 = vpop.f32.mrf.mxu0
      %v1678 = vadd.f32 %v1013, %v1677
      %1679 = vmatmul.bf16.gmra.mxu0 %v851
      %v1680 = vpop.f32.mrf.mxu0
      %v1681 = vadd.f32 %v1013, %v1680
      %v1682 = vpop.f32.mrf.mxu0
      %v1683 = vadd.f32 %v1013, %v1682
      %1684 = vmatmul.bf16.gmra.mxu0 %v855
      %v1685 = vpop.f32.mrf.mxu0
      %v1686 = vadd.f32 %v1013, %v1685
      %v1687 = vpop.f32.mrf.mxu0
      %v1688 = vadd.f32 %v1013, %v1687
      %1689 = vmatmul.bf16.gmra.mxu0 %v859
      %v1690 = vpop.f32.mrf.mxu0
      %v1691 = vadd.f32 %v1013, %v1690
      %v1692 = vpop.f32.mrf.mxu0
      %v1693 = vadd.f32 %v1013, %v1692
      %1694 = vmatmul.bf16.gmra.mxu0 %v863
      %v1695 = vpop.f32.mrf.mxu0
      %v1696 = vadd.f32 %v1013, %v1695
      %v1697 = vpop.f32.mrf.mxu0
      %v1698 = vadd.f32 %v1013, %v1697
      %1699 = vmatmul.bf16.gmra.mxu0 %v867
      %v1700 = vpop.f32.mrf.mxu0
      %v1701 = vadd.f32 %v1013, %v1700
      %v1702 = vpop.f32.mrf.mxu0
      %v1703 = vadd.f32 %v1013, %v1702
      %1704 = vmatmul.bf16.gmra.mxu0 %v871
      %v1705 = vpop.f32.mrf.mxu0
      %v1706 = vadd.f32 %v1013, %v1705
      %v1707 = vpop.f32.mrf.mxu0
      %v1708 = vadd.f32 %v1013, %v1707
      %1709 = vmatmul.bf16.gmra.mxu0 %v875
      %v1710 = vpop.f32.mrf.mxu0
      %v1711 = vadd.f32 %v1013, %v1710
      %v1712 = vpop.f32.mrf.mxu0
      %v1713 = vadd.f32 %v1013, %v1712
      %1714 = vmatmul.bf16.gmra.mxu0 %v879
      %v1715 = vpop.f32.mrf.mxu0
      %v1716 = vadd.f32 %v1013, %v1715
      %v1717 = vpop.f32.mrf.mxu0
      %v1718 = vadd.f32 %v1013, %v1717
      %1719 = vdwg.mxu0
      %1720 = vmatpush.bf16.msra.mxu0 %v1465
      %1721 = vmatpush.bf16.msra.mxu0 %v1461
      %1722 = vmatpush.bf16.msra.mxu0 %v1457
      %1723 = vmatpush.bf16.msra.mxu0 %v1453
      %1724 = vmatpush.bf16.msra.mxu0 %v1449
      %1725 = vmatpush.bf16.msra.mxu0 %v1445
      %1726 = vmatpush.bf16.msra.mxu0 %v1441
      %1727 = vmatpush.bf16.msra.mxu0 %v1437
      %1728 = vmatmul.bf16.gmra.mxu0 %v844
      %v1729 = vpop.f32.mrf.mxu0
      %v1730 = vadd.f32 %v1671, %v1729
      %v1731 = vpop.f32.mrf.mxu0
      %v1732 = vadd.f32 %v1673, %v1731
      %1733 = vmatmul.bf16.gmra.mxu0 %v848
      %v1734 = vpop.f32.mrf.mxu0
      %v1735 = vadd.f32 %v1676, %v1734
      %v1736 = vpop.f32.mrf.mxu0
      %v1737 = vadd.f32 %v1678, %v1736
      %1738 = vmatmul.bf16.gmra.mxu0 %v852
      %v1739 = vpop.f32.mrf.mxu0
      %v1740 = vadd.f32 %v1681, %v1739
      %v1741 = vpop.f32.mrf.mxu0
      %v1742 = vadd.f32 %v1683, %v1741
      %1743 = vmatmul.bf16.gmra.mxu0 %v856
      %v1744 = vpop.f32.mrf.mxu0
      %v1745 = vadd.f32 %v1686, %v1744
      %v1746 = vpop.f32.mrf.mxu0
      %v1747 = vadd.f32 %v1688, %v1746
      %1748 = vmatmul.bf16.gmra.mxu0 %v860
      %v1749 = vpop.f32.mrf.mxu0
      %v1750 = vadd.f32 %v1691, %v1749
      %v1751 = vpop.f32.mrf.mxu0
      %v1752 = vadd.f32 %v1693, %v1751
      %1753 = vmatmul.bf16.gmra.mxu0 %v864
      %v1754 = vpop.f32.mrf.mxu0
      %v1755 = vadd.f32 %v1696, %v1754
      %v1756 = vpop.f32.mrf.mxu0
      %v1757 = vadd.f32 %v1698, %v1756
      %1758 = vmatmul.bf16.gmra.mxu0 %v868
      %v1759 = vpop.f32.mrf.mxu0
      %v1760 = vadd.f32 %v1701, %v1759
      %v1761 = vpop.f32.mrf.mxu0
      %v1762 = vadd.f32 %v1703, %v1761
      %1763 = vmatmul.bf16.gmra.mxu0 %v872
      %v1764 = vpop.f32.mrf.mxu0
      %v1765 = vadd.f32 %v1706, %v1764
      %v1766 = vpop.f32.mrf.mxu0
      %v1767 = vadd.f32 %v1708, %v1766
      %1768 = vmatmul.bf16.gmra.mxu0 %v876
      %v1769 = vpop.f32.mrf.mxu0
      %v1770 = vadd.f32 %v1711, %v1769
      %v1771 = vpop.f32.mrf.mxu0
      %v1772 = vadd.f32 %v1713, %v1771
      %1773 = vmatmul.bf16.gmra.mxu0 %v880
      %v1774 = vpop.f32.mrf.mxu0
      %v1775 = vadd.f32 %v1716, %v1774
      %v1776 = vpop.f32.mrf.mxu0
      %v1777 = vadd.f32 %v1718, %v1776
      %1778 = vdwg.mxu0
      %1779 = vmatpush.bf16.msra.mxu0 %v1497
      %1780 = vmatpush.bf16.msra.mxu0 %v1493
      %1781 = vmatpush.bf16.msra.mxu0 %v1489
      %1782 = vmatpush.bf16.msra.mxu0 %v1485
      %1783 = vmatpush.bf16.msra.mxu0 %v1481
      %1784 = vmatpush.bf16.msra.mxu0 %v1477
      %1785 = vmatpush.bf16.msra.mxu0 %v1473
      %1786 = vmatpush.bf16.msra.mxu0 %v1469
      %1787 = vmatmul.bf16.gmra.mxu0 %v845
      %v1788 = vpop.f32.mrf.mxu0
      %v1789 = vadd.f32 %v1730, %v1788
      %v1790 = vpop.f32.mrf.mxu0
      %v1791 = vadd.f32 %v1732, %v1790
      %1792 = vmatmul.bf16.gmra.mxu0 %v849
      %v1793 = vpop.f32.mrf.mxu0
      %v1794 = vadd.f32 %v1735, %v1793
      %v1795 = vpop.f32.mrf.mxu0
      %v1796 = vadd.f32 %v1737, %v1795
      %1797 = vmatmul.bf16.gmra.mxu0 %v853
      %v1798 = vpop.f32.mrf.mxu0
      %v1799 = vadd.f32 %v1740, %v1798
      %v1800 = vpop.f32.mrf.mxu0
      %v1801 = vadd.f32 %v1742, %v1800
      %1802 = vmatmul.bf16.gmra.mxu0 %v857
      %v1803 = vpop.f32.mrf.mxu0
      %v1804 = vadd.f32 %v1745, %v1803
      %v1805 = vpop.f32.mrf.mxu0
      %v1806 = vadd.f32 %v1747, %v1805
      %1807 = vmatmul.bf16.gmra.mxu0 %v861
      %v1808 = vpop.f32.mrf.mxu0
      %v1809 = vadd.f32 %v1750, %v1808
      %v1810 = vpop.f32.mrf.mxu0
      %v1811 = vadd.f32 %v1752, %v1810
      %1812 = vmatmul.bf16.gmra.mxu0 %v865
      %v1813 = vpop.f32.mrf.mxu0
      %v1814 = vadd.f32 %v1755, %v1813
      %v1815 = vpop.f32.mrf.mxu0
      %v1816 = vadd.f32 %v1757, %v1815
      %1817 = vmatmul.bf16.gmra.mxu0 %v869
      %v1818 = vpop.f32.mrf.mxu0
      %v1819 = vadd.f32 %v1760, %v1818
      %v1820 = vpop.f32.mrf.mxu0
      %v1821 = vadd.f32 %v1762, %v1820
      %1822 = vmatmul.bf16.gmra.mxu0 %v873
      %v1823 = vpop.f32.mrf.mxu0
      %v1824 = vadd.f32 %v1765, %v1823
      %v1825 = vpop.f32.mrf.mxu0
      %v1826 = vadd.f32 %v1767, %v1825
      %1827 = vmatmul.bf16.gmra.mxu0 %v877
      %v1828 = vpop.f32.mrf.mxu0
      %v1829 = vadd.f32 %v1770, %v1828
      %v1830 = vpop.f32.mrf.mxu0
      %v1831 = vadd.f32 %v1772, %v1830
      %1832 = vmatmul.bf16.gmra.mxu0 %v881
      %v1833 = vpop.f32.mrf.mxu0
      %v1834 = vadd.f32 %v1775, %v1833
      %v1835 = vpop.f32.mrf.mxu0
      %v1836 = vadd.f32 %v1777, %v1835
      %1837 = vdwg.mxu0
      %1838 = vmatpush.bf16.msra.mxu0 %v1529
      %1839 = vmatpush.bf16.msra.mxu0 %v1525
      %1840 = vmatpush.bf16.msra.mxu0 %v1521
      %1841 = vmatpush.bf16.msra.mxu0 %v1517
      %1842 = vmatpush.bf16.msra.mxu0 %v1513
      %1843 = vmatpush.bf16.msra.mxu0 %v1509
      %1844 = vmatpush.bf16.msra.mxu0 %v1505
      %1845 = vmatpush.bf16.msra.mxu0 %v1501
      %1846 = vmatmul.bf16.gmra.mxu0 %v846
      %v1847 = vpop.f32.mrf.mxu0
      %v1848 = vadd.f32 %v1789, %v1847
      %v1849 = vpop.f32.mrf.mxu0
      %v1850 = vadd.f32 %v1791, %v1849
      %1851 = vmatmul.bf16.gmra.mxu0 %v850
      %v1852 = vpop.f32.mrf.mxu0
      %v1853 = vadd.f32 %v1794, %v1852
      %v1854 = vpop.f32.mrf.mxu0
      %v1855 = vadd.f32 %v1796, %v1854
      %1856 = vmatmul.bf16.gmra.mxu0 %v854
      %v1857 = vpop.f32.mrf.mxu0
      %v1858 = vadd.f32 %v1799, %v1857
      %v1859 = vpop.f32.mrf.mxu0
      %v1860 = vadd.f32 %v1801, %v1859
      %1861 = vmatmul.bf16.gmra.mxu0 %v858
      %v1862 = vpop.f32.mrf.mxu0
      %v1863 = vadd.f32 %v1804, %v1862
      %v1864 = vpop.f32.mrf.mxu0
      %v1865 = vadd.f32 %v1806, %v1864
      %1866 = vmatmul.bf16.gmra.mxu0 %v862
      %v1867 = vpop.f32.mrf.mxu0
      %v1868 = vadd.f32 %v1809, %v1867
      %v1869 = vpop.f32.mrf.mxu0
      %v1870 = vadd.f32 %v1811, %v1869
      %1871 = vmatmul.bf16.gmra.mxu0 %v866
      %v1872 = vpop.f32.mrf.mxu0
      %v1873 = vadd.f32 %v1814, %v1872
      %v1874 = vpop.f32.mrf.mxu0
      %v1875 = vadd.f32 %v1816, %v1874
      %1876 = vmatmul.bf16.gmra.mxu0 %v870
      %v1877 = vpop.f32.mrf.mxu0
      %v1878 = vadd.f32 %v1819, %v1877
      %v1879 = vpop.f32.mrf.mxu0
      %v1880 = vadd.f32 %v1821, %v1879
      %1881 = vmatmul.bf16.gmra.mxu0 %v874
      %v1882 = vpop.f32.mrf.mxu0
      %v1883 = vadd.f32 %v1824, %v1882
      %v1884 = vpop.f32.mrf.mxu0
      %v1885 = vadd.f32 %v1826, %v1884
      %1886 = vmatmul.bf16.gmra.mxu0 %v878
      %v1887 = vpop.f32.mrf.mxu0
      %v1888 = vadd.f32 %v1829, %v1887
      %v1889 = vpop.f32.mrf.mxu0
      %v1890 = vadd.f32 %v1831, %v1889
      %1891 = vmatmul.bf16.gmra.mxu0 %v882
      %v1892 = vpop.f32.mrf.mxu0
      %v1893 = vadd.f32 %v1834, %v1892
      %v1894 = vpop.f32.mrf.mxu0
      %v1895 = vadd.f32 %v1836, %v1894
      %1896 = vdwg.mxu0
      %1897 = vmatpush.bf16.msra.mxu0 %v1434
      %1898 = vmatpush.bf16.msra.mxu0 %v1430
      %1899 = vmatpush.bf16.msra.mxu0 %v1426
      %1900 = vmatpush.bf16.msra.mxu0 %v1422
      %1901 = vmatpush.bf16.msra.mxu0 %v1418
      %1902 = vmatpush.bf16.msra.mxu0 %v1414
      %1903 = vmatpush.bf16.msra.mxu0 %v1410
      %1904 = vmatpush.bf16.msra.mxu0 %v1406
      %1905 = vmatmul.bf16.gmra.mxu0 %v843
      %v1906 = vpop.f32.mrf.mxu0
      %v1907 = vadd.f32 %v1014, %v1906
      %v1908 = vpop.f32.mrf.mxu0
      %v1909 = vadd.f32 %v1014, %v1908
      %1910 = vmatmul.bf16.gmra.mxu0 %v847
      %v1911 = vpop.f32.mrf.mxu0
      %v1912 = vadd.f32 %v1014, %v1911
      %v1913 = vpop.f32.mrf.mxu0
      %v1914 = vadd.f32 %v1014, %v1913
      %1915 = vmatmul.bf16.gmra.mxu0 %v851
      %v1916 = vpop.f32.mrf.mxu0
      %v1917 = vadd.f32 %v1014, %v1916
      %v1918 = vpop.f32.mrf.mxu0
      %v1919 = vadd.f32 %v1014, %v1918
      %1920 = vmatmul.bf16.gmra.mxu0 %v855
      %v1921 = vpop.f32.mrf.mxu0
      %v1922 = vadd.f32 %v1014, %v1921
      %v1923 = vpop.f32.mrf.mxu0
      %v1924 = vadd.f32 %v1014, %v1923
      %1925 = vmatmul.bf16.gmra.mxu0 %v859
      %v1926 = vpop.f32.mrf.mxu0
      %v1927 = vadd.f32 %v1014, %v1926
      %v1928 = vpop.f32.mrf.mxu0
      %v1929 = vadd.f32 %v1014, %v1928
      %1930 = vmatmul.bf16.gmra.mxu0 %v863
      %v1931 = vpop.f32.mrf.mxu0
      %v1932 = vadd.f32 %v1014, %v1931
      %v1933 = vpop.f32.mrf.mxu0
      %v1934 = vadd.f32 %v1014, %v1933
      %1935 = vmatmul.bf16.gmra.mxu0 %v867
      %v1936 = vpop.f32.mrf.mxu0
      %v1937 = vadd.f32 %v1014, %v1936
      %v1938 = vpop.f32.mrf.mxu0
      %v1939 = vadd.f32 %v1014, %v1938
      %1940 = vmatmul.bf16.gmra.mxu0 %v871
      %v1941 = vpop.f32.mrf.mxu0
      %v1942 = vadd.f32 %v1014, %v1941
      %v1943 = vpop.f32.mrf.mxu0
      %v1944 = vadd.f32 %v1014, %v1943
      %1945 = vmatmul.bf16.gmra.mxu0 %v875
      %v1946 = vpop.f32.mrf.mxu0
      %v1947 = vadd.f32 %v1014, %v1946
      %v1948 = vpop.f32.mrf.mxu0
      %v1949 = vadd.f32 %v1014, %v1948
      %1950 = vmatmul.bf16.gmra.mxu0 %v879
      %v1951 = vpop.f32.mrf.mxu0
      %v1952 = vadd.f32 %v1014, %v1951
      %v1953 = vpop.f32.mrf.mxu0
      %v1954 = vadd.f32 %v1014, %v1953
      %1955 = vdwg.mxu0
      %1956 = vmatpush.bf16.msra.mxu0 %v1466
      %1957 = vmatpush.bf16.msra.mxu0 %v1462
      %1958 = vmatpush.bf16.msra.mxu0 %v1458
      %1959 = vmatpush.bf16.msra.mxu0 %v1454
      %1960 = vmatpush.bf16.msra.mxu0 %v1450
      %1961 = vmatpush.bf16.msra.mxu0 %v1446
      %1962 = vmatpush.bf16.msra.mxu0 %v1442
      %1963 = vmatpush.bf16.msra.mxu0 %v1438
      %1964 = vmatmul.bf16.gmra.mxu0 %v844
      %v1965 = vpop.f32.mrf.mxu0
      %v1966 = vadd.f32 %v1907, %v1965
      %v1967 = vpop.f32.mrf.mxu0
      %v1968 = vadd.f32 %v1909, %v1967
      %1969 = vmatmul.bf16.gmra.mxu0 %v848
      %v1970 = vpop.f32.mrf.mxu0
      %v1971 = vadd.f32 %v1912, %v1970
      %v1972 = vpop.f32.mrf.mxu0
      %v1973 = vadd.f32 %v1914, %v1972
      %1974 = vmatmul.bf16.gmra.mxu0 %v852
      %v1975 = vpop.f32.mrf.mxu0
      %v1976 = vadd.f32 %v1917, %v1975
      %v1977 = vpop.f32.mrf.mxu0
      %v1978 = vadd.f32 %v1919, %v1977
      %1979 = vmatmul.bf16.gmra.mxu0 %v856
      %v1980 = vpop.f32.mrf.mxu0
      %v1981 = vadd.f32 %v1922, %v1980
      %v1982 = vpop.f32.mrf.mxu0
      %v1983 = vadd.f32 %v1924, %v1982
      %1984 = vmatmul.bf16.gmra.mxu0 %v860
      %v1985 = vpop.f32.mrf.mxu0
      %v1986 = vadd.f32 %v1927, %v1985
      %v1987 = vpop.f32.mrf.mxu0
      %v1988 = vadd.f32 %v1929, %v1987
      %1989 = vmatmul.bf16.gmra.mxu0 %v864
      %v1990 = vpop.f32.mrf.mxu0
      %v1991 = vadd.f32 %v1932, %v1990
      %v1992 = vpop.f32.mrf.mxu0
      %v1993 = vadd.f32 %v1934, %v1992
      %1994 = vmatmul.bf16.gmra.mxu0 %v868
      %v1995 = vpop.f32.mrf.mxu0
      %v1996 = vadd.f32 %v1937, %v1995
      %v1997 = vpop.f32.mrf.mxu0
      %v1998 = vadd.f32 %v1939, %v1997
      %1999 = vmatmul.bf16.gmra.mxu0 %v872
      %v2000 = vpop.f32.mrf.mxu0
      %v2001 = vadd.f32 %v1942, %v2000
      %v2002 = vpop.f32.mrf.mxu0
      %v2003 = vadd.f32 %v1944, %v2002
      %2004 = vmatmul.bf16.gmra.mxu0 %v876
      %v2005 = vpop.f32.mrf.mxu0
      %v2006 = vadd.f32 %v1947, %v2005
      %v2007 = vpop.f32.mrf.mxu0
      %v2008 = vadd.f32 %v1949, %v2007
      %2009 = vmatmul.bf16.gmra.mxu0 %v880
      %v2010 = vpop.f32.mrf.mxu0
      %v2011 = vadd.f32 %v1952, %v2010
      %v2012 = vpop.f32.mrf.mxu0
      %v2013 = vadd.f32 %v1954, %v2012
      %2014 = vdwg.mxu0
      %2015 = vmatpush.bf16.msra.mxu0 %v1498
      %2016 = vmatpush.bf16.msra.mxu0 %v1494
      %2017 = vmatpush.bf16.msra.mxu0 %v1490
      %2018 = vmatpush.bf16.msra.mxu0 %v1486
      %2019 = vmatpush.bf16.msra.mxu0 %v1482
      %2020 = vmatpush.bf16.msra.mxu0 %v1478
      %2021 = vmatpush.bf16.msra.mxu0 %v1474
      %2022 = vmatpush.bf16.msra.mxu0 %v1470
      %2023 = vmatmul.bf16.gmra.mxu0 %v845
      %v2024 = vpop.f32.mrf.mxu0
      %v2025 = vadd.f32 %v1966, %v2024
      %v2026 = vpop.f32.mrf.mxu0
      %v2027 = vadd.f32 %v1968, %v2026
      %2028 = vmatmul.bf16.gmra.mxu0 %v849
      %v2029 = vpop.f32.mrf.mxu0
      %v2030 = vadd.f32 %v1971, %v2029
      %v2031 = vpop.f32.mrf.mxu0
      %v2032 = vadd.f32 %v1973, %v2031
      %2033 = vmatmul.bf16.gmra.mxu0 %v853
      %v2034 = vpop.f32.mrf.mxu0
      %v2035 = vadd.f32 %v1976, %v2034
      %v2036 = vpop.f32.mrf.mxu0
      %v2037 = vadd.f32 %v1978, %v2036
      %2038 = vmatmul.bf16.gmra.mxu0 %v857
      %v2039 = vpop.f32.mrf.mxu0
      %v2040 = vadd.f32 %v1981, %v2039
      %v2041 = vpop.f32.mrf.mxu0
      %v2042 = vadd.f32 %v1983, %v2041
      %2043 = vmatmul.bf16.gmra.mxu0 %v861
      %v2044 = vpop.f32.mrf.mxu0
      %v2045 = vadd.f32 %v1986, %v2044
      %v2046 = vpop.f32.mrf.mxu0
      %v2047 = vadd.f32 %v1988, %v2046
      %2048 = vmatmul.bf16.gmra.mxu0 %v865
      %v2049 = vpop.f32.mrf.mxu0
      %v2050 = vadd.f32 %v1991, %v2049
      %v2051 = vpop.f32.mrf.mxu0
      %v2052 = vadd.f32 %v1993, %v2051
      %2053 = vmatmul.bf16.gmra.mxu0 %v869
      %v2054 = vpop.f32.mrf.mxu0
      %v2055 = vadd.f32 %v1996, %v2054
      %v2056 = vpop.f32.mrf.mxu0
      %v2057 = vadd.f32 %v1998, %v2056
      %2058 = vmatmul.bf16.gmra.mxu0 %v873
      %v2059 = vpop.f32.mrf.mxu0
      %v2060 = vadd.f32 %v2001, %v2059
      %v2061 = vpop.f32.mrf.mxu0
      %v2062 = vadd.f32 %v2003, %v2061
      %2063 = vmatmul.bf16.gmra.mxu0 %v877
      %v2064 = vpop.f32.mrf.mxu0
      %v2065 = vadd.f32 %v2006, %v2064
      %v2066 = vpop.f32.mrf.mxu0
      %v2067 = vadd.f32 %v2008, %v2066
      %2068 = vmatmul.bf16.gmra.mxu0 %v881
      %v2069 = vpop.f32.mrf.mxu0
      %v2070 = vadd.f32 %v2011, %v2069
      %v2071 = vpop.f32.mrf.mxu0
      %v2072 = vadd.f32 %v2013, %v2071
      %2073 = vdwg.mxu0
      %2074 = vmatpush.bf16.msra.mxu0 %v1530
      %2075 = vmatpush.bf16.msra.mxu0 %v1526
      %2076 = vmatpush.bf16.msra.mxu0 %v1522
      %2077 = vmatpush.bf16.msra.mxu0 %v1518
      %2078 = vmatpush.bf16.msra.mxu0 %v1514
      %2079 = vmatpush.bf16.msra.mxu0 %v1510
      %2080 = vmatpush.bf16.msra.mxu0 %v1506
      %2081 = vmatpush.bf16.msra.mxu0 %v1502
      %2082 = vmatmul.bf16.gmra.mxu0 %v846
      %v2083 = vpop.f32.mrf.mxu0
      %v2084 = vadd.f32 %v2025, %v2083
      %v2085 = vpop.f32.mrf.mxu0
      %v2086 = vadd.f32 %v2027, %v2085
      %2087 = vmatmul.bf16.gmra.mxu0 %v850
      %v2088 = vpop.f32.mrf.mxu0
      %v2089 = vadd.f32 %v2030, %v2088
      %v2090 = vpop.f32.mrf.mxu0
      %v2091 = vadd.f32 %v2032, %v2090
      %2092 = vmatmul.bf16.gmra.mxu0 %v854
      %v2093 = vpop.f32.mrf.mxu0
      %v2094 = vadd.f32 %v2035, %v2093
      %v2095 = vpop.f32.mrf.mxu0
      %v2096 = vadd.f32 %v2037, %v2095
      %2097 = vmatmul.bf16.gmra.mxu0 %v858
      %v2098 = vpop.f32.mrf.mxu0
      %v2099 = vadd.f32 %v2040, %v2098
      %v2100 = vpop.f32.mrf.mxu0
      %v2101 = vadd.f32 %v2042, %v2100
      %2102 = vmatmul.bf16.gmra.mxu0 %v862
      %v2103 = vpop.f32.mrf.mxu0
      %v2104 = vadd.f32 %v2045, %v2103
      %v2105 = vpop.f32.mrf.mxu0
      %v2106 = vadd.f32 %v2047, %v2105
      %2107 = vmatmul.bf16.gmra.mxu0 %v866
      %v2108 = vpop.f32.mrf.mxu0
      %v2109 = vadd.f32 %v2050, %v2108
      %v2110 = vpop.f32.mrf.mxu0
      %v2111 = vadd.f32 %v2052, %v2110
      %2112 = vmatmul.bf16.gmra.mxu0 %v870
      %v2113 = vpop.f32.mrf.mxu0
      %v2114 = vadd.f32 %v2055, %v2113
      %v2115 = vpop.f32.mrf.mxu0
      %v2116 = vadd.f32 %v2057, %v2115
      %2117 = vmatmul.bf16.gmra.mxu0 %v874
      %v2118 = vpop.f32.mrf.mxu0
      %v2119 = vadd.f32 %v2060, %v2118
      %v2120 = vpop.f32.mrf.mxu0
      %v2121 = vadd.f32 %v2062, %v2120
      %2122 = vmatmul.bf16.gmra.mxu0 %v878
      %v2123 = vpop.f32.mrf.mxu0
      %v2124 = vadd.f32 %v2065, %v2123
      %v2125 = vpop.f32.mrf.mxu0
      %v2126 = vadd.f32 %v2067, %v2125
      %2127 = vmatmul.bf16.gmra.mxu0 %v882
      %v2128 = vpop.f32.mrf.mxu0
      %v2129 = vadd.f32 %v2070, %v2128
      %v2130 = vpop.f32.mrf.mxu0
      %v2131 = vadd.f32 %v2072, %v2130
      %2132 = vdwg.mxu0
      %2133 = vmatpush.bf16.msra.mxu0 %v1435
      %2134 = vmatpush.bf16.msra.mxu0 %v1431
      %2135 = vmatpush.bf16.msra.mxu0 %v1427
      %2136 = vmatpush.bf16.msra.mxu0 %v1423
      %2137 = vmatpush.bf16.msra.mxu0 %v1419
      %2138 = vmatpush.bf16.msra.mxu0 %v1415
      %2139 = vmatpush.bf16.msra.mxu0 %v1411
      %2140 = vmatpush.bf16.msra.mxu0 %v1407
      %2141 = vmatmul.bf16.gmra.mxu0 %v843
      %v2142 = vpop.f32.mrf.mxu0
      %v2143 = vadd.f32 %v1015, %v2142
      %v2144 = vpop.f32.mrf.mxu0
      %v2145 = vadd.f32 %v1015, %v2144
      %2146 = vmatmul.bf16.gmra.mxu0 %v847
      %v2147 = vpop.f32.mrf.mxu0
      %v2148 = vadd.f32 %v1015, %v2147
      %v2149 = vpop.f32.mrf.mxu0
      %v2150 = vadd.f32 %v1015, %v2149
      %2151 = vmatmul.bf16.gmra.mxu0 %v851
      %v2152 = vpop.f32.mrf.mxu0
      %v2153 = vadd.f32 %v1015, %v2152
      %v2154 = vpop.f32.mrf.mxu0
      %v2155 = vadd.f32 %v1015, %v2154
      %2156 = vmatmul.bf16.gmra.mxu0 %v855
      %v2157 = vpop.f32.mrf.mxu0
      %v2158 = vadd.f32 %v1015, %v2157
      %v2159 = vpop.f32.mrf.mxu0
      %v2160 = vadd.f32 %v1015, %v2159
      %2161 = vmatmul.bf16.gmra.mxu0 %v859
      %v2162 = vpop.f32.mrf.mxu0
      %v2163 = vadd.f32 %v1015, %v2162
      %v2164 = vpop.f32.mrf.mxu0
      %v2165 = vadd.f32 %v1015, %v2164
      %2166 = vmatmul.bf16.gmra.mxu0 %v863
      %v2167 = vpop.f32.mrf.mxu0
      %v2168 = vadd.f32 %v1015, %v2167
      %v2169 = vpop.f32.mrf.mxu0
      %v2170 = vadd.f32 %v1015, %v2169
      %2171 = vmatmul.bf16.gmra.mxu0 %v867
      %v2172 = vpop.f32.mrf.mxu0
      %v2173 = vadd.f32 %v1015, %v2172
      %v2174 = vpop.f32.mrf.mxu0
      %v2175 = vadd.f32 %v1015, %v2174
      %2176 = vmatmul.bf16.gmra.mxu0 %v871
      %v2177 = vpop.f32.mrf.mxu0
      %v2178 = vadd.f32 %v1015, %v2177
      %v2179 = vpop.f32.mrf.mxu0
      %v2180 = vadd.f32 %v1015, %v2179
      %2181 = vmatmul.bf16.gmra.mxu0 %v875
      %v2182 = vpop.f32.mrf.mxu0
      %v2183 = vadd.f32 %v1015, %v2182
      %v2184 = vpop.f32.mrf.mxu0
      %v2185 = vadd.f32 %v1015, %v2184
      %2186 = vmatmul.bf16.gmra.mxu0 %v879
      %v2187 = vpop.f32.mrf.mxu0
      %v2188 = vadd.f32 %v1015, %v2187
      %v2189 = vpop.f32.mrf.mxu0
      %v2190 = vadd.f32 %v1015, %v2189
      %2191 = vdwg.mxu0
      %2192 = vmatpush.bf16.msra.mxu0 %v1467
      %2193 = vmatpush.bf16.msra.mxu0 %v1463
      %2194 = vmatpush.bf16.msra.mxu0 %v1459
      %2195 = vmatpush.bf16.msra.mxu0 %v1455
      %2196 = vmatpush.bf16.msra.mxu0 %v1451
      %2197 = vmatpush.bf16.msra.mxu0 %v1447
      %2198 = vmatpush.bf16.msra.mxu0 %v1443
      %2199 = vmatpush.bf16.msra.mxu0 %v1439
      %2200 = vmatmul.bf16.gmra.mxu0 %v844
      %v2201 = vpop.f32.mrf.mxu0
      %v2202 = vadd.f32 %v2143, %v2201
      %v2203 = vpop.f32.mrf.mxu0
      %v2204 = vadd.f32 %v2145, %v2203
      %2205 = vmatmul.bf16.gmra.mxu0 %v848
      %v2206 = vpop.f32.mrf.mxu0
      %v2207 = vadd.f32 %v2148, %v2206
      %v2208 = vpop.f32.mrf.mxu0
      %v2209 = vadd.f32 %v2150, %v2208
      %2210 = vmatmul.bf16.gmra.mxu0 %v852
      %v2211 = vpop.f32.mrf.mxu0
      %v2212 = vadd.f32 %v2153, %v2211
      %v2213 = vpop.f32.mrf.mxu0
      %v2214 = vadd.f32 %v2155, %v2213
      %2215 = vmatmul.bf16.gmra.mxu0 %v856
      %v2216 = vpop.f32.mrf.mxu0
      %v2217 = vadd.f32 %v2158, %v2216
      %v2218 = vpop.f32.mrf.mxu0
      %v2219 = vadd.f32 %v2160, %v2218
      %2220 = vmatmul.bf16.gmra.mxu0 %v860
      %v2221 = vpop.f32.mrf.mxu0
      %v2222 = vadd.f32 %v2163, %v2221
      %v2223 = vpop.f32.mrf.mxu0
      %v2224 = vadd.f32 %v2165, %v2223
      %2225 = vmatmul.bf16.gmra.mxu0 %v864
      %v2226 = vpop.f32.mrf.mxu0
      %v2227 = vadd.f32 %v2168, %v2226
      %v2228 = vpop.f32.mrf.mxu0
      %v2229 = vadd.f32 %v2170, %v2228
      %2230 = vmatmul.bf16.gmra.mxu0 %v868
      %v2231 = vpop.f32.mrf.mxu0
      %v2232 = vadd.f32 %v2173, %v2231
      %v2233 = vpop.f32.mrf.mxu0
      %v2234 = vadd.f32 %v2175, %v2233
      %2235 = vmatmul.bf16.gmra.mxu0 %v872
      %v2236 = vpop.f32.mrf.mxu0
      %v2237 = vadd.f32 %v2178, %v2236
      %v2238 = vpop.f32.mrf.mxu0
      %v2239 = vadd.f32 %v2180, %v2238
      %2240 = vmatmul.bf16.gmra.mxu0 %v876
      %v2241 = vpop.f32.mrf.mxu0
      %v2242 = vadd.f32 %v2183, %v2241
      %v2243 = vpop.f32.mrf.mxu0
      %v2244 = vadd.f32 %v2185, %v2243
      %2245 = vmatmul.bf16.gmra.mxu0 %v880
      %v2246 = vpop.f32.mrf.mxu0
      %v2247 = vadd.f32 %v2188, %v2246
      %v2248 = vpop.f32.mrf.mxu0
      %v2249 = vadd.f32 %v2190, %v2248
      %2250 = vdwg.mxu0
      %2251 = vmatpush.bf16.msra.mxu0 %v1499
      %2252 = vmatpush.bf16.msra.mxu0 %v1495
      %2253 = vmatpush.bf16.msra.mxu0 %v1491
      %2254 = vmatpush.bf16.msra.mxu0 %v1487
      %2255 = vmatpush.bf16.msra.mxu0 %v1483
      %2256 = vmatpush.bf16.msra.mxu0 %v1479
      %2257 = vmatpush.bf16.msra.mxu0 %v1475
      %2258 = vmatpush.bf16.msra.mxu0 %v1471
      %2259 = vmatmul.bf16.gmra.mxu0 %v845
      %v2260 = vpop.f32.mrf.mxu0
      %v2261 = vadd.f32 %v2202, %v2260
      %v2262 = vpop.f32.mrf.mxu0
      %v2263 = vadd.f32 %v2204, %v2262
      %2264 = vmatmul.bf16.gmra.mxu0 %v849
      %v2265 = vpop.f32.mrf.mxu0
      %v2266 = vadd.f32 %v2207, %v2265
      %v2267 = vpop.f32.mrf.mxu0
      %v2268 = vadd.f32 %v2209, %v2267
      %2269 = vmatmul.bf16.gmra.mxu0 %v853
      %v2270 = vpop.f32.mrf.mxu0
      %v2271 = vadd.f32 %v2212, %v2270
      %v2272 = vpop.f32.mrf.mxu0
      %v2273 = vadd.f32 %v2214, %v2272
      %2274 = vmatmul.bf16.gmra.mxu0 %v857
      %v2275 = vpop.f32.mrf.mxu0
      %v2276 = vadd.f32 %v2217, %v2275
      %v2277 = vpop.f32.mrf.mxu0
      %v2278 = vadd.f32 %v2219, %v2277
      %2279 = vmatmul.bf16.gmra.mxu0 %v861
      %v2280 = vpop.f32.mrf.mxu0
      %v2281 = vadd.f32 %v2222, %v2280
      %v2282 = vpop.f32.mrf.mxu0
      %v2283 = vadd.f32 %v2224, %v2282
      %2284 = vmatmul.bf16.gmra.mxu0 %v865
      %v2285 = vpop.f32.mrf.mxu0
      %v2286 = vadd.f32 %v2227, %v2285
      %v2287 = vpop.f32.mrf.mxu0
      %v2288 = vadd.f32 %v2229, %v2287
      %2289 = vmatmul.bf16.gmra.mxu0 %v869
      %v2290 = vpop.f32.mrf.mxu0
      %v2291 = vadd.f32 %v2232, %v2290
      %v2292 = vpop.f32.mrf.mxu0
      %v2293 = vadd.f32 %v2234, %v2292
      %2294 = vmatmul.bf16.gmra.mxu0 %v873
      %v2295 = vpop.f32.mrf.mxu0
      %v2296 = vadd.f32 %v2237, %v2295
      %v2297 = vpop.f32.mrf.mxu0
      %v2298 = vadd.f32 %v2239, %v2297
      %2299 = vmatmul.bf16.gmra.mxu0 %v877
      %v2300 = vpop.f32.mrf.mxu0
      %v2301 = vadd.f32 %v2242, %v2300
      %v2302 = vpop.f32.mrf.mxu0
      %v2303 = vadd.f32 %v2244, %v2302
      %2304 = vmatmul.bf16.gmra.mxu0 %v881
      %v2305 = vpop.f32.mrf.mxu0
      %v2306 = vadd.f32 %v2247, %v2305
      %v2307 = vpop.f32.mrf.mxu0
      %v2308 = vadd.f32 %v2249, %v2307
      %2309 = vdwg.mxu0
      %2310 = vmatpush.bf16.msra.mxu0 %v1531
      %2311 = vmatpush.bf16.msra.mxu0 %v1527
      %2312 = vmatpush.bf16.msra.mxu0 %v1523
      %2313 = vmatpush.bf16.msra.mxu0 %v1519
      %2314 = vmatpush.bf16.msra.mxu0 %v1515
      %2315 = vmatpush.bf16.msra.mxu0 %v1511
      %2316 = vmatpush.bf16.msra.mxu0 %v1507
      %2317 = vmatpush.bf16.msra.mxu0 %v1503
      %2318 = vmatmul.bf16.gmra.mxu0 %v846
      %v2319 = vpop.f32.mrf.mxu0
      %v2320 = vadd.f32 %v2261, %v2319
      %v2321 = vpop.f32.mrf.mxu0
      %v2322 = vadd.f32 %v2263, %v2321
      %2323 = vmatmul.bf16.gmra.mxu0 %v850
      %v2324 = vpop.f32.mrf.mxu0
      %v2325 = vadd.f32 %v2266, %v2324
      %v2326 = vpop.f32.mrf.mxu0
      %v2327 = vadd.f32 %v2268, %v2326
      %2328 = vmatmul.bf16.gmra.mxu0 %v854
      %v2329 = vpop.f32.mrf.mxu0
      %v2330 = vadd.f32 %v2271, %v2329
      %v2331 = vpop.f32.mrf.mxu0
      %v2332 = vadd.f32 %v2273, %v2331
      %2333 = vmatmul.bf16.gmra.mxu0 %v858
      %v2334 = vpop.f32.mrf.mxu0
      %v2335 = vadd.f32 %v2276, %v2334
      %v2336 = vpop.f32.mrf.mxu0
      %v2337 = vadd.f32 %v2278, %v2336
      %2338 = vmatmul.bf16.gmra.mxu0 %v862
      %v2339 = vpop.f32.mrf.mxu0
      %v2340 = vadd.f32 %v2281, %v2339
      %v2341 = vpop.f32.mrf.mxu0
      %v2342 = vadd.f32 %v2283, %v2341
      %2343 = vmatmul.bf16.gmra.mxu0 %v866
      %v2344 = vpop.f32.mrf.mxu0
      %v2345 = vadd.f32 %v2286, %v2344
      %v2346 = vpop.f32.mrf.mxu0
      %v2347 = vadd.f32 %v2288, %v2346
      %2348 = vmatmul.bf16.gmra.mxu0 %v870
      %v2349 = vpop.f32.mrf.mxu0
      %v2350 = vadd.f32 %v2291, %v2349
      %v2351 = vpop.f32.mrf.mxu0
      %v2352 = vadd.f32 %v2293, %v2351
      %2353 = vmatmul.bf16.gmra.mxu0 %v874
      %v2354 = vpop.f32.mrf.mxu0
      %v2355 = vadd.f32 %v2296, %v2354
      %v2356 = vpop.f32.mrf.mxu0
      %v2357 = vadd.f32 %v2298, %v2356
      %2358 = vmatmul.bf16.gmra.mxu0 %v878
      %v2359 = vpop.f32.mrf.mxu0
      %v2360 = vadd.f32 %v2301, %v2359
      %v2361 = vpop.f32.mrf.mxu0
      %v2362 = vadd.f32 %v2303, %v2361
      %2363 = vmatmul.bf16.gmra.mxu0 %v882
      %v2364 = vpop.f32.mrf.mxu0
      %v2365 = vadd.f32 %v2306, %v2364
      %v2366 = vpop.f32.mrf.mxu0
      %v2367 = vadd.f32 %v2308, %v2366
      %2368 = vdwg.mxu0
      %2369 = vmatpush.bf16.msra.mxu0 %v1436
      %2370 = vmatpush.bf16.msra.mxu0 %v1432
      %2371 = vmatpush.bf16.msra.mxu0 %v1428
      %2372 = vmatpush.bf16.msra.mxu0 %v1424
      %2373 = vmatpush.bf16.msra.mxu0 %v1420
      %2374 = vmatpush.bf16.msra.mxu0 %v1416
      %2375 = vmatpush.bf16.msra.mxu0 %v1412
      %2376 = vmatpush.bf16.msra.mxu0 %v1408
      %2377 = vmatmul.bf16.gmra.mxu0 %v843
      %v2378 = vpop.f32.mrf.mxu0
      %v2379 = vadd.f32 %v1016, %v2378
      %v2380 = vpop.f32.mrf.mxu0
      %v2381 = vadd.f32 %v1016, %v2380
      %2382 = vmatmul.bf16.gmra.mxu0 %v847
      %v2383 = vpop.f32.mrf.mxu0
      %v2384 = vadd.f32 %v1016, %v2383
      %v2385 = vpop.f32.mrf.mxu0
      %v2386 = vadd.f32 %v1016, %v2385
      %2387 = vmatmul.bf16.gmra.mxu0 %v851
      %v2388 = vpop.f32.mrf.mxu0
      %v2389 = vadd.f32 %v1016, %v2388
      %v2390 = vpop.f32.mrf.mxu0
      %v2391 = vadd.f32 %v1016, %v2390
      %2392 = vmatmul.bf16.gmra.mxu0 %v855
      %v2393 = vpop.f32.mrf.mxu0
      %v2394 = vadd.f32 %v1016, %v2393
      %v2395 = vpop.f32.mrf.mxu0
      %v2396 = vadd.f32 %v1016, %v2395
      %2397 = vmatmul.bf16.gmra.mxu0 %v859
      %v2398 = vpop.f32.mrf.mxu0
      %v2399 = vadd.f32 %v1016, %v2398
      %v2400 = vpop.f32.mrf.mxu0
      %v2401 = vadd.f32 %v1016, %v2400
      %2402 = vmatmul.bf16.gmra.mxu0 %v863
      %v2403 = vpop.f32.mrf.mxu0
      %v2404 = vadd.f32 %v1016, %v2403
      %v2405 = vpop.f32.mrf.mxu0
      %v2406 = vadd.f32 %v1016, %v2405
      %2407 = vmatmul.bf16.gmra.mxu0 %v867
      %v2408 = vpop.f32.mrf.mxu0
      %v2409 = vadd.f32 %v1016, %v2408
      %v2410 = vpop.f32.mrf.mxu0
      %v2411 = vadd.f32 %v1016, %v2410
      %2412 = vmatmul.bf16.gmra.mxu0 %v871
      %v2413 = vpop.f32.mrf.mxu0
      %v2414 = vadd.f32 %v1016, %v2413
      %v2415 = vpop.f32.mrf.mxu0
      %v2416 = vadd.f32 %v1016, %v2415
      %2417 = vmatmul.bf16.gmra.mxu0 %v875
      %v2418 = vpop.f32.mrf.mxu0
      %v2419 = vadd.f32 %v1016, %v2418
      %v2420 = vpop.f32.mrf.mxu0
      %v2421 = vadd.f32 %v1016, %v2420
      %2422 = vmatmul.bf16.gmra.mxu0 %v879
      %v2423 = vpop.f32.mrf.mxu0
      %v2424 = vadd.f32 %v1016, %v2423
      %v2425 = vpop.f32.mrf.mxu0
      %v2426 = vadd.f32 %v1016, %v2425
      %2427 = vdwg.mxu0
      %2428 = vmatpush.bf16.msra.mxu0 %v1468
      %2429 = vmatpush.bf16.msra.mxu0 %v1464
      %2430 = vmatpush.bf16.msra.mxu0 %v1460
      %2431 = vmatpush.bf16.msra.mxu0 %v1456
      %2432 = vmatpush.bf16.msra.mxu0 %v1452
      %2433 = vmatpush.bf16.msra.mxu0 %v1448
      %2434 = vmatpush.bf16.msra.mxu0 %v1444
      %2435 = vmatpush.bf16.msra.mxu0 %v1440
      %2436 = vmatmul.bf16.gmra.mxu0 %v844
      %v2437 = vpop.f32.mrf.mxu0
      %v2438 = vadd.f32 %v2379, %v2437
      %v2439 = vpop.f32.mrf.mxu0
      %v2440 = vadd.f32 %v2381, %v2439
      %2441 = vmatmul.bf16.gmra.mxu0 %v848
      %v2442 = vpop.f32.mrf.mxu0
      %v2443 = vadd.f32 %v2384, %v2442
      %v2444 = vpop.f32.mrf.mxu0
      %v2445 = vadd.f32 %v2386, %v2444
      %2446 = vmatmul.bf16.gmra.mxu0 %v852
      %v2447 = vpop.f32.mrf.mxu0
      %v2448 = vadd.f32 %v2389, %v2447
      %v2449 = vpop.f32.mrf.mxu0
      %v2450 = vadd.f32 %v2391, %v2449
      %2451 = vmatmul.bf16.gmra.mxu0 %v856
      %v2452 = vpop.f32.mrf.mxu0
      %v2453 = vadd.f32 %v2394, %v2452
      %v2454 = vpop.f32.mrf.mxu0
      %v2455 = vadd.f32 %v2396, %v2454
      %2456 = vmatmul.bf16.gmra.mxu0 %v860
      %v2457 = vpop.f32.mrf.mxu0
      %v2458 = vadd.f32 %v2399, %v2457
      %v2459 = vpop.f32.mrf.mxu0
      %v2460 = vadd.f32 %v2401, %v2459
      %2461 = vmatmul.bf16.gmra.mxu0 %v864
      %v2462 = vpop.f32.mrf.mxu0
      %v2463 = vadd.f32 %v2404, %v2462
      %v2464 = vpop.f32.mrf.mxu0
      %v2465 = vadd.f32 %v2406, %v2464
      %2466 = vmatmul.bf16.gmra.mxu0 %v868
      %v2467 = vpop.f32.mrf.mxu0
      %v2468 = vadd.f32 %v2409, %v2467
      %v2469 = vpop.f32.mrf.mxu0
      %v2470 = vadd.f32 %v2411, %v2469
      %2471 = vmatmul.bf16.gmra.mxu0 %v872
      %v2472 = vpop.f32.mrf.mxu0
      %v2473 = vadd.f32 %v2414, %v2472
      %v2474 = vpop.f32.mrf.mxu0
      %v2475 = vadd.f32 %v2416, %v2474
      %2476 = vmatmul.bf16.gmra.mxu0 %v876
      %v2477 = vpop.f32.mrf.mxu0
      %v2478 = vadd.f32 %v2419, %v2477
      %v2479 = vpop.f32.mrf.mxu0
      %v2480 = vadd.f32 %v2421, %v2479
      %2481 = vmatmul.bf16.gmra.mxu0 %v880
      %v2482 = vpop.f32.mrf.mxu0
      %v2483 = vadd.f32 %v2424, %v2482
      %v2484 = vpop.f32.mrf.mxu0
      %v2485 = vadd.f32 %v2426, %v2484
      %2486 = vdwg.mxu0
      %2487 = vmatpush.bf16.msra.mxu0 %v1500
      %2488 = vmatpush.bf16.msra.mxu0 %v1496
      %2489 = vmatpush.bf16.msra.mxu0 %v1492
      %2490 = vmatpush.bf16.msra.mxu0 %v1488
      %2491 = vmatpush.bf16.msra.mxu0 %v1484
      %2492 = vmatpush.bf16.msra.mxu0 %v1480
      %2493 = vmatpush.bf16.msra.mxu0 %v1476
      %2494 = vmatpush.bf16.msra.mxu0 %v1472
      %2495 = vmatmul.bf16.gmra.mxu0 %v845
      %v2496 = vpop.f32.mrf.mxu0
      %v2497 = vadd.f32 %v2438, %v2496
      %v2498 = vpop.f32.mrf.mxu0
      %v2499 = vadd.f32 %v2440, %v2498
      %2500 = vmatmul.bf16.gmra.mxu0 %v849
      %v2501 = vpop.f32.mrf.mxu0
      %v2502 = vadd.f32 %v2443, %v2501
      %v2503 = vpop.f32.mrf.mxu0
      %v2504 = vadd.f32 %v2445, %v2503
      %2505 = vmatmul.bf16.gmra.mxu0 %v853
      %v2506 = vpop.f32.mrf.mxu0
      %v2507 = vadd.f32 %v2448, %v2506
      %v2508 = vpop.f32.mrf.mxu0
      %v2509 = vadd.f32 %v2450, %v2508
      %2510 = vmatmul.bf16.gmra.mxu0 %v857
      %v2511 = vpop.f32.mrf.mxu0
      %v2512 = vadd.f32 %v2453, %v2511
      %v2513 = vpop.f32.mrf.mxu0
      %v2514 = vadd.f32 %v2455, %v2513
      %2515 = vmatmul.bf16.gmra.mxu0 %v861
      %v2516 = vpop.f32.mrf.mxu0
      %v2517 = vadd.f32 %v2458, %v2516
      %v2518 = vpop.f32.mrf.mxu0
      %v2519 = vadd.f32 %v2460, %v2518
      %2520 = vmatmul.bf16.gmra.mxu0 %v865
      %v2521 = vpop.f32.mrf.mxu0
      %v2522 = vadd.f32 %v2463, %v2521
      %v2523 = vpop.f32.mrf.mxu0
      %v2524 = vadd.f32 %v2465, %v2523
      %2525 = vmatmul.bf16.gmra.mxu0 %v869
      %v2526 = vpop.f32.mrf.mxu0
      %v2527 = vadd.f32 %v2468, %v2526
      %v2528 = vpop.f32.mrf.mxu0
      %v2529 = vadd.f32 %v2470, %v2528
      %2530 = vmatmul.bf16.gmra.mxu0 %v873
      %v2531 = vpop.f32.mrf.mxu0
      %v2532 = vadd.f32 %v2473, %v2531
      %v2533 = vpop.f32.mrf.mxu0
      %v2534 = vadd.f32 %v2475, %v2533
      %2535 = vmatmul.bf16.gmra.mxu0 %v877
      %v2536 = vpop.f32.mrf.mxu0
      %v2537 = vadd.f32 %v2478, %v2536
      %v2538 = vpop.f32.mrf.mxu0
      %v2539 = vadd.f32 %v2480, %v2538
      %2540 = vmatmul.bf16.gmra.mxu0 %v881
      %v2541 = vpop.f32.mrf.mxu0
      %v2542 = vadd.f32 %v2483, %v2541
      %v2543 = vpop.f32.mrf.mxu0
      %v2544 = vadd.f32 %v2485, %v2543
      %2545 = vdwg.mxu0
      %2546 = vmatpush.bf16.msra.mxu0 %v1532
      %2547 = vmatpush.bf16.msra.mxu0 %v1528
      %2548 = vmatpush.bf16.msra.mxu0 %v1524
      %2549 = vmatpush.bf16.msra.mxu0 %v1520
      %2550 = vmatpush.bf16.msra.mxu0 %v1516
      %2551 = vmatpush.bf16.msra.mxu0 %v1512
      %2552 = vmatpush.bf16.msra.mxu0 %v1508
      %2553 = vmatpush.bf16.msra.mxu0 %v1504
      %2554 = vmatmul.bf16.gmra.mxu0 %v846
      %v2555 = vpop.f32.mrf.mxu0
      %v2556 = vadd.f32 %v2497, %v2555
      %v2557 = vpop.f32.mrf.mxu0
      %v2558 = vadd.f32 %v2499, %v2557
      %2559 = vmatmul.bf16.gmra.mxu0 %v850
      %v2560 = vpop.f32.mrf.mxu0
      %v2561 = vadd.f32 %v2502, %v2560
      %v2562 = vpop.f32.mrf.mxu0
      %v2563 = vadd.f32 %v2504, %v2562
      %2564 = vmatmul.bf16.gmra.mxu0 %v854
      %v2565 = vpop.f32.mrf.mxu0
      %v2566 = vadd.f32 %v2507, %v2565
      %v2567 = vpop.f32.mrf.mxu0
      %v2568 = vadd.f32 %v2509, %v2567
      %2569 = vmatmul.bf16.gmra.mxu0 %v858
      %v2570 = vpop.f32.mrf.mxu0
      %v2571 = vadd.f32 %v2512, %v2570
      %v2572 = vpop.f32.mrf.mxu0
      %v2573 = vadd.f32 %v2514, %v2572
      %2574 = vmatmul.bf16.gmra.mxu0 %v862
      %v2575 = vpop.f32.mrf.mxu0
      %v2576 = vadd.f32 %v2517, %v2575
      %v2577 = vpop.f32.mrf.mxu0
      %v2578 = vadd.f32 %v2519, %v2577
      %2579 = vmatmul.bf16.gmra.mxu0 %v866
      %v2580 = vpop.f32.mrf.mxu0
      %v2581 = vadd.f32 %v2522, %v2580
      %v2582 = vpop.f32.mrf.mxu0
      %v2583 = vadd.f32 %v2524, %v2582
      %2584 = vmatmul.bf16.gmra.mxu0 %v870
      %v2585 = vpop.f32.mrf.mxu0
      %v2586 = vadd.f32 %v2527, %v2585
      %v2587 = vpop.f32.mrf.mxu0
      %v2588 = vadd.f32 %v2529, %v2587
      %2589 = vmatmul.bf16.gmra.mxu0 %v874
      %v2590 = vpop.f32.mrf.mxu0
      %v2591 = vadd.f32 %v2532, %v2590
      %v2592 = vpop.f32.mrf.mxu0
      %v2593 = vadd.f32 %v2534, %v2592
      %2594 = vmatmul.bf16.gmra.mxu0 %v878
      %v2595 = vpop.f32.mrf.mxu0
      %v2596 = vadd.f32 %v2537, %v2595
      %v2597 = vpop.f32.mrf.mxu0
      %v2598 = vadd.f32 %v2539, %v2597
      %2599 = vmatmul.bf16.gmra.mxu0 %v882
      %v2600 = vpop.f32.mrf.mxu0
      %v2601 = vadd.f32 %v2542, %v2600
      %v2602 = vpop.f32.mrf.mxu0
      %v2603 = vadd.f32 %v2544, %v2602
      %2604 = vdwg.mxu0
      %v2605 = vmax.f32 %v1848, 0.0
      %v2606 = vmax.f32 %v2084, 0.0
      %v2607 = vmax.f32 %v2320, 0.0
      %v2608 = vmax.f32 %v2556, 0.0
      %v2609 = vmax.f32 %v1850, 0.0
      %v2610 = vmax.f32 %v2086, 0.0
      %v2611 = vmax.f32 %v2322, 0.0
      %v2612 = vmax.f32 %v2558, 0.0
      %v2613 = vmax.f32 %v1853, 0.0
      %v2614 = vmax.f32 %v2089, 0.0
      %v2615 = vmax.f32 %v2325, 0.0
      %v2616 = vmax.f32 %v2561, 0.0
      %v2617 = vmax.f32 %v1855, 0.0
      %v2618 = vmax.f32 %v2091, 0.0
      %v2619 = vmax.f32 %v2327, 0.0
      %v2620 = vmax.f32 %v2563, 0.0
      %v2621 = vmax.f32 %v1858, 0.0
      %v2622 = vmax.f32 %v2094, 0.0
      %v2623 = vmax.f32 %v2330, 0.0
      %v2624 = vmax.f32 %v2566, 0.0
      %v2625 = vmax.f32 %v1860, 0.0
      %v2626 = vmax.f32 %v2096, 0.0
      %v2627 = vmax.f32 %v2332, 0.0
      %v2628 = vmax.f32 %v2568, 0.0
      %v2629 = vmax.f32 %v1863, 0.0
      %v2630 = vmax.f32 %v2099, 0.0
      %v2631 = vmax.f32 %v2335, 0.0
      %v2632 = vmax.f32 %v2571, 0.0
      %v2633 = vmax.f32 %v1865, 0.0
      %v2634 = vmax.f32 %v2101, 0.0
      %v2635 = vmax.f32 %v2337, 0.0
      %v2636 = vmax.f32 %v2573, 0.0
      %v2637 = vmax.f32 %v1868, 0.0
      %v2638 = vmax.f32 %v2104, 0.0
      %v2639 = vmax.f32 %v2340, 0.0
      %v2640 = vmax.f32 %v2576, 0.0
      %v2641 = vmax.f32 %v1870, 0.0
      %v2642 = vmax.f32 %v2106, 0.0
      %v2643 = vmax.f32 %v2342, 0.0
      %v2644 = vmax.f32 %v2578, 0.0
      %v2645 = vmax.f32 %v1873, 0.0
      %v2646 = vmax.f32 %v2109, 0.0
      %v2647 = vmax.f32 %v2345, 0.0
      %v2648 = vmax.f32 %v2581, 0.0
      %v2649 = vmax.f32 %v1875, 0.0
      %v2650 = vmax.f32 %v2111, 0.0
      %v2651 = vmax.f32 %v2347, 0.0
      %v2652 = vmax.f32 %v2583, 0.0
      %v2653 = vmax.f32 %v1878, 0.0
      %v2654 = vmax.f32 %v2114, 0.0
      %v2655 = vmax.f32 %v2350, 0.0
      %v2656 = vmax.f32 %v2586, 0.0
      %v2657 = vmax.f32 %v1880, 0.0
      %v2658 = vmax.f32 %v2116, 0.0
      %v2659 = vmax.f32 %v2352, 0.0
      %v2660 = vmax.f32 %v2588, 0.0
      %v2661 = vmax.f32 %v1883, 0.0
      %v2662 = vmax.f32 %v2119, 0.0
      %v2663 = vmax.f32 %v2355, 0.0
      %v2664 = vmax.f32 %v2591, 0.0
      %v2665 = vmax.f32 %v1885, 0.0
      %v2666 = vmax.f32 %v2121, 0.0
      %v2667 = vmax.f32 %v2357, 0.0
      %v2668 = vmax.f32 %v2593, 0.0
      %v2669 = vmax.f32 %v1888, 0.0
      %v2670 = vmax.f32 %v2124, 0.0
      %v2671 = vmax.f32 %v2360, 0.0
      %v2672 = vmax.f32 %v2596, 0.0
      %v2673 = vmax.f32 %v1890, 0.0
      %v2674 = vmax.f32 %v2126, 0.0
      %v2675 = vmax.f32 %v2362, 0.0
      %v2676 = vmax.f32 %v2598, 0.0
      %v2677 = vmax.f32 %v1893, 0.0
      %v2678 = vmax.f32 %v2129, 0.0
      %v2679 = vmax.f32 %v2365, 0.0
      %v2680 = vmax.f32 %v2601, 0.0
      %v2681 = vmax.f32 %v1895, 0.0
      %v2682 = vmax.f32 %v2131, 0.0
      %v2683 = vmax.f32 %v2367, 0.0
      %v2684 = vmax.f32 %v2603, 0.0
      %v2685 = vpack.c.bf16 %v2609, %v2605
      %v2686 = vpack.c.bf16 %v2610, %v2606
      %v2687 = vpack.c.bf16 %v2611, %v2607
      %v2688 = vpack.c.bf16 %v2612, %v2608
      %v2689 = vpack.c.bf16 %v2617, %v2613
      %v2690 = vpack.c.bf16 %v2618, %v2614
      %v2691 = vpack.c.bf16 %v2619, %v2615
      %v2692 = vpack.c.bf16 %v2620, %v2616
      %v2693 = vpack.c.bf16 %v2625, %v2621
      %v2694 = vpack.c.bf16 %v2626, %v2622
      %v2695 = vpack.c.bf16 %v2627, %v2623
      %v2696 = vpack.c.bf16 %v2628, %v2624
      %v2697 = vpack.c.bf16 %v2633, %v2629
      %v2698 = vpack.c.bf16 %v2634, %v2630
      %v2699 = vpack.c.bf16 %v2635, %v2631
      %v2700 = vpack.c.bf16 %v2636, %v2632
      %v2701 = vpack.c.bf16 %v2641, %v2637
      %v2702 = vpack.c.bf16 %v2642, %v2638
      %v2703 = vpack.c.bf16 %v2643, %v2639
      %v2704 = vpack.c.bf16 %v2644, %v2640
      %v2705 = vpack.c.bf16 %v2649, %v2645
      %v2706 = vpack.c.bf16 %v2650, %v2646
      %v2707 = vpack.c.bf16 %v2651, %v2647
      %v2708 = vpack.c.bf16 %v2652, %v2648
      %v2709 = vpack.c.bf16 %v2657, %v2653
      %v2710 = vpack.c.bf16 %v2658, %v2654
      %v2711 = vpack.c.bf16 %v2659, %v2655
      %v2712 = vpack.c.bf16 %v2660, %v2656
      %v2713 = vpack.c.bf16 %v2665, %v2661
      %v2714 = vpack.c.bf16 %v2666, %v2662
      %v2715 = vpack.c.bf16 %v2667, %v2663
      %v2716 = vpack.c.bf16 %v2668, %v2664
      %v2717 = vpack.c.bf16 %v2673, %v2669
      %v2718 = vpack.c.bf16 %v2674, %v2670
      %v2719 = vpack.c.bf16 %v2675, %v2671
      %v2720 = vpack.c.bf16 %v2676, %v2672
      %v2721 = vpack.c.bf16 %v2681, %v2677
      %v2722 = vpack.c.bf16 %v2682, %v2678
      %v2723 = vpack.c.bf16 %v2683, %v2679
      %v2724 = vpack.c.bf16 %v2684, %v2680
      %v2725 = vld [vmem:[%s6] sm:$0xf]
      %v2726 = vld [vmem:[%s6 + $0x4] sm:$0xf]
      %v2727 = vld [vmem:[%s6 + $0x8] sm:$0xf]
      %v2728 = vld [vmem:[%s6 + $0xc] sm:$0xf]
      %v2729 = vld [vmem:[%s6 + $0x10] sm:$0xf]
      %v2730 = vld [vmem:[%s6 + $0x14] sm:$0xf]
      %v2731 = vld [vmem:[%s6 + $0x18] sm:$0xf]
      %v2732 = vld [vmem:[%s6 + $0x1c] sm:$0xf]
      %v2733 = vld [vmem:[%s6 + $0x20] sm:$0xf]
      %v2734 = vld [vmem:[%s6 + $0x24] sm:$0xf]
      %v2735 = vld [vmem:[%s6 + $0x28] sm:$0xf]
      %v2736 = vld [vmem:[%s6 + $0x2c] sm:$0xf]
      %v2737 = vld [vmem:[%s6 + $0x30] sm:$0xf]
      %v2738 = vld [vmem:[%s6 + $0x34] sm:$0xf]
      %v2739 = vld [vmem:[%s6 + $0x38] sm:$0xf]
      %v2740 = vld [vmem:[%s6 + $0x3c] sm:$0xf]
      %v2741 = vld [vmem:[%s6 + $0x40] sm:$0xf]
      %v2742 = vld [vmem:[%s6 + $0x44] sm:$0xf]
      %v2743 = vld [vmem:[%s6 + $0x48] sm:$0xf]
      %v2744 = vld [vmem:[%s6 + $0x4c] sm:$0xf]
      %v2745 = vld [vmem:[%s6 + $0x50] sm:$0xf]
      %v2746 = vld [vmem:[%s6 + $0x54] sm:$0xf]
      %v2747 = vld [vmem:[%s6 + $0x58] sm:$0xf]
      %v2748 = vld [vmem:[%s6 + $0x5c] sm:$0xf]
      %v2749 = vld [vmem:[%s6 + $0x60] sm:$0xf]
      %v2750 = vld [vmem:[%s6 + $0x64] sm:$0xf]
      %v2751 = vld [vmem:[%s6 + $0x68] sm:$0xf]
      %v2752 = vld [vmem:[%s6 + $0x6c] sm:$0xf]
      %v2753 = vld [vmem:[%s6 + $0x70] sm:$0xf]
      %v2754 = vld [vmem:[%s6 + $0x74] sm:$0xf]
      %v2755 = vld [vmem:[%s6 + $0x78] sm:$0xf]
      %v2756 = vld [vmem:[%s6 + $0x7c] sm:$0xf]
      %v2757 = vld [vmem:[%s6 + $0x80] sm:$0xf]
      %v2758 = vld [vmem:[%s6 + $0x84] sm:$0xf]
      %v2759 = vld [vmem:[%s6 + $0x88] sm:$0xf]
      %v2760 = vld [vmem:[%s6 + $0x8c] sm:$0xf]
      %v2761 = vld [vmem:[%s6 + $0x90] sm:$0xf]
      %v2762 = vld [vmem:[%s6 + $0x94] sm:$0xf]
      %v2763 = vld [vmem:[%s6 + $0x98] sm:$0xf]
      %v2764 = vld [vmem:[%s6 + $0x9c] sm:$0xf]
      %v2765 = vld [vmem:[%s6 + $0xa0] sm:$0xf]
      %v2766 = vld [vmem:[%s6 + $0xa4] sm:$0xf]
      %v2767 = vld [vmem:[%s6 + $0xa8] sm:$0xf]
      %v2768 = vld [vmem:[%s6 + $0xac] sm:$0xf]
      %v2769 = vld [vmem:[%s6 + $0xb0] sm:$0xf]
      %v2770 = vld [vmem:[%s6 + $0xb4] sm:$0xf]
      %v2771 = vld [vmem:[%s6 + $0xb8] sm:$0xf]
      %v2772 = vld [vmem:[%s6 + $0xbc] sm:$0xf]
      %v2773 = vld [vmem:[%s6 + $0xc0] sm:$0xf]
      %v2774 = vld [vmem:[%s6 + $0xc4] sm:$0xf]
      %v2775 = vld [vmem:[%s6 + $0xc8] sm:$0xf]
      %v2776 = vld [vmem:[%s6 + $0xcc] sm:$0xf]
      %v2777 = vld [vmem:[%s6 + $0xd0] sm:$0xf]
      %v2778 = vld [vmem:[%s6 + $0xd4] sm:$0xf]
      %v2779 = vld [vmem:[%s6 + $0xd8] sm:$0xf]
      %v2780 = vld [vmem:[%s6 + $0xdc] sm:$0xf]
      %v2781 = vld [vmem:[%s6 + $0xe0] sm:$0xf]
      %v2782 = vld [vmem:[%s6 + $0xe4] sm:$0xf]
      %v2783 = vld [vmem:[%s6 + $0xe8] sm:$0xf]
      %v2784 = vld [vmem:[%s6 + $0xec] sm:$0xf]
      %v2785 = vld [vmem:[%s6 + $0xf0] sm:$0xf]
      %v2786 = vld [vmem:[%s6 + $0xf4] sm:$0xf]
      %v2787 = vld [vmem:[%s6 + $0xf8] sm:$0xf]
      %v2788 = vld [vmem:[%s6 + $0xfc] sm:$0xf]
      %v2853 = vunpack.c.l.b16 %v2725
      %v2854 = vunpack.c.l.b16 %v2726
      %v2855 = vunpack.c.l.b16 %v2727
      %v2856 = vunpack.c.l.b16 %v2728
      %v2857 = vunpack.c.l.b16 %v2729
      %v2858 = vunpack.c.l.b16 %v2730
      %v2859 = vunpack.c.l.b16 %v2731
      %v2860 = vunpack.c.l.b16 %v2732
      %v2861 = vunpack.c.l.b16 %v2733
      %v2862 = vunpack.c.l.b16 %v2734
      %v2863 = vunpack.c.l.b16 %v2735
      %v2864 = vunpack.c.l.b16 %v2736
      %v2865 = vunpack.c.l.b16 %v2737
      %v2866 = vunpack.c.l.b16 %v2738
      %v2867 = vunpack.c.l.b16 %v2739
      %v2868 = vunpack.c.l.b16 %v2740
      %v2869 = vunpack.c.l.b16 %v2741
      %v2870 = vunpack.c.l.b16 %v2742
      %v2871 = vunpack.c.l.b16 %v2743
      %v2872 = vunpack.c.l.b16 %v2744
      %v2873 = vunpack.c.l.b16 %v2745
      %v2874 = vunpack.c.l.b16 %v2746
      %v2875 = vunpack.c.l.b16 %v2747
      %v2876 = vunpack.c.l.b16 %v2748
      %v2877 = vunpack.c.l.b16 %v2749
      %v2878 = vunpack.c.l.b16 %v2750
      %v2879 = vunpack.c.l.b16 %v2751
      %v2880 = vunpack.c.l.b16 %v2752
      %v2881 = vunpack.c.l.b16 %v2753
      %v2882 = vunpack.c.l.b16 %v2754
      %v2883 = vunpack.c.l.b16 %v2755
      %v2884 = vunpack.c.l.b16 %v2756
      %v2885 = vunpack.c.l.b16 %v2757
      %v2886 = vunpack.c.l.b16 %v2758
      %v2887 = vunpack.c.l.b16 %v2759
      %v2888 = vunpack.c.l.b16 %v2760
      %v2889 = vunpack.c.l.b16 %v2761
      %v2890 = vunpack.c.l.b16 %v2762
      %v2891 = vunpack.c.l.b16 %v2763
      %v2892 = vunpack.c.l.b16 %v2764
      %v2893 = vunpack.c.l.b16 %v2765
      %v2894 = vunpack.c.l.b16 %v2766
      %v2895 = vunpack.c.l.b16 %v2767
      %v2896 = vunpack.c.l.b16 %v2768
      %v2897 = vunpack.c.l.b16 %v2769
      %v2898 = vunpack.c.l.b16 %v2770
      %v2899 = vunpack.c.l.b16 %v2771
      %v2900 = vunpack.c.l.b16 %v2772
      %v2901 = vunpack.c.l.b16 %v2773
      %v2902 = vunpack.c.l.b16 %v2774
      %v2903 = vunpack.c.l.b16 %v2775
      %v2904 = vunpack.c.l.b16 %v2776
      %v2905 = vunpack.c.l.b16 %v2777
      %v2906 = vunpack.c.l.b16 %v2778
      %v2907 = vunpack.c.l.b16 %v2779
      %v2908 = vunpack.c.l.b16 %v2780
      %v2909 = vunpack.c.l.b16 %v2781
      %v2910 = vunpack.c.l.b16 %v2782
      %v2911 = vunpack.c.l.b16 %v2783
      %v2912 = vunpack.c.l.b16 %v2784
      %v2913 = vunpack.c.l.b16 %v2785
      %v2914 = vunpack.c.l.b16 %v2786
      %v2915 = vunpack.c.l.b16 %v2787
      %v2916 = vunpack.c.l.b16 %v2788
      %v2917 = vpack.c.b16 %v2854, %v2853
      %v2918 = vpack.c.b16 %v2856, %v2855
      %v2919 = vpack.c.b16 %v2858, %v2857
      %v2920 = vpack.c.b16 %v2860, %v2859
      %v2921 = vpack.c.b16 %v2862, %v2861
      %v2922 = vpack.c.b16 %v2864, %v2863
      %v2923 = vpack.c.b16 %v2866, %v2865
      %v2924 = vpack.c.b16 %v2868, %v2867
      %v2925 = vpack.c.b16 %v2870, %v2869
      %v2926 = vpack.c.b16 %v2872, %v2871
      %v2927 = vpack.c.b16 %v2874, %v2873
      %v2928 = vpack.c.b16 %v2876, %v2875
      %v2929 = vpack.c.b16 %v2878, %v2877
      %v2930 = vpack.c.b16 %v2880, %v2879
      %v2931 = vpack.c.b16 %v2882, %v2881
      %v2932 = vpack.c.b16 %v2884, %v2883
      %v2933 = vpack.c.b16 %v2886, %v2885
      %v2934 = vpack.c.b16 %v2888, %v2887
      %v2935 = vpack.c.b16 %v2890, %v2889
      %v2936 = vpack.c.b16 %v2892, %v2891
      %v2937 = vpack.c.b16 %v2894, %v2893
      %v2938 = vpack.c.b16 %v2896, %v2895
      %v2939 = vpack.c.b16 %v2898, %v2897
      %v2940 = vpack.c.b16 %v2900, %v2899
      %v2941 = vpack.c.b16 %v2902, %v2901
      %v2942 = vpack.c.b16 %v2904, %v2903
      %v2943 = vpack.c.b16 %v2906, %v2905
      %v2944 = vpack.c.b16 %v2908, %v2907
      %v2945 = vpack.c.b16 %v2910, %v2909
      %v2946 = vpack.c.b16 %v2912, %v2911
      %v2947 = vpack.c.b16 %v2914, %v2913
      %v2948 = vpack.c.b16 %v2916, %v2915
      %2981 = vmatpush.bf16.msra.mxu0 %v2924
      %2982 = vmatpush.bf16.msra.mxu0 %v2923
      %2983 = vmatpush.bf16.msra.mxu0 %v2922
      %2984 = vmatpush.bf16.msra.mxu0 %v2921
      %2985 = vmatpush.bf16.msra.mxu0 %v2920
      %2986 = vmatpush.bf16.msra.mxu0 %v2919
      %2987 = vmatpush.bf16.msra.mxu0 %v2918
      %2988 = vmatpush.bf16.msra.mxu0 %v2917
      %2989 = vmatmul.bf16.gmra.mxu0 %v2685
      %v2990 = vpop.f32.mrf.mxu0
      %v2991 = vadd.f32 0.0, %v2990
      %v2992 = vpop.f32.mrf.mxu0
      %v2993 = vadd.f32 0.0, %v2992
      %2994 = vmatmul.bf16.gmra.mxu0 %v2689
      %v2995 = vpop.f32.mrf.mxu0
      %v2996 = vadd.f32 0.0, %v2995
      %v2997 = vpop.f32.mrf.mxu0
      %v2998 = vadd.f32 0.0, %v2997
      %2999 = vmatmul.bf16.gmra.mxu0 %v2693
      %v3000 = vpop.f32.mrf.mxu0
      %v3001 = vadd.f32 0.0, %v3000
      %v3002 = vpop.f32.mrf.mxu0
      %v3003 = vadd.f32 0.0, %v3002
      %3004 = vmatmul.bf16.gmra.mxu0 %v2697
      %v3005 = vpop.f32.mrf.mxu0
      %v3006 = vadd.f32 0.0, %v3005
      %v3007 = vpop.f32.mrf.mxu0
      %v3008 = vadd.f32 0.0, %v3007
      %3009 = vmatmul.bf16.gmra.mxu0 %v2701
      %v3010 = vpop.f32.mrf.mxu0
      %v3011 = vadd.f32 0.0, %v3010
      %v3012 = vpop.f32.mrf.mxu0
      %v3013 = vadd.f32 0.0, %v3012
      %3014 = vmatmul.bf16.gmra.mxu0 %v2705
      %v3015 = vpop.f32.mrf.mxu0
      %v3016 = vadd.f32 0.0, %v3015
      %v3017 = vpop.f32.mrf.mxu0
      %v3018 = vadd.f32 0.0, %v3017
      %3019 = vmatmul.bf16.gmra.mxu0 %v2709
      %v3020 = vpop.f32.mrf.mxu0
      %v3021 = vadd.f32 0.0, %v3020
      %v3022 = vpop.f32.mrf.mxu0
      %v3023 = vadd.f32 0.0, %v3022
      %3024 = vmatmul.bf16.gmra.mxu0 %v2713
      %v3025 = vpop.f32.mrf.mxu0
      %v3026 = vadd.f32 0.0, %v3025
      %v3027 = vpop.f32.mrf.mxu0
      %v3028 = vadd.f32 0.0, %v3027
      %3029 = vmatmul.bf16.gmra.mxu0 %v2717
      %v3030 = vpop.f32.mrf.mxu0
      %v3031 = vadd.f32 0.0, %v3030
      %v3032 = vpop.f32.mrf.mxu0
      %v3033 = vadd.f32 0.0, %v3032
      %3034 = vmatmul.bf16.gmra.mxu0 %v2721
      %v3035 = vpop.f32.mrf.mxu0
      %v3036 = vadd.f32 0.0, %v3035
      %v3037 = vpop.f32.mrf.mxu0
      %v3038 = vadd.f32 0.0, %v3037
      %3039 = vdwg.mxu0
      %3040 = vmatpush.bf16.msra.mxu0 %v2932
      %3041 = vmatpush.bf16.msra.mxu0 %v2931
      %3042 = vmatpush.bf16.msra.mxu0 %v2930
      %3043 = vmatpush.bf16.msra.mxu0 %v2929
      %3044 = vmatpush.bf16.msra.mxu0 %v2928
      %3045 = vmatpush.bf16.msra.mxu0 %v2927
      %3046 = vmatpush.bf16.msra.mxu0 %v2926
      %3047 = vmatpush.bf16.msra.mxu0 %v2925
      %3048 = vmatmul.bf16.gmra.mxu0 %v2686
      %v3049 = vpop.f32.mrf.mxu0
      %v3050 = vadd.f32 %v2991, %v3049
      %v3051 = vpop.f32.mrf.mxu0
      %v3052 = vadd.f32 %v2993, %v3051
      %3053 = vmatmul.bf16.gmra.mxu0 %v2690
      %v3054 = vpop.f32.mrf.mxu0
      %v3055 = vadd.f32 %v2996, %v3054
      %v3056 = vpop.f32.mrf.mxu0
      %v3057 = vadd.f32 %v2998, %v3056
      %3058 = vmatmul.bf16.gmra.mxu0 %v2694
      %v3059 = vpop.f32.mrf.mxu0
      %v3060 = vadd.f32 %v3001, %v3059
      %v3061 = vpop.f32.mrf.mxu0
      %v3062 = vadd.f32 %v3003, %v3061
      %3063 = vmatmul.bf16.gmra.mxu0 %v2698
      %v3064 = vpop.f32.mrf.mxu0
      %v3065 = vadd.f32 %v3006, %v3064
      %v3066 = vpop.f32.mrf.mxu0
      %v3067 = vadd.f32 %v3008, %v3066
      %3068 = vmatmul.bf16.gmra.mxu0 %v2702
      %v3069 = vpop.f32.mrf.mxu0
      %v3070 = vadd.f32 %v3011, %v3069
      %v3071 = vpop.f32.mrf.mxu0
      %v3072 = vadd.f32 %v3013, %v3071
      %3073 = vmatmul.bf16.gmra.mxu0 %v2706
      %v3074 = vpop.f32.mrf.mxu0
      %v3075 = vadd.f32 %v3016, %v3074
      %v3076 = vpop.f32.mrf.mxu0
      %v3077 = vadd.f32 %v3018, %v3076
      %3078 = vmatmul.bf16.gmra.mxu0 %v2710
      %v3079 = vpop.f32.mrf.mxu0
      %v3080 = vadd.f32 %v3021, %v3079
      %v3081 = vpop.f32.mrf.mxu0
      %v3082 = vadd.f32 %v3023, %v3081
      %3083 = vmatmul.bf16.gmra.mxu0 %v2714
      %v3084 = vpop.f32.mrf.mxu0
      %v3085 = vadd.f32 %v3026, %v3084
      %v3086 = vpop.f32.mrf.mxu0
      %v3087 = vadd.f32 %v3028, %v3086
      %3088 = vmatmul.bf16.gmra.mxu0 %v2718
      %v3089 = vpop.f32.mrf.mxu0
      %v3090 = vadd.f32 %v3031, %v3089
      %v3091 = vpop.f32.mrf.mxu0
      %v3092 = vadd.f32 %v3033, %v3091
      %3093 = vmatmul.bf16.gmra.mxu0 %v2722
      %v3094 = vpop.f32.mrf.mxu0
      %v3095 = vadd.f32 %v3036, %v3094
      %v3096 = vpop.f32.mrf.mxu0
      %v3097 = vadd.f32 %v3038, %v3096
      %3098 = vdwg.mxu0
      %3099 = vmatpush.bf16.msra.mxu0 %v2940
      %3100 = vmatpush.bf16.msra.mxu0 %v2939
      %3101 = vmatpush.bf16.msra.mxu0 %v2938
      %3102 = vmatpush.bf16.msra.mxu0 %v2937
      %3103 = vmatpush.bf16.msra.mxu0 %v2936
      %3104 = vmatpush.bf16.msra.mxu0 %v2935
      %3105 = vmatpush.bf16.msra.mxu0 %v2934
      %3106 = vmatpush.bf16.msra.mxu0 %v2933
      %3107 = vmatmul.bf16.gmra.mxu0 %v2687
      %v3108 = vpop.f32.mrf.mxu0
      %v3109 = vadd.f32 %v3050, %v3108
      %v3110 = vpop.f32.mrf.mxu0
      %v3111 = vadd.f32 %v3052, %v3110
      %3112 = vmatmul.bf16.gmra.mxu0 %v2691
      %v3113 = vpop.f32.mrf.mxu0
      %v3114 = vadd.f32 %v3055, %v3113
      %v3115 = vpop.f32.mrf.mxu0
      %v3116 = vadd.f32 %v3057, %v3115
      %3117 = vmatmul.bf16.gmra.mxu0 %v2695
      %v3118 = vpop.f32.mrf.mxu0
      %v3119 = vadd.f32 %v3060, %v3118
      %v3120 = vpop.f32.mrf.mxu0
      %v3121 = vadd.f32 %v3062, %v3120
      %3122 = vmatmul.bf16.gmra.mxu0 %v2699
      %v3123 = vpop.f32.mrf.mxu0
      %v3124 = vadd.f32 %v3065, %v3123
      %v3125 = vpop.f32.mrf.mxu0
      %v3126 = vadd.f32 %v3067, %v3125
      %3127 = vmatmul.bf16.gmra.mxu0 %v2703
      %v3128 = vpop.f32.mrf.mxu0
      %v3129 = vadd.f32 %v3070, %v3128
      %v3130 = vpop.f32.mrf.mxu0
      %v3131 = vadd.f32 %v3072, %v3130
      %3132 = vmatmul.bf16.gmra.mxu0 %v2707
      %v3133 = vpop.f32.mrf.mxu0
      %v3134 = vadd.f32 %v3075, %v3133
      %v3135 = vpop.f32.mrf.mxu0
      %v3136 = vadd.f32 %v3077, %v3135
      %3137 = vmatmul.bf16.gmra.mxu0 %v2711
      %v3138 = vpop.f32.mrf.mxu0
      %v3139 = vadd.f32 %v3080, %v3138
      %v3140 = vpop.f32.mrf.mxu0
      %v3141 = vadd.f32 %v3082, %v3140
      %3142 = vmatmul.bf16.gmra.mxu0 %v2715
      %v3143 = vpop.f32.mrf.mxu0
      %v3144 = vadd.f32 %v3085, %v3143
      %v3145 = vpop.f32.mrf.mxu0
      %v3146 = vadd.f32 %v3087, %v3145
      %3147 = vmatmul.bf16.gmra.mxu0 %v2719
      %v3148 = vpop.f32.mrf.mxu0
      %v3149 = vadd.f32 %v3090, %v3148
      %v3150 = vpop.f32.mrf.mxu0
      %v3151 = vadd.f32 %v3092, %v3150
      %3152 = vmatmul.bf16.gmra.mxu0 %v2723
      %v3153 = vpop.f32.mrf.mxu0
      %v3154 = vadd.f32 %v3095, %v3153
      %v3155 = vpop.f32.mrf.mxu0
      %v3156 = vadd.f32 %v3097, %v3155
      %3157 = vdwg.mxu0
      %3158 = vmatpush.bf16.msra.mxu0 %v2948
      %3159 = vmatpush.bf16.msra.mxu0 %v2947
      %3160 = vmatpush.bf16.msra.mxu0 %v2946
      %3161 = vmatpush.bf16.msra.mxu0 %v2945
      %3162 = vmatpush.bf16.msra.mxu0 %v2944
      %3163 = vmatpush.bf16.msra.mxu0 %v2943
      %3164 = vmatpush.bf16.msra.mxu0 %v2942
      %3165 = vmatpush.bf16.msra.mxu0 %v2941
      %3166 = vmatmul.bf16.gmra.mxu0 %v2688
      %v3167 = vpop.f32.mrf.mxu0
      %v3168 = vadd.f32 %v3109, %v3167
      %v3169 = vpop.f32.mrf.mxu0
      %v3170 = vadd.f32 %v3111, %v3169
      %3171 = vmatmul.bf16.gmra.mxu0 %v2692
      %v3172 = vpop.f32.mrf.mxu0
      %v3173 = vadd.f32 %v3114, %v3172
      %v3174 = vpop.f32.mrf.mxu0
      %v3175 = vadd.f32 %v3116, %v3174
      %3176 = vmatmul.bf16.gmra.mxu0 %v2696
      %v3177 = vpop.f32.mrf.mxu0
      %v3178 = vadd.f32 %v3119, %v3177
      %v3179 = vpop.f32.mrf.mxu0
      %v3180 = vadd.f32 %v3121, %v3179
      %3181 = vmatmul.bf16.gmra.mxu0 %v2700
      %v3182 = vpop.f32.mrf.mxu0
      %v3183 = vadd.f32 %v3124, %v3182
      %v3184 = vpop.f32.mrf.mxu0
      %v3185 = vadd.f32 %v3126, %v3184
      %3186 = vmatmul.bf16.gmra.mxu0 %v2704
      %v3187 = vpop.f32.mrf.mxu0
      %v3188 = vadd.f32 %v3129, %v3187
      %v3189 = vpop.f32.mrf.mxu0
      %v3190 = vadd.f32 %v3131, %v3189
      %3191 = vmatmul.bf16.gmra.mxu0 %v2708
      %v3192 = vpop.f32.mrf.mxu0
      %v3193 = vadd.f32 %v3134, %v3192
      %v3194 = vpop.f32.mrf.mxu0
      %v3195 = vadd.f32 %v3136, %v3194
      %3196 = vmatmul.bf16.gmra.mxu0 %v2712
      %v3197 = vpop.f32.mrf.mxu0
      %v3198 = vadd.f32 %v3139, %v3197
      %v3199 = vpop.f32.mrf.mxu0
      %v3200 = vadd.f32 %v3141, %v3199
      %3201 = vmatmul.bf16.gmra.mxu0 %v2716
      %v3202 = vpop.f32.mrf.mxu0
      %v3203 = vadd.f32 %v3144, %v3202
      %v3204 = vpop.f32.mrf.mxu0
      %v3205 = vadd.f32 %v3146, %v3204
      %3206 = vmatmul.bf16.gmra.mxu0 %v2720
      %v3207 = vpop.f32.mrf.mxu0
      %v3208 = vadd.f32 %v3149, %v3207
      %v3209 = vpop.f32.mrf.mxu0
      %v3210 = vadd.f32 %v3151, %v3209
      %3211 = vmatmul.bf16.gmra.mxu0 %v2724
      %v3212 = vpop.f32.mrf.mxu0
      %v3213 = vadd.f32 %v3154, %v3212
      %v3214 = vpop.f32.mrf.mxu0
      %v3215 = vadd.f32 %v3156, %v3214
      %3216 = vdwg.mxu0
      %v3217 = vlaneseq
      %v3218 = vshrl.u32 %v3217, 7
      %v3219 = vadd.s32 %v3218, 8
      %v3220 = vadd.s32 %v3218, 16
      %v3221 = vadd.s32 %v3218, 24
      %v3222 = vadd.s32 %v3218, 32
      %v3223 = vadd.s32 %v3218, 40
      %v3224 = vadd.s32 %v3218, 48
      %v3225 = vadd.s32 %v3218, 56
      %v3226 = vadd.s32 %v3218, 64
      %v3227 = vadd.s32 %v3218, 72
      %v3228 = vadd.s32 %v3218, 80
      %v3229 = vadd.s32 %v3218, 88
      %v3230 = vadd.s32 %v3218, 96
      %v3231 = vadd.s32 %v3218, 104
      %v3232 = vadd.s32 %v3218, 112
      %v3233 = vadd.s32 %v3218, 120
      %v3234 = vadd.s32 %v3218, 128
      %v3235 = vadd.s32 %v3218, 136
      %v3236 = vadd.s32 %v3218, 144
      %v3237 = vadd.s32 %v3218, 152
      %vm3238 = vcmp.ge.s32.totalorder %v3218, 16
      %vm3239 = vcmp.ge.s32.totalorder %v3219, 16
      %vm3240 = vcmp.ge.s32.totalorder %v3220, 16
      %vm3241 = vcmp.ge.s32.totalorder %v3221, 16
      %vm3242 = vcmp.ge.s32.totalorder %v3222, 16
      %vm3243 = vcmp.ge.s32.totalorder %v3223, 16
      %vm3244 = vcmp.ge.s32.totalorder %v3224, 16
      %vm3245 = vcmp.ge.s32.totalorder %v3225, 16
      %vm3246 = vcmp.ge.s32.totalorder %v3226, 16
      %vm3247 = vcmp.ge.s32.totalorder %v3227, 16
      %vm3248 = vcmp.ge.s32.totalorder %v3228, 16
      %vm3249 = vcmp.ge.s32.totalorder %v3229, 16
      %vm3250 = vcmp.ge.s32.totalorder %v3230, 16
      %vm3251 = vcmp.ge.s32.totalorder %v3231, 16
      %vm3252 = vcmp.ge.s32.totalorder %v3232, 16
      %vm3253 = vcmp.ge.s32.totalorder %v3233, 16
      %vm3254 = vcmp.ge.s32.totalorder %v3234, 16
      %vm3255 = vcmp.ge.s32.totalorder %v3235, 16
      %vm3256 = vcmp.ge.s32.totalorder %v3236, 16
      %vm3257 = vcmp.ge.s32.totalorder %v3237, 16
      %p3258 = scmp.gt.s32.totalorder %s24, 0
      %s3259 = scalar_select %p3258, 1, 0
      %v3260 = vstv %s3259
      %vm3261 = vcmp.eq.s32.totalorder %v3260, 1
      %vm3262 = vmor %vm3238, %vm3261
      %vm3263 = vmor %vm3239, %vm3261
      %vm3264 = vmor %vm3240, %vm3261
      %vm3265 = vmor %vm3241, %vm3261
      %vm3266 = vmor %vm3242, %vm3261
      %vm3267 = vmor %vm3243, %vm3261
      %vm3268 = vmor %vm3244, %vm3261
      %vm3269 = vmor %vm3245, %vm3261
      %vm3270 = vmor %vm3246, %vm3261
      %vm3271 = vmor %vm3247, %vm3261
      %vm3272 = vmor %vm3248, %vm3261
      %vm3273 = vmor %vm3249, %vm3261
      %vm3274 = vmor %vm3250, %vm3261
      %vm3275 = vmor %vm3251, %vm3261
      %vm3276 = vmor %vm3252, %vm3261
      %vm3277 = vmor %vm3253, %vm3261
      %vm3278 = vmor %vm3254, %vm3261
      %vm3279 = vmor %vm3255, %vm3261
      %vm3280 = vmor %vm3256, %vm3261
      %vm3281 = vmor %vm3257, %vm3261
      %vm3282 = vcmp.lt.s32.totalorder %v3218, 144
      %vm3283 = vcmp.lt.s32.totalorder %v3219, 144
      %vm3284 = vcmp.lt.s32.totalorder %v3220, 144
      %vm3285 = vcmp.lt.s32.totalorder %v3221, 144
      %vm3286 = vcmp.lt.s32.totalorder %v3222, 144
      %vm3287 = vcmp.lt.s32.totalorder %v3223, 144
      %vm3288 = vcmp.lt.s32.totalorder %v3224, 144
      %vm3289 = vcmp.lt.s32.totalorder %v3225, 144
      %vm3290 = vcmp.lt.s32.totalorder %v3226, 144
      %vm3291 = vcmp.lt.s32.totalorder %v3227, 144
      %vm3292 = vcmp.lt.s32.totalorder %v3228, 144
      %vm3293 = vcmp.lt.s32.totalorder %v3229, 144
      %vm3294 = vcmp.lt.s32.totalorder %v3230, 144
      %vm3295 = vcmp.lt.s32.totalorder %v3231, 144
      %vm3296 = vcmp.lt.s32.totalorder %v3232, 144
      %vm3297 = vcmp.lt.s32.totalorder %v3233, 144
      %vm3298 = vcmp.lt.s32.totalorder %v3234, 144
      %vm3299 = vcmp.lt.s32.totalorder %v3235, 144
      %vm3300 = vcmp.lt.s32.totalorder %v3236, 144
      %vm3301 = vcmp.lt.s32.totalorder %v3237, 144
      %p3302 = scmp.lt.s32.totalorder %s24, 1
      %s3303 = scalar_select %p3302, 1, 0
      %v3304 = vstv %s3303
      %vm3305 = vcmp.eq.s32.totalorder %v3304, 1
      %vm3306 = vmor %vm3282, %vm3305
      %vm3307 = vmor %vm3283, %vm3305
      %vm3308 = vmor %vm3284, %vm3305
      %vm3309 = vmor %vm3285, %vm3305
      %vm3310 = vmor %vm3286, %vm3305
      %vm3311 = vmor %vm3287, %vm3305
      %vm3312 = vmor %vm3288, %vm3305
      %vm3313 = vmor %vm3289, %vm3305
      %vm3314 = vmor %vm3290, %vm3305
      %vm3315 = vmor %vm3291, %vm3305
      %vm3316 = vmor %vm3292, %vm3305
      %vm3317 = vmor %vm3293, %vm3305
      %vm3318 = vmor %vm3294, %vm3305
      %vm3319 = vmor %vm3295, %vm3305
      %vm3320 = vmor %vm3296, %vm3305
      %vm3321 = vmor %vm3297, %vm3305
      %vm3322 = vmor %vm3298, %vm3305
      %vm3323 = vmor %vm3299, %vm3305
      %vm3324 = vmor %vm3300, %vm3305
      %vm3325 = vmor %vm3301, %vm3305
      %vm3326 = vmand %vm3262, %vm3306
      %vm3327 = vmand %vm3263, %vm3307
      %vm3328 = vmand %vm3264, %vm3308
      %vm3329 = vmand %vm3265, %vm3309
      %vm3330 = vmand %vm3266, %vm3310
      %vm3331 = vmand %vm3267, %vm3311
      %vm3332 = vmand %vm3268, %vm3312
      %vm3333 = vmand %vm3269, %vm3313
      %vm3334 = vmand %vm3270, %vm3314
      %vm3335 = vmand %vm3271, %vm3315
      %vm3336 = vmand %vm3272, %vm3316
      %vm3337 = vmand %vm3273, %vm3317
      %vm3338 = vmand %vm3274, %vm3318
      %vm3339 = vmand %vm3275, %vm3319
      %vm3340 = vmand %vm3276, %vm3320
      %vm3341 = vmand %vm3277, %vm3321
      %vm3342 = vmand %vm3278, %vm3322
      %vm3343 = vmand %vm3279, %vm3323
      %vm3344 = vmand %vm3280, %vm3324
      %vm3345 = vmand %vm3281, %vm3325
      %v3346 = vsel %vm3326, 1, 0
      %v3347 = vsel %vm3327, 1, 0
      %v3348 = vsel %vm3328, 1, 0
      %v3349 = vsel %vm3329, 1, 0
      %v3350 = vsel %vm3330, 1, 0
      %v3351 = vsel %vm3331, 1, 0
      %v3352 = vsel %vm3332, 1, 0
      %v3353 = vsel %vm3333, 1, 0
      %v3354 = vsel %vm3334, 1, 0
      %v3355 = vsel %vm3335, 1, 0
      %v3356 = vsel %vm3336, 1, 0
      %v3357 = vsel %vm3337, 1, 0
      %v3358 = vsel %vm3338, 1, 0
      %v3359 = vsel %vm3339, 1, 0
      %v3360 = vsel %vm3340, 1, 0
      %v3361 = vsel %vm3341, 1, 0
      %v3362 = vsel %vm3342, 1, 0
      %v3363 = vsel %vm3343, 1, 0
      %v3364 = vsel %vm3344, 1, 0
      %v3365 = vsel %vm3345, 1, 0
      %vm3366 = vcmp.eq.s32.totalorder %v3346, 1
      %vm3367 = vcmp.eq.s32.totalorder %v3347, 1
      %vm3368 = vcmp.eq.s32.totalorder %v3348, 1
      %vm3369 = vcmp.eq.s32.totalorder %v3349, 1
      %vm3370 = vcmp.eq.s32.totalorder %v3350, 1
      %vm3371 = vcmp.eq.s32.totalorder %v3351, 1
      %vm3372 = vcmp.eq.s32.totalorder %v3352, 1
      %vm3373 = vcmp.eq.s32.totalorder %v3353, 1
      %vm3374 = vcmp.eq.s32.totalorder %v3354, 1
      %vm3375 = vcmp.eq.s32.totalorder %v3355, 1
      %vm3376 = vcmp.eq.s32.totalorder %v3356, 1
      %vm3377 = vcmp.eq.s32.totalorder %v3357, 1
      %vm3378 = vcmp.eq.s32.totalorder %v3358, 1
      %vm3379 = vcmp.eq.s32.totalorder %v3359, 1
      %vm3380 = vcmp.eq.s32.totalorder %v3360, 1
      %vm3381 = vcmp.eq.s32.totalorder %v3361, 1
      %vm3382 = vcmp.eq.s32.totalorder %v3362, 1
      %vm3383 = vcmp.eq.s32.totalorder %v3363, 1
      %vm3384 = vcmp.eq.s32.totalorder %v3364, 1
      %vm3385 = vcmp.eq.s32.totalorder %v3365, 1
      %v3386 = vsel %vm3366, %v3168, 0.0
      %v3387 = vsel %vm3367, %v3170, 0.0
      %v3388 = vsel %vm3368, %v3173, 0.0
      %v3389 = vsel %vm3369, %v3175, 0.0
      %v3390 = vsel %vm3370, %v3178, 0.0
      %v3391 = vsel %vm3371, %v3180, 0.0
      %v3392 = vsel %vm3372, %v3183, 0.0
      %v3393 = vsel %vm3373, %v3185, 0.0
      %v3394 = vsel %vm3374, %v3188, 0.0
      %v3395 = vsel %vm3375, %v3190, 0.0
      %v3396 = vsel %vm3376, %v3193, 0.0
      %v3397 = vsel %vm3377, %v3195, 0.0
      %v3398 = vsel %vm3378, %v3198, 0.0
      %v3399 = vsel %vm3379, %v3200, 0.0
      %v3400 = vsel %vm3380, %v3203, 0.0
      %v3401 = vsel %vm3381, %v3205, 0.0
      %v3402 = vsel %vm3382, %v3208, 0.0
      %v3403 = vsel %vm3383, %v3210, 0.0
      %v3404 = vsel %vm3384, %v3213, 0.0
      %v3405 = vsel %vm3385, %v3215, 0.0
      %v3406 = vld [vmem:[%s1] sm:$0xff]
      %v3407 = vld [vmem:[%s1 + $0x8] sm:$0xff]
      %v3408 = vld [vmem:[%s1 + $0x10] sm:$0xff]
      %v3409 = vld [vmem:[%s1 + $0x18] sm:$0xff]
      %v3410 = vld [vmem:[%s1 + $0x20] sm:$0xff]
      %v3411 = vld [vmem:[%s1 + $0x28] sm:$0xff]
      %v3412 = vld [vmem:[%s1 + $0x30] sm:$0xff]
      %v3413 = vld [vmem:[%s1 + $0x38] sm:$0xff]
      %v3414 = vld [vmem:[%s1 + $0x40] sm:$0xff]
      %v3415 = vld [vmem:[%s1 + $0x48] sm:$0xff]
      %v3416 = vld [vmem:[%s1 + $0x50] sm:$0xff]
      %v3417 = vld [vmem:[%s1 + $0x58] sm:$0xff]
      %v3418 = vld [vmem:[%s1 + $0x60] sm:$0xff]
      %v3419 = vld [vmem:[%s1 + $0x68] sm:$0xff]
      %v3420 = vld [vmem:[%s1 + $0x70] sm:$0xff]
      %v3421 = vld [vmem:[%s1 + $0x78] sm:$0xff]
      %v3422 = vld [vmem:[%s7] sm:$0x1]
      %v3424 = vperm.slane %v3422, 0
      %vm3426 = vcmp.gt.s32.totalorder %v3406, 0
      %vm3427 = vcmp.gt.s32.totalorder %v3407, 0
      %vm3428 = vcmp.gt.s32.totalorder %v3408, 0
      %vm3429 = vcmp.gt.s32.totalorder %v3409, 0
      %vm3430 = vcmp.gt.s32.totalorder %v3410, 0
      %vm3431 = vcmp.gt.s32.totalorder %v3411, 0
      %vm3432 = vcmp.gt.s32.totalorder %v3412, 0
      %vm3433 = vcmp.gt.s32.totalorder %v3413, 0
      %vm3434 = vcmp.gt.s32.totalorder %v3414, 0
      %vm3435 = vcmp.gt.s32.totalorder %v3415, 0
      %vm3436 = vcmp.gt.s32.totalorder %v3416, 0
      %vm3437 = vcmp.gt.s32.totalorder %v3417, 0
      %vm3438 = vcmp.gt.s32.totalorder %v3418, 0
      %vm3439 = vcmp.gt.s32.totalorder %v3419, 0
      %vm3440 = vcmp.gt.s32.totalorder %v3420, 0
      %vm3441 = vcmp.gt.s32.totalorder %v3421, 0
      %v3442 = vsel %vm3426, 1, 0
      %v3443 = vsel %vm3427, 1, 0
      %v3444 = vsel %vm3428, 1, 0
      %v3445 = vsel %vm3429, 1, 0
      %v3446 = vsel %vm3430, 1, 0
      %v3447 = vsel %vm3431, 1, 0
      %v3448 = vsel %vm3432, 1, 0
      %v3449 = vsel %vm3433, 1, 0
      %v3450 = vsel %vm3434, 1, 0
      %v3451 = vsel %vm3435, 1, 0
      %v3452 = vsel %vm3436, 1, 0
      %v3453 = vsel %vm3437, 1, 0
      %v3454 = vsel %vm3438, 1, 0
      %v3455 = vsel %vm3439, 1, 0
      %v3456 = vsel %vm3440, 1, 0
      %v3457 = vsel %vm3441, 1, 0
      %3458 = vset.pattern.permute.xlu0 0
      %3459 = vperm.xlu0 %3458, %v3442
      %v3460 = vpop.permute.xlu0 %3459
      %3461 = vset.pattern.permute.xlu0 0
      %3462 = vperm.xlu0 %3461, %v3443
      %v3463 = vpop.permute.xlu0 %3462
      %3464 = vset.pattern.permute.xlu0 0
      %3465 = vperm.xlu0 %3464, %v3444
      %v3466 = vpop.permute.xlu0 %3465
      %3467 = vset.pattern.permute.xlu0 0
      %3468 = vperm.xlu0 %3467, %v3445
      %v3469 = vpop.permute.xlu0 %3468
      %3470 = vset.pattern.permute.xlu0 0
      %3471 = vperm.xlu0 %3470, %v3446
      %v3472 = vpop.permute.xlu0 %3471
      %3473 = vset.pattern.permute.xlu0 0
      %3474 = vperm.xlu0 %3473, %v3447
      %v3475 = vpop.permute.xlu0 %3474
      %3476 = vset.pattern.permute.xlu0 0
      %3477 = vperm.xlu0 %3476, %v3448
      %v3478 = vpop.permute.xlu0 %3477
      %3479 = vset.pattern.permute.xlu0 0
      %3480 = vperm.xlu0 %3479, %v3449
      %v3481 = vpop.permute.xlu0 %3480
      %3482 = vset.pattern.permute.xlu0 0
      %3483 = vperm.xlu0 %3482, %v3450
      %v3484 = vpop.permute.xlu0 %3483
      %3485 = vset.pattern.permute.xlu0 0
      %3486 = vperm.xlu0 %3485, %v3451
      %v3487 = vpop.permute.xlu0 %3486
      %3488 = vset.pattern.permute.xlu0 0
      %3489 = vperm.xlu0 %3488, %v3452
      %v3490 = vpop.permute.xlu0 %3489
      %3491 = vset.pattern.permute.xlu0 0
      %3492 = vperm.xlu0 %3491, %v3453
      %v3493 = vpop.permute.xlu0 %3492
      %3494 = vset.pattern.permute.xlu0 0
      %3495 = vperm.xlu0 %3494, %v3454
      %v3496 = vpop.permute.xlu0 %3495
      %3497 = vset.pattern.permute.xlu0 0
      %3498 = vperm.xlu0 %3497, %v3455
      %v3499 = vpop.permute.xlu0 %3498
      %3500 = vset.pattern.permute.xlu0 0
      %3501 = vperm.xlu0 %3500, %v3456
      %v3502 = vpop.permute.xlu0 %3501
      %3503 = vset.pattern.permute.xlu0 0
      %3504 = vperm.xlu0 %3503, %v3457
      %v3505 = vpop.permute.xlu0 %3504
      %vm3506 = vcmp.eq.s32.totalorder %v3460, 1
      %vm3507 = vcmp.eq.s32.totalorder %v3463, 1
      %vm3508 = vcmp.eq.s32.totalorder %v3466, 1
      %vm3509 = vcmp.eq.s32.totalorder %v3469, 1
      %vm3510 = vcmp.eq.s32.totalorder %v3472, 1
      %vm3511 = vcmp.eq.s32.totalorder %v3475, 1
      %vm3512 = vcmp.eq.s32.totalorder %v3478, 1
      %vm3513 = vcmp.eq.s32.totalorder %v3481, 1
      %vm3514 = vcmp.eq.s32.totalorder %v3484, 1
      %vm3515 = vcmp.eq.s32.totalorder %v3487, 1
      %vm3516 = vcmp.eq.s32.totalorder %v3490, 1
      %vm3517 = vcmp.eq.s32.totalorder %v3493, 1
      %vm3518 = vcmp.eq.s32.totalorder %v3496, 1
      %vm3519 = vcmp.eq.s32.totalorder %v3499, 1
      %vm3520 = vcmp.eq.s32.totalorder %v3502, 1
      %vm3521 = vcmp.eq.s32.totalorder %v3505, 1
      %vm3539 = vcmask 1040384
      %v3540 = vrot.slane 0.0, 7
      %v3541 = vrot.slane %v3386, 7
      %v3542 = vsel %vm3539, %v3540, %v3541
      %v3543 = vrot.slane %v3387, 7
      %v3544 = vsel %vm3539, %v3541, %v3543
      %v3545 = vrot.slane %v3388, 7
      %v3546 = vsel %vm3539, %v3543, %v3545
      %v3547 = vrot.slane %v3389, 7
      %v3548 = vsel %vm3539, %v3545, %v3547
      %v3549 = vrot.slane %v3390, 7
      %v3550 = vsel %vm3539, %v3547, %v3549
      %v3551 = vrot.slane %v3391, 7
      %v3552 = vsel %vm3539, %v3549, %v3551
      %v3553 = vrot.slane %v3392, 7
      %v3554 = vsel %vm3539, %v3551, %v3553
      %v3555 = vrot.slane %v3393, 7
      %v3556 = vsel %vm3539, %v3553, %v3555
      %v3557 = vrot.slane %v3394, 7
      %v3558 = vsel %vm3539, %v3555, %v3557
      %v3559 = vrot.slane %v3395, 7
      %v3560 = vsel %vm3539, %v3557, %v3559
      %v3561 = vrot.slane %v3396, 7
      %v3562 = vsel %vm3539, %v3559, %v3561
      %v3563 = vrot.slane %v3397, 7
      %v3564 = vsel %vm3539, %v3561, %v3563
      %v3565 = vrot.slane %v3398, 7
      %v3566 = vsel %vm3539, %v3563, %v3565
      %v3567 = vrot.slane %v3399, 7
      %v3568 = vsel %vm3539, %v3565, %v3567
      %v3569 = vrot.slane %v3400, 7
      %v3570 = vsel %vm3539, %v3567, %v3569
      %v3571 = vrot.slane %v3401, 7
      %v3572 = vsel %vm3539, %v3569, %v3571
      %v3589 = vsel %vm3506, %v3542, 0.0
      %v3590 = vsel %vm3507, %v3544, 0.0
      %v3591 = vsel %vm3508, %v3546, 0.0
      %v3592 = vsel %vm3509, %v3548, 0.0
      %v3593 = vsel %vm3510, %v3550, 0.0
      %v3594 = vsel %vm3511, %v3552, 0.0
      %v3595 = vsel %vm3512, %v3554, 0.0
      %v3596 = vsel %vm3513, %v3556, 0.0
      %v3597 = vsel %vm3514, %v3558, 0.0
      %v3598 = vsel %vm3515, %v3560, 0.0
      %v3599 = vsel %vm3516, %v3562, 0.0
      %v3600 = vsel %vm3517, %v3564, 0.0
      %v3601 = vsel %vm3518, %v3566, 0.0
      %v3602 = vsel %vm3519, %v3568, 0.0
      %v3603 = vsel %vm3520, %v3570, 0.0
      %v3604 = vsel %vm3521, %v3572, 0.0
      %v3605 = vadd.f32 %v3424, %v3589
      %v3606 = vadd.f32 %v3424, %v3590
      %v3607 = vadd.f32 %v3424, %v3591
      %v3608 = vadd.f32 %v3424, %v3592
      %v3609 = vadd.f32 %v3424, %v3593
      %v3610 = vadd.f32 %v3424, %v3594
      %v3611 = vadd.f32 %v3424, %v3595
      %v3612 = vadd.f32 %v3424, %v3596
      %v3613 = vadd.f32 %v3424, %v3597
      %v3614 = vadd.f32 %v3424, %v3598
      %v3615 = vadd.f32 %v3424, %v3599
      %v3616 = vadd.f32 %v3424, %v3600
      %v3617 = vadd.f32 %v3424, %v3601
      %v3618 = vadd.f32 %v3424, %v3602
      %v3619 = vadd.f32 %v3424, %v3603
      %v3620 = vadd.f32 %v3424, %v3604
      %3621 = vrot.lane.b32.xlu0 %v3386, 124
      %v3622 = vpop.permute.xlu0 %3621
      %3623 = vrot.lane.b32.xlu0 %v3387, 124
      %v3624 = vpop.permute.xlu0 %3623
      %3625 = vrot.lane.b32.xlu0 %v3388, 124
      %v3626 = vpop.permute.xlu0 %3625
      %3627 = vrot.lane.b32.xlu0 %v3389, 124
      %v3628 = vpop.permute.xlu0 %3627
      %3629 = vrot.lane.b32.xlu0 %v3390, 124
      %v3630 = vpop.permute.xlu0 %3629
      %3631 = vrot.lane.b32.xlu0 %v3391, 124
      %v3632 = vpop.permute.xlu0 %3631
      %3633 = vrot.lane.b32.xlu0 %v3392, 124
      %v3634 = vpop.permute.xlu0 %3633
      %3635 = vrot.lane.b32.xlu0 %v3393, 124
      %v3636 = vpop.permute.xlu0 %3635
      %3637 = vrot.lane.b32.xlu0 %v3394, 124
      %v3638 = vpop.permute.xlu0 %3637
      %3639 = vrot.lane.b32.xlu0 %v3395, 124
      %v3640 = vpop.permute.xlu0 %3639
      %3641 = vrot.lane.b32.xlu0 %v3396, 124
      %v3642 = vpop.permute.xlu0 %3641
      %3643 = vrot.lane.b32.xlu0 %v3397, 124
      %v3644 = vpop.permute.xlu0 %3643
      %3645 = vrot.lane.b32.xlu0 %v3398, 124
      %v3646 = vpop.permute.xlu0 %3645
      %3647 = vrot.lane.b32.xlu0 %v3399, 124
      %v3648 = vpop.permute.xlu0 %3647
      %3649 = vrot.lane.b32.xlu0 %v3400, 124
      %v3650 = vpop.permute.xlu0 %3649
      %3651 = vrot.lane.b32.xlu0 %v3401, 124
      %v3652 = vpop.permute.xlu0 %3651
      %v3669 = vadd.f32 %v3605, %v3622
      %v3670 = vadd.f32 %v3606, %v3624
      %v3671 = vadd.f32 %v3607, %v3626
      %v3672 = vadd.f32 %v3608, %v3628
      %v3673 = vadd.f32 %v3609, %v3630
      %v3674 = vadd.f32 %v3610, %v3632
      %v3675 = vadd.f32 %v3611, %v3634
      %v3676 = vadd.f32 %v3612, %v3636
      %v3677 = vadd.f32 %v3613, %v3638
      %v3678 = vadd.f32 %v3614, %v3640
      %v3679 = vadd.f32 %v3615, %v3642
      %v3680 = vadd.f32 %v3616, %v3644
      %v3681 = vadd.f32 %v3617, %v3646
      %v3682 = vadd.f32 %v3618, %v3648
      %v3683 = vadd.f32 %v3619, %v3650
      %v3684 = vadd.f32 %v3620, %v3652
      %vm3685 = vcmp.lt.s32.totalorder %v3406, 15
      %vm3686 = vcmp.lt.s32.totalorder %v3407, 15
      %vm3687 = vcmp.lt.s32.totalorder %v3408, 15
      %vm3688 = vcmp.lt.s32.totalorder %v3409, 15
      %vm3689 = vcmp.lt.s32.totalorder %v3410, 15
      %vm3690 = vcmp.lt.s32.totalorder %v3411, 15
      %vm3691 = vcmp.lt.s32.totalorder %v3412, 15
      %vm3692 = vcmp.lt.s32.totalorder %v3413, 15
      %vm3693 = vcmp.lt.s32.totalorder %v3414, 15
      %vm3694 = vcmp.lt.s32.totalorder %v3415, 15
      %vm3695 = vcmp.lt.s32.totalorder %v3416, 15
      %vm3696 = vcmp.lt.s32.totalorder %v3417, 15
      %vm3697 = vcmp.lt.s32.totalorder %v3418, 15
      %vm3698 = vcmp.lt.s32.totalorder %v3419, 15
      %vm3699 = vcmp.lt.s32.totalorder %v3420, 15
      %vm3700 = vcmp.lt.s32.totalorder %v3421, 15
      %v3701 = vsel %vm3685, 1, 0
      %v3702 = vsel %vm3686, 1, 0
      %v3703 = vsel %vm3687, 1, 0
      %v3704 = vsel %vm3688, 1, 0
      %v3705 = vsel %vm3689, 1, 0
      %v3706 = vsel %vm3690, 1, 0
      %v3707 = vsel %vm3691, 1, 0
      %v3708 = vsel %vm3692, 1, 0
      %v3709 = vsel %vm3693, 1, 0
      %v3710 = vsel %vm3694, 1, 0
      %v3711 = vsel %vm3695, 1, 0
      %v3712 = vsel %vm3696, 1, 0
      %v3713 = vsel %vm3697, 1, 0
      %v3714 = vsel %vm3698, 1, 0
      %v3715 = vsel %vm3699, 1, 0
      %v3716 = vsel %vm3700, 1, 0
      %3717 = vset.pattern.permute.xlu0 0
      %3718 = vperm.xlu0 %3717, %v3701
      %v3719 = vpop.permute.xlu0 %3718
      %3720 = vset.pattern.permute.xlu0 0
      %3721 = vperm.xlu0 %3720, %v3702
      %v3722 = vpop.permute.xlu0 %3721
      %3723 = vset.pattern.permute.xlu0 0
      %3724 = vperm.xlu0 %3723, %v3703
      %v3725 = vpop.permute.xlu0 %3724
      %3726 = vset.pattern.permute.xlu0 0
      %3727 = vperm.xlu0 %3726, %v3704
      %v3728 = vpop.permute.xlu0 %3727
      %3729 = vset.pattern.permute.xlu0 0
      %3730 = vperm.xlu0 %3729, %v3705
      %v3731 = vpop.permute.xlu0 %3730
      %3732 = vset.pattern.permute.xlu0 0
      %3733 = vperm.xlu0 %3732, %v3706
      %v3734 = vpop.permute.xlu0 %3733
      %3735 = vset.pattern.permute.xlu0 0
      %3736 = vperm.xlu0 %3735, %v3707
      %v3737 = vpop.permute.xlu0 %3736
      %3738 = vset.pattern.permute.xlu0 0
      %3739 = vperm.xlu0 %3738, %v3708
      %v3740 = vpop.permute.xlu0 %3739
      %3741 = vset.pattern.permute.xlu0 0
      %3742 = vperm.xlu0 %3741, %v3709
      %v3743 = vpop.permute.xlu0 %3742
      %3744 = vset.pattern.permute.xlu0 0
      %3745 = vperm.xlu0 %3744, %v3710
      %v3746 = vpop.permute.xlu0 %3745
      %3747 = vset.pattern.permute.xlu0 0
      %3748 = vperm.xlu0 %3747, %v3711
      %v3749 = vpop.permute.xlu0 %3748
      %3750 = vset.pattern.permute.xlu0 0
      %3751 = vperm.xlu0 %3750, %v3712
      %v3752 = vpop.permute.xlu0 %3751
      %3753 = vset.pattern.permute.xlu0 0
      %3754 = vperm.xlu0 %3753, %v3713
      %v3755 = vpop.permute.xlu0 %3754
      %3756 = vset.pattern.permute.xlu0 0
      %3757 = vperm.xlu0 %3756, %v3714
      %v3758 = vpop.permute.xlu0 %3757
      %3759 = vset.pattern.permute.xlu0 0
      %3760 = vperm.xlu0 %3759, %v3715
      %v3761 = vpop.permute.xlu0 %3760
      %3762 = vset.pattern.permute.xlu0 0
      %3763 = vperm.xlu0 %3762, %v3716
      %v3764 = vpop.permute.xlu0 %3763
      %vm3765 = vcmp.eq.s32.totalorder %v3719, 1
      %vm3766 = vcmp.eq.s32.totalorder %v3722, 1
      %vm3767 = vcmp.eq.s32.totalorder %v3725, 1
      %vm3768 = vcmp.eq.s32.totalorder %v3728, 1
      %vm3769 = vcmp.eq.s32.totalorder %v3731, 1
      %vm3770 = vcmp.eq.s32.totalorder %v3734, 1
      %vm3771 = vcmp.eq.s32.totalorder %v3737, 1
      %vm3772 = vcmp.eq.s32.totalorder %v3740, 1
      %vm3773 = vcmp.eq.s32.totalorder %v3743, 1
      %vm3774 = vcmp.eq.s32.totalorder %v3746, 1
      %vm3775 = vcmp.eq.s32.totalorder %v3749, 1
      %vm3776 = vcmp.eq.s32.totalorder %v3752, 1
      %vm3777 = vcmp.eq.s32.totalorder %v3755, 1
      %vm3778 = vcmp.eq.s32.totalorder %v3758, 1
      %vm3779 = vcmp.eq.s32.totalorder %v3761, 1
      %vm3780 = vcmp.eq.s32.totalorder %v3764, 1
      %vm3782 = vcmask 1046528
      %v3783 = vrot.slane %v3386, 1
      %v3784 = vrot.slane %v3387, 1
      %v3785 = vsel %vm3782, %v3783, %v3784
      %v3786 = vrot.slane %v3388, 1
      %v3787 = vsel %vm3782, %v3784, %v3786
      %v3788 = vrot.slane %v3389, 1
      %v3789 = vsel %vm3782, %v3786, %v3788
      %v3790 = vrot.slane %v3390, 1
      %v3791 = vsel %vm3782, %v3788, %v3790
      %v3792 = vrot.slane %v3391, 1
      %v3793 = vsel %vm3782, %v3790, %v3792
      %v3794 = vrot.slane %v3392, 1
      %v3795 = vsel %vm3782, %v3792, %v3794
      %v3796 = vrot.slane %v3393, 1
      %v3797 = vsel %vm3782, %v3794, %v3796
      %v3798 = vrot.slane %v3394, 1
      %v3799 = vsel %vm3782, %v3796, %v3798
      %v3800 = vrot.slane %v3395, 1
      %v3801 = vsel %vm3782, %v3798, %v3800
      %v3802 = vrot.slane %v3396, 1
      %v3803 = vsel %vm3782, %v3800, %v3802
      %v3804 = vrot.slane %v3397, 1
      %v3805 = vsel %vm3782, %v3802, %v3804
      %v3806 = vrot.slane %v3398, 1
      %v3807 = vsel %vm3782, %v3804, %v3806
      %v3808 = vrot.slane %v3399, 1
      %v3809 = vsel %vm3782, %v3806, %v3808
      %v3810 = vrot.slane %v3400, 1
      %v3811 = vsel %vm3782, %v3808, %v3810
      %v3812 = vrot.slane %v3401, 1
      %v3813 = vsel %vm3782, %v3810, %v3812
      %v3814 = vrot.slane %v3402, 1
      %v3815 = vsel %vm3782, %v3812, %v3814
      %3816 = vrot.lane.b32.xlu0 %v3785, 120
      %v3817 = vpop.permute.xlu0 %3816
      %3818 = vrot.lane.b32.xlu0 %v3787, 120
      %v3819 = vpop.permute.xlu0 %3818
      %3820 = vrot.lane.b32.xlu0 %v3789, 120
      %v3821 = vpop.permute.xlu0 %3820
      %3822 = vrot.lane.b32.xlu0 %v3791, 120
      %v3823 = vpop.permute.xlu0 %3822
      %3824 = vrot.lane.b32.xlu0 %v3793, 120
      %v3825 = vpop.permute.xlu0 %3824
      %3826 = vrot.lane.b32.xlu0 %v3795, 120
      %v3827 = vpop.permute.xlu0 %3826
      %3828 = vrot.lane.b32.xlu0 %v3797, 120
      %v3829 = vpop.permute.xlu0 %3828
      %3830 = vrot.lane.b32.xlu0 %v3799, 120
      %v3831 = vpop.permute.xlu0 %3830
      %3832 = vrot.lane.b32.xlu0 %v3801, 120
      %v3833 = vpop.permute.xlu0 %3832
      %3834 = vrot.lane.b32.xlu0 %v3803, 120
      %v3835 = vpop.permute.xlu0 %3834
      %3836 = vrot.lane.b32.xlu0 %v3805, 120
      %v3837 = vpop.permute.xlu0 %3836
      %3838 = vrot.lane.b32.xlu0 %v3807, 120
      %v3839 = vpop.permute.xlu0 %3838
      %3840 = vrot.lane.b32.xlu0 %v3809, 120
      %v3841 = vpop.permute.xlu0 %3840
      %3842 = vrot.lane.b32.xlu0 %v3811, 120
      %v3843 = vpop.permute.xlu0 %3842
      %3844 = vrot.lane.b32.xlu0 %v3813, 120
      %v3845 = vpop.permute.xlu0 %3844
      %3846 = vrot.lane.b32.xlu0 %v3815, 120
      %v3847 = vpop.permute.xlu0 %3846
      %v3864 = vsel %vm3765, %v3817, 0.0
      %v3865 = vsel %vm3766, %v3819, 0.0
      %v3866 = vsel %vm3767, %v3821, 0.0
      %v3867 = vsel %vm3768, %v3823, 0.0
      %v3868 = vsel %vm3769, %v3825, 0.0
      %v3869 = vsel %vm3770, %v3827, 0.0
      %v3870 = vsel %vm3771, %v3829, 0.0
      %v3871 = vsel %vm3772, %v3831, 0.0
      %v3872 = vsel %vm3773, %v3833, 0.0
      %v3873 = vsel %vm3774, %v3835, 0.0
      %v3874 = vsel %vm3775, %v3837, 0.0
      %v3875 = vsel %vm3776, %v3839, 0.0
      %v3876 = vsel %vm3777, %v3841, 0.0
      %v3877 = vsel %vm3778, %v3843, 0.0
      %v3878 = vsel %vm3779, %v3845, 0.0
      %v3879 = vsel %vm3780, %v3847, 0.0
      %v3880 = vadd.f32 %v3669, %v3864
      %v3881 = vadd.f32 %v3670, %v3865
      %v3882 = vadd.f32 %v3671, %v3866
      %v3883 = vadd.f32 %v3672, %v3867
      %v3884 = vadd.f32 %v3673, %v3868
      %v3885 = vadd.f32 %v3674, %v3869
      %v3886 = vadd.f32 %v3675, %v3870
      %v3887 = vadd.f32 %v3676, %v3871
      %v3888 = vadd.f32 %v3677, %v3872
      %v3889 = vadd.f32 %v3678, %v3873
      %v3890 = vadd.f32 %v3679, %v3874
      %v3891 = vadd.f32 %v3680, %v3875
      %v3892 = vadd.f32 %v3681, %v3876
      %v3893 = vadd.f32 %v3682, %v3877
      %v3894 = vadd.f32 %v3683, %v3878
      %v3895 = vadd.f32 %v3684, %v3879
      %v3897 = vrot.slane %v3402, 7
      %v3898 = vsel %vm3539, %v3571, %v3897
      %v3899 = vrot.slane %v3403, 7
      %v3900 = vsel %vm3539, %v3897, %v3899
      %3901 = vrot.lane.b32.xlu0 %v3546, 116
      %v3902 = vpop.permute.xlu0 %3901
      %3903 = vrot.lane.b32.xlu0 %v3548, 116
      %v3904 = vpop.permute.xlu0 %3903
      %3905 = vrot.lane.b32.xlu0 %v3550, 116
      %v3906 = vpop.permute.xlu0 %3905
      %3907 = vrot.lane.b32.xlu0 %v3552, 116
      %v3908 = vpop.permute.xlu0 %3907
      %3909 = vrot.lane.b32.xlu0 %v3554, 116
      %v3910 = vpop.permute.xlu0 %3909
      %3911 = vrot.lane.b32.xlu0 %v3556, 116
      %v3912 = vpop.permute.xlu0 %3911
      %3913 = vrot.lane.b32.xlu0 %v3558, 116
      %v3914 = vpop.permute.xlu0 %3913
      %3915 = vrot.lane.b32.xlu0 %v3560, 116
      %v3916 = vpop.permute.xlu0 %3915
      %3917 = vrot.lane.b32.xlu0 %v3562, 116
      %v3918 = vpop.permute.xlu0 %3917
      %3919 = vrot.lane.b32.xlu0 %v3564, 116
      %v3920 = vpop.permute.xlu0 %3919
      %3921 = vrot.lane.b32.xlu0 %v3566, 116
      %v3922 = vpop.permute.xlu0 %3921
      %3923 = vrot.lane.b32.xlu0 %v3568, 116
      %v3924 = vpop.permute.xlu0 %3923
      %3925 = vrot.lane.b32.xlu0 %v3570, 116
      %v3926 = vpop.permute.xlu0 %3925
      %3927 = vrot.lane.b32.xlu0 %v3572, 116
      %v3928 = vpop.permute.xlu0 %3927
      %3929 = vrot.lane.b32.xlu0 %v3898, 116
      %v3930 = vpop.permute.xlu0 %3929
      %3931 = vrot.lane.b32.xlu0 %v3900, 116
      %v3932 = vpop.permute.xlu0 %3931
      %v3949 = vsel %vm3506, %v3902, 0.0
      %v3950 = vsel %vm3507, %v3904, 0.0
      %v3951 = vsel %vm3508, %v3906, 0.0
      %v3952 = vsel %vm3509, %v3908, 0.0
      %v3953 = vsel %vm3510, %v3910, 0.0
      %v3954 = vsel %vm3511, %v3912, 0.0
      %v3955 = vsel %vm3512, %v3914, 0.0
      %v3956 = vsel %vm3513, %v3916, 0.0
      %v3957 = vsel %vm3514, %v3918, 0.0
      %v3958 = vsel %vm3515, %v3920, 0.0
      %v3959 = vsel %vm3516, %v3922, 0.0
      %v3960 = vsel %vm3517, %v3924, 0.0
      %v3961 = vsel %vm3518, %v3926, 0.0
      %v3962 = vsel %vm3519, %v3928, 0.0
      %v3963 = vsel %vm3520, %v3930, 0.0
      %v3964 = vsel %vm3521, %v3932, 0.0
      %v3965 = vadd.f32 %v3880, %v3949
      %v3966 = vadd.f32 %v3881, %v3950
      %v3967 = vadd.f32 %v3882, %v3951
      %v3968 = vadd.f32 %v3883, %v3952
      %v3969 = vadd.f32 %v3884, %v3953
      %v3970 = vadd.f32 %v3885, %v3954
      %v3971 = vadd.f32 %v3886, %v3955
      %v3972 = vadd.f32 %v3887, %v3956
      %v3973 = vadd.f32 %v3888, %v3957
      %v3974 = vadd.f32 %v3889, %v3958
      %v3975 = vadd.f32 %v3890, %v3959
      %v3976 = vadd.f32 %v3891, %v3960
      %v3977 = vadd.f32 %v3892, %v3961
      %v3978 = vadd.f32 %v3893, %v3962
      %v3979 = vadd.f32 %v3894, %v3963
      %v3980 = vadd.f32 %v3895, %v3964
      %3981 = vrot.lane.b32.xlu0 %v3388, 112
      %v3982 = vpop.permute.xlu0 %3981
      %3983 = vrot.lane.b32.xlu0 %v3389, 112
      %v3984 = vpop.permute.xlu0 %3983
      %3985 = vrot.lane.b32.xlu0 %v3390, 112
      %v3986 = vpop.permute.xlu0 %3985
      %3987 = vrot.lane.b32.xlu0 %v3391, 112
      %v3988 = vpop.permute.xlu0 %3987
      %3989 = vrot.lane.b32.xlu0 %v3392, 112
      %v3990 = vpop.permute.xlu0 %3989
      %3991 = vrot.lane.b32.xlu0 %v3393, 112
      %v3992 = vpop.permute.xlu0 %3991
      %3993 = vrot.lane.b32.xlu0 %v3394, 112
      %v3994 = vpop.permute.xlu0 %3993
      %3995 = vrot.lane.b32.xlu0 %v3395, 112
      %v3996 = vpop.permute.xlu0 %3995
      %3997 = vrot.lane.b32.xlu0 %v3396, 112
      %v3998 = vpop.permute.xlu0 %3997
      %3999 = vrot.lane.b32.xlu0 %v3397, 112
      %v4000 = vpop.permute.xlu0 %3999
      %4001 = vrot.lane.b32.xlu0 %v3398, 112
      %v4002 = vpop.permute.xlu0 %4001
      %4003 = vrot.lane.b32.xlu0 %v3399, 112
      %v4004 = vpop.permute.xlu0 %4003
      %4005 = vrot.lane.b32.xlu0 %v3400, 112
      %v4006 = vpop.permute.xlu0 %4005
      %4007 = vrot.lane.b32.xlu0 %v3401, 112
      %v4008 = vpop.permute.xlu0 %4007
      %4009 = vrot.lane.b32.xlu0 %v3402, 112
      %v4010 = vpop.permute.xlu0 %4009
      %4011 = vrot.lane.b32.xlu0 %v3403, 112
      %v4012 = vpop.permute.xlu0 %4011
      %v4029 = vadd.f32 %v3965, %v3982
      %v4030 = vadd.f32 %v3966, %v3984
      %v4031 = vadd.f32 %v3967, %v3986
      %v4032 = vadd.f32 %v3968, %v3988
      %v4033 = vadd.f32 %v3969, %v3990
      %v4034 = vadd.f32 %v3970, %v3992
      %v4035 = vadd.f32 %v3971, %v3994
      %v4036 = vadd.f32 %v3972, %v3996
      %v4037 = vadd.f32 %v3973, %v3998
      %v4038 = vadd.f32 %v3974, %v4000
      %v4039 = vadd.f32 %v3975, %v4002
      %v4040 = vadd.f32 %v3976, %v4004
      %v4041 = vadd.f32 %v3977, %v4006
      %v4042 = vadd.f32 %v3978, %v4008
      %v4043 = vadd.f32 %v3979, %v4010
      %v4044 = vadd.f32 %v3980, %v4012
      %v4046 = vrot.slane %v3403, 1
      %v4047 = vsel %vm3782, %v3814, %v4046
      %v4048 = vrot.slane %v3404, 1
      %v4049 = vsel %vm3782, %v4046, %v4048
      %4050 = vrot.lane.b32.xlu0 %v3789, 108
      %v4051 = vpop.permute.xlu0 %4050
      %4052 = vrot.lane.b32.xlu0 %v3791, 108
      %v4053 = vpop.permute.xlu0 %4052
      %4054 = vrot.lane.b32.xlu0 %v3793, 108
      %v4055 = vpop.permute.xlu0 %4054
      %4056 = vrot.lane.b32.xlu0 %v3795, 108
      %v4057 = vpop.permute.xlu0 %4056
      %4058 = vrot.lane.b32.xlu0 %v3797, 108
      %v4059 = vpop.permute.xlu0 %4058
      %4060 = vrot.lane.b32.xlu0 %v3799, 108
      %v4061 = vpop.permute.xlu0 %4060
      %4062 = vrot.lane.b32.xlu0 %v3801, 108
      %v4063 = vpop.permute.xlu0 %4062
      %4064 = vrot.lane.b32.xlu0 %v3803, 108
      %v4065 = vpop.permute.xlu0 %4064
      %4066 = vrot.lane.b32.xlu0 %v3805, 108
      %v4067 = vpop.permute.xlu0 %4066
      %4068 = vrot.lane.b32.xlu0 %v3807, 108
      %v4069 = vpop.permute.xlu0 %4068
      %4070 = vrot.lane.b32.xlu0 %v3809, 108
      %v4071 = vpop.permute.xlu0 %4070
      %4072 = vrot.lane.b32.xlu0 %v3811, 108
      %v4073 = vpop.permute.xlu0 %4072
      %4074 = vrot.lane.b32.xlu0 %v3813, 108
      %v4075 = vpop.permute.xlu0 %4074
      %4076 = vrot.lane.b32.xlu0 %v3815, 108
      %v4077 = vpop.permute.xlu0 %4076
      %4078 = vrot.lane.b32.xlu0 %v4047, 108
      %v4079 = vpop.permute.xlu0 %4078
      %4080 = vrot.lane.b32.xlu0 %v4049, 108
      %v4081 = vpop.permute.xlu0 %4080
      %v4098 = vsel %vm3765, %v4051, 0.0
      %v4099 = vsel %vm3766, %v4053, 0.0
      %v4100 = vsel %vm3767, %v4055, 0.0
      %v4101 = vsel %vm3768, %v4057, 0.0
      %v4102 = vsel %vm3769, %v4059, 0.0
      %v4103 = vsel %vm3770, %v4061, 0.0
      %v4104 = vsel %vm3771, %v4063, 0.0
      %v4105 = vsel %vm3772, %v4065, 0.0
      %v4106 = vsel %vm3773, %v4067, 0.0
      %v4107 = vsel %vm3774, %v4069, 0.0
      %v4108 = vsel %vm3775, %v4071, 0.0
      %v4109 = vsel %vm3776, %v4073, 0.0
      %v4110 = vsel %vm3777, %v4075, 0.0
      %v4111 = vsel %vm3778, %v4077, 0.0
      %v4112 = vsel %vm3779, %v4079, 0.0
      %v4113 = vsel %vm3780, %v4081, 0.0
      %v4114 = vadd.f32 %v4029, %v4098
      %v4115 = vadd.f32 %v4030, %v4099
      %v4116 = vadd.f32 %v4031, %v4100
      %v4117 = vadd.f32 %v4032, %v4101
      %v4118 = vadd.f32 %v4033, %v4102
      %v4119 = vadd.f32 %v4034, %v4103
      %v4120 = vadd.f32 %v4035, %v4104
      %v4121 = vadd.f32 %v4036, %v4105
      %v4122 = vadd.f32 %v4037, %v4106
      %v4123 = vadd.f32 %v4038, %v4107
      %v4124 = vadd.f32 %v4039, %v4108
      %v4125 = vadd.f32 %v4040, %v4109
      %v4126 = vadd.f32 %v4041, %v4110
      %v4127 = vadd.f32 %v4042, %v4111
      %v4128 = vadd.f32 %v4043, %v4112
      %v4129 = vadd.f32 %v4044, %v4113
      %v4131 = vrot.slane %v3404, 7
      %v4132 = vsel %vm3539, %v3899, %v4131
      %v4133 = vrot.slane %v3405, 7
      %v4134 = vsel %vm3539, %v4131, %v4133
      %4135 = vrot.lane.b32.xlu0 %v3550, 104
      %v4136 = vpop.permute.xlu0 %4135
      %4137 = vrot.lane.b32.xlu0 %v3552, 104
      %v4138 = vpop.permute.xlu0 %4137
      %4139 = vrot.lane.b32.xlu0 %v3554, 104
      %v4140 = vpop.permute.xlu0 %4139
      %4141 = vrot.lane.b32.xlu0 %v3556, 104
      %v4142 = vpop.permute.xlu0 %4141
      %4143 = vrot.lane.b32.xlu0 %v3558, 104
      %v4144 = vpop.permute.xlu0 %4143
      %4145 = vrot.lane.b32.xlu0 %v3560, 104
      %v4146 = vpop.permute.xlu0 %4145
      %4147 = vrot.lane.b32.xlu0 %v3562, 104
      %v4148 = vpop.permute.xlu0 %4147
      %4149 = vrot.lane.b32.xlu0 %v3564, 104
      %v4150 = vpop.permute.xlu0 %4149
      %4151 = vrot.lane.b32.xlu0 %v3566, 104
      %v4152 = vpop.permute.xlu0 %4151
      %4153 = vrot.lane.b32.xlu0 %v3568, 104
      %v4154 = vpop.permute.xlu0 %4153
      %4155 = vrot.lane.b32.xlu0 %v3570, 104
      %v4156 = vpop.permute.xlu0 %4155
      %4157 = vrot.lane.b32.xlu0 %v3572, 104
      %v4158 = vpop.permute.xlu0 %4157
      %4159 = vrot.lane.b32.xlu0 %v3898, 104
      %v4160 = vpop.permute.xlu0 %4159
      %4161 = vrot.lane.b32.xlu0 %v3900, 104
      %v4162 = vpop.permute.xlu0 %4161
      %4163 = vrot.lane.b32.xlu0 %v4132, 104
      %v4164 = vpop.permute.xlu0 %4163
      %4165 = vrot.lane.b32.xlu0 %v4134, 104
      %v4166 = vpop.permute.xlu0 %4165
      %v4183 = vsel %vm3506, %v4136, 0.0
      %v4184 = vsel %vm3507, %v4138, 0.0
      %v4185 = vsel %vm3508, %v4140, 0.0
      %v4186 = vsel %vm3509, %v4142, 0.0
      %v4187 = vsel %vm3510, %v4144, 0.0
      %v4188 = vsel %vm3511, %v4146, 0.0
      %v4189 = vsel %vm3512, %v4148, 0.0
      %v4190 = vsel %vm3513, %v4150, 0.0
      %v4191 = vsel %vm3514, %v4152, 0.0
      %v4192 = vsel %vm3515, %v4154, 0.0
      %v4193 = vsel %vm3516, %v4156, 0.0
      %v4194 = vsel %vm3517, %v4158, 0.0
      %v4195 = vsel %vm3518, %v4160, 0.0
      %v4196 = vsel %vm3519, %v4162, 0.0
      %v4197 = vsel %vm3520, %v4164, 0.0
      %v4198 = vsel %vm3521, %v4166, 0.0
      %v4199 = vadd.f32 %v4114, %v4183
      %v4200 = vadd.f32 %v4115, %v4184
      %v4201 = vadd.f32 %v4116, %v4185
      %v4202 = vadd.f32 %v4117, %v4186
      %v4203 = vadd.f32 %v4118, %v4187
      %v4204 = vadd.f32 %v4119, %v4188
      %v4205 = vadd.f32 %v4120, %v4189
      %v4206 = vadd.f32 %v4121, %v4190
      %v4207 = vadd.f32 %v4122, %v4191
      %v4208 = vadd.f32 %v4123, %v4192
      %v4209 = vadd.f32 %v4124, %v4193
      %v4210 = vadd.f32 %v4125, %v4194
      %v4211 = vadd.f32 %v4126, %v4195
      %v4212 = vadd.f32 %v4127, %v4196
      %v4213 = vadd.f32 %v4128, %v4197
      %v4214 = vadd.f32 %v4129, %v4198
      %4215 = vrot.lane.b32.xlu0 %v3390, 100
      %v4216 = vpop.permute.xlu0 %4215
      %4217 = vrot.lane.b32.xlu0 %v3391, 100
      %v4218 = vpop.permute.xlu0 %4217
      %4219 = vrot.lane.b32.xlu0 %v3392, 100
      %v4220 = vpop.permute.xlu0 %4219
      %4221 = vrot.lane.b32.xlu0 %v3393, 100
      %v4222 = vpop.permute.xlu0 %4221
      %4223 = vrot.lane.b32.xlu0 %v3394, 100
      %v4224 = vpop.permute.xlu0 %4223
      %4225 = vrot.lane.b32.xlu0 %v3395, 100
      %v4226 = vpop.permute.xlu0 %4225
      %4227 = vrot.lane.b32.xlu0 %v3396, 100
      %v4228 = vpop.permute.xlu0 %4227
      %4229 = vrot.lane.b32.xlu0 %v3397, 100
      %v4230 = vpop.permute.xlu0 %4229
      %4231 = vrot.lane.b32.xlu0 %v3398, 100
      %v4232 = vpop.permute.xlu0 %4231
      %4233 = vrot.lane.b32.xlu0 %v3399, 100
      %v4234 = vpop.permute.xlu0 %4233
      %4235 = vrot.lane.b32.xlu0 %v3400, 100
      %v4236 = vpop.permute.xlu0 %4235
      %4237 = vrot.lane.b32.xlu0 %v3401, 100
      %v4238 = vpop.permute.xlu0 %4237
      %4239 = vrot.lane.b32.xlu0 %v3402, 100
      %v4240 = vpop.permute.xlu0 %4239
      %4241 = vrot.lane.b32.xlu0 %v3403, 100
      %v4242 = vpop.permute.xlu0 %4241
      %4243 = vrot.lane.b32.xlu0 %v3404, 100
      %v4244 = vpop.permute.xlu0 %4243
      %4245 = vrot.lane.b32.xlu0 %v3405, 100
      %v4246 = vpop.permute.xlu0 %4245
      %v4263 = vadd.f32 %v4199, %v4216
      %v4264 = vadd.f32 %v4200, %v4218
      %v4265 = vadd.f32 %v4201, %v4220
      %v4266 = vadd.f32 %v4202, %v4222
      %v4267 = vadd.f32 %v4203, %v4224
      %v4268 = vadd.f32 %v4204, %v4226
      %v4269 = vadd.f32 %v4205, %v4228
      %v4270 = vadd.f32 %v4206, %v4230
      %v4271 = vadd.f32 %v4207, %v4232
      %v4272 = vadd.f32 %v4208, %v4234
      %v4273 = vadd.f32 %v4209, %v4236
      %v4274 = vadd.f32 %v4210, %v4238
      %v4275 = vadd.f32 %v4211, %v4240
      %v4276 = vadd.f32 %v4212, %v4242
      %v4277 = vadd.f32 %v4213, %v4244
      %v4278 = vadd.f32 %v4214, %v4246
      %v4279 = vrot.slane %v3405, 1
      %v4280 = vsel %vm3782, %v4048, %v4279
      %v4281 = vrot.slane 0.0, 1
      %v4282 = vsel %vm3782, %v4279, %v4281
      %4283 = vrot.lane.b32.xlu0 %v3793, 96
      %v4284 = vpop.permute.xlu0 %4283
      %4285 = vrot.lane.b32.xlu0 %v3795, 96
      %v4286 = vpop.permute.xlu0 %4285
      %4287 = vrot.lane.b32.xlu0 %v3797, 96
      %v4288 = vpop.permute.xlu0 %4287
      %4289 = vrot.lane.b32.xlu0 %v3799, 96
      %v4290 = vpop.permute.xlu0 %4289
      %4291 = vrot.lane.b32.xlu0 %v3801, 96
      %v4292 = vpop.permute.xlu0 %4291
      %4293 = vrot.lane.b32.xlu0 %v3803, 96
      %v4294 = vpop.permute.xlu0 %4293
      %4295 = vrot.lane.b32.xlu0 %v3805, 96
      %v4296 = vpop.permute.xlu0 %4295
      %4297 = vrot.lane.b32.xlu0 %v3807, 96
      %v4298 = vpop.permute.xlu0 %4297
      %4299 = vrot.lane.b32.xlu0 %v3809, 96
      %v4300 = vpop.permute.xlu0 %4299
      %4301 = vrot.lane.b32.xlu0 %v3811, 96
      %v4302 = vpop.permute.xlu0 %4301
      %4303 = vrot.lane.b32.xlu0 %v3813, 96
      %v4304 = vpop.permute.xlu0 %4303
      %4305 = vrot.lane.b32.xlu0 %v3815, 96
      %v4306 = vpop.permute.xlu0 %4305
      %4307 = vrot.lane.b32.xlu0 %v4047, 96
      %v4308 = vpop.permute.xlu0 %4307
      %4309 = vrot.lane.b32.xlu0 %v4049, 96
      %v4310 = vpop.permute.xlu0 %4309
      %4311 = vrot.lane.b32.xlu0 %v4280, 96
      %v4312 = vpop.permute.xlu0 %4311
      %4313 = vrot.lane.b32.xlu0 %v4282, 96
      %v4314 = vpop.permute.xlu0 %4313
      %v4331 = vsel %vm3765, %v4284, 0.0
      %v4332 = vsel %vm3766, %v4286, 0.0
      %v4333 = vsel %vm3767, %v4288, 0.0
      %v4334 = vsel %vm3768, %v4290, 0.0
      %v4335 = vsel %vm3769, %v4292, 0.0
      %v4336 = vsel %vm3770, %v4294, 0.0
      %v4337 = vsel %vm3771, %v4296, 0.0
      %v4338 = vsel %vm3772, %v4298, 0.0
      %v4339 = vsel %vm3773, %v4300, 0.0
      %v4340 = vsel %vm3774, %v4302, 0.0
      %v4341 = vsel %vm3775, %v4304, 0.0
      %v4342 = vsel %vm3776, %v4306, 0.0
      %v4343 = vsel %vm3777, %v4308, 0.0
      %v4344 = vsel %vm3778, %v4310, 0.0
      %v4345 = vsel %vm3779, %v4312, 0.0
      %v4346 = vsel %vm3780, %v4314, 0.0
      %v4347 = vadd.f32 %v4263, %v4331
      %v4348 = vadd.f32 %v4264, %v4332
      %v4349 = vadd.f32 %v4265, %v4333
      %v4350 = vadd.f32 %v4266, %v4334
      %v4351 = vadd.f32 %v4267, %v4335
      %v4352 = vadd.f32 %v4268, %v4336
      %v4353 = vadd.f32 %v4269, %v4337
      %v4354 = vadd.f32 %v4270, %v4338
      %v4355 = vadd.f32 %v4271, %v4339
      %v4356 = vadd.f32 %v4272, %v4340
      %v4357 = vadd.f32 %v4273, %v4341
      %v4358 = vadd.f32 %v4274, %v4342
      %v4359 = vadd.f32 %v4275, %v4343
      %v4360 = vadd.f32 %v4276, %v4344
      %v4361 = vadd.f32 %v4277, %v4345
      %v4362 = vadd.f32 %v4278, %v4346
      %vm4363 = vcmask 31744
      %4364 = vst.msk [vmem:[%s341] sm:$0xff] %vm4363, %v4347
      %4365 = vst.msk [vmem:[%s341 + $0x8] sm:$0xff] %vm4363, %v4348
      %4366 = vst.msk [vmem:[%s341 + $0x10] sm:$0xff] %vm4363, %v4349
      %4367 = vst.msk [vmem:[%s341 + $0x18] sm:$0xff] %vm4363, %v4350
      %4368 = vst.msk [vmem:[%s341 + $0x20] sm:$0xff] %vm4363, %v4351
      %4369 = vst.msk [vmem:[%s341 + $0x28] sm:$0xff] %vm4363, %v4352
      %4370 = vst.msk [vmem:[%s341 + $0x30] sm:$0xff] %vm4363, %v4353
      %4371 = vst.msk [vmem:[%s341 + $0x38] sm:$0xff] %vm4363, %v4354
      %4372 = vst.msk [vmem:[%s341 + $0x40] sm:$0xff] %vm4363, %v4355
      %4373 = vst.msk [vmem:[%s341 + $0x48] sm:$0xff] %vm4363, %v4356
      %4374 = vst.msk [vmem:[%s341 + $0x50] sm:$0xff] %vm4363, %v4357
      %4375 = vst.msk [vmem:[%s341 + $0x58] sm:$0xff] %vm4363, %v4358
      %4376 = vst.msk [vmem:[%s341 + $0x60] sm:$0xff] %vm4363, %v4359
      %4377 = vst.msk [vmem:[%s341 + $0x68] sm:$0xff] %vm4363, %v4360
      %4378 = vst.msk [vmem:[%s341 + $0x70] sm:$0xff] %vm4363, %v4361
      %4379 = vst.msk [vmem:[%s341 + $0x78] sm:$0xff] %vm4363, %v4362
      %p4380 = scmp.lt.s32.totalorder %s23, 1
      %s4381 = scalar_select %p4380, %s23, 1
      %p4382 = scmp.lt.s32.totalorder %s24, 1
      %s4383 = scalar_select %p4382, %s24, 1
      %s4384 = smul.addr %s4383, 16
      %s4385 = smul.addr %s4381, 32
      %s4386 = sadd.s32 %s4384, %s4385
      %s4387 = smul.addr %s4386, 8
      %s4388 = scalar_lea.vmem %s8, %s4387
      // Predicated region
      $region53: #{coupling_nn_forward.1} parent=51 // pred_check
        %p4389 = pneg %p226
      $region54: #{coupling_nn_forward.1} parent=51 // pred_check_branch
        %4391 = sbr.rel (%p4389) target = $region56
      $region55: #{coupling_nn_forward.1} parent=51 // pred_region
        _
      $region56: #{coupling_nn_forward.1} parent=51 // pred_fallthru
        _
    $region52: #{coupling_nn_forward.1} parent=5 // pred_fallthru
      _
    %p4392 = scmp.le.s32.totalorder 2, %s14
    // Predicated region
    $region57: #{coupling_nn_forward.1} parent=5 // pred_check
      %p4393 = pneg %p4392
    $region58: #{coupling_nn_forward.1} parent=5 // pred_check_branch
      %4395 = sbr.rel (%p4393) target = $region60
    $region59: #{coupling_nn_forward.1} parent=5 // pred_region
      %s4396 = ssub.s32 %s14, 2
      // Predicated region
      $region61: #{coupling_nn_forward.1} parent=59 // pred_check
        %p4397 = pneg %p232
      $region62: #{coupling_nn_forward.1} parent=59 // pred_check_branch
        %4399 = sbr.rel (%p4397) target = $region64
      $region63: #{coupling_nn_forward.1} parent=59 // pred_region
        %p4400 = scmp.lt.s32.totalorder %s25, 1
        %s4401 = scalar_select %p4400, %s25, 1
        %p4402 = scmp.lt.s32.totalorder %s26, 1
        %s4403 = scalar_select %p4402, %s26, 1
        %s4404 = smul.addr %s4403, 16
        %s4405 = smul.addr %s4401, 32
        %s4406 = sadd.s32 %s4404, %s4405
        %s4407 = smul.addr %s4406, 8
        %s4408 = scalar_lea.vmem %s8, %s4407
      $region64: #{coupling_nn_forward.1} parent=59 // pred_fallthru
        _
    $region60: #{coupling_nn_forward.1} parent=5 // pred_fallthru
      _
  $region6: #{coupling_nn_forward.1} parent=0 // loop_footer
    %s18 = sadd.s32 1, %s14
  $region7: #{coupling_nn_forward.1} parent=0 // loop_footer_branch
    %13 = sbr.rel target = $region3
  $region8: #{coupling_nn_forward.1} parent=0 // loop_exit
    _

</llo_original>
